<compile_context>
chip_gen: v5e
topology: v5e:2x2
jax: 0.10.0
libtpu: 0.0.40
codegen_flags: <defaults>
</compile_context>

<pallas_src>
import functools

import jax
import jax.numpy as jnp
from jax.experimental import pallas as pl
from jax.experimental.pallas import tpu as pltpu


# ------------------------------ kernel helpers -------------------------------

def _layer_norm(x, g, b):
    # LayerNorm over last dim, eps=1e-5 (torch default), f32 math.
    mu = jnp.mean(x, axis=-1, keepdims=True)
    c = x - mu
    var = jnp.mean(c * c, axis=-1, keepdims=True)
    return c * jax.lax.rsqrt(var + 1e-5) * g + b


# ------------------------------ fused kernel ---------------------------------

def _fused_decoder_layer_kernel(
    # per-batch activation tiles (batch dim squeezed away by BlockSpec)
    tgt_ref, mem_ref, pos_ref, qp_ref, qse_ref,
    # self-attention weights
    sa_wt_ref, sa_bt_ref,      # fused [qcontent*scale, kcontent, v]  (d, 3d)
    sa_wp_ref, sa_bp_ref,      # fused [qpos*scale, kpos]             (d, 2d)
    sa_wo_ref, sa_bo_ref,      # out_proj                             (d, d)
    n1g_ref, n1b_ref,
    # cross-attention weights
    ca_wqc_ref, ca_bqc_ref,    # qcontent (pre-scaled)
    ca_wqp_ref, ca_bqp_ref,    # qpos     (pre-scaled; used when is_first)
    ca_wqs_ref, ca_bqs_ref,    # qpos_sine (pre-scaled)
    ca_wm_ref, ca_bm_ref,      # fused [kcontent, v]                  (d, 2d)
    ca_wkp_ref, ca_bkp_ref,    # kpos
    ca_wo_ref, ca_bo_ref,      # out_proj
    n2g_ref, n2b_ref,
    # FFN weights
    w1_ref, b1_ref, w2_ref, b2_ref, n3g_ref, n3b_ref,
    # output
    out_ref,
    *, nq, hw, nhead, d, is_first):
    hd = d // nhead

    def mm(x, w_ref, b_ref):
        # bf16 MXU operands, f32 accumulate; bias add in f32.
        return jnp.dot(x.astype(jnp.bfloat16), w_ref[...],
                       preferred_element_type=jnp.float32) + b_ref[...]

    def heads(x, length):
        # (L, d) -> (nhead, L, hd): head-leading so attention is a single
        # head-batched dot_general (no per-head loop / per-head stores).
        return jnp.swapaxes(x.reshape(length, nhead, -1), 0, 1)

    def attention(q_h, k_h, v_h, lq):
        # q_h (h, lq, dk), k_h (h, lk, dk), v_h (h, lk, hd); q pre-scaled.
        s = jnp.einsum('hqd,hkd->hqk',
                       q_h.astype(jnp.bfloat16), k_h.astype(jnp.bfloat16),
                       preferred_element_type=jnp.float32)
        s = s - jnp.max(s, axis=-1, keepdims=True)
        p = jnp.exp(s)
        p = p * pl.reciprocal(jnp.sum(p, axis=-1, keepdims=True), approx=True)
        o = jnp.einsum('hqk,hkd->hqd',
                       p.astype(jnp.bfloat16), v_h.astype(jnp.bfloat16),
                       preferred_element_type=jnp.float32)
        return jnp.swapaxes(o, 0, 1).reshape(lq, d)

    # ----------------- self-attention block (post-norm) -----------------
    tgt = tgt_ref[...]                                         # (nq, d) f32
    qp = qp_ref[...]
    tqkv = mm(tgt, sa_wt_ref, sa_bt_ref)                       # (nq, 3d)
    pqk = mm(qp, sa_wp_ref, sa_bp_ref)                         # (nq, 2d)
    # NOTE: sub-128-lane column slices at d=32; at d=256 these boundaries are
    # 128-lane aligned and free.
    q = heads(tqkv[:, 0:d] + pqk[:, 0:d], nq)    # scale folded into weights
    k = heads(tqkv[:, d:2 * d] + pqk[:, d:2 * d], nq)
    v = heads(tqkv[:, 2 * d:3 * d], nq)
    sa = attention(q, k, v, nq)                                # tgt_mask=None
    sa = mm(sa, sa_wo_ref, sa_bo_ref)
    tgt = _layer_norm(tgt + sa, n1g_ref[...], n1b_ref[...])    # dropout1 = id

    # ----------------------- cross-attention block -----------------------
    qc = mm(tgt, ca_wqc_ref, ca_bqc_ref)
    if is_first:                                  # (or keep_query_pos, False)
        qc = qc + mm(qp, ca_wqp_ref, ca_bqp_ref)
    qs = mm(qse_ref[...], ca_wqs_ref, ca_bqs_ref)
    mkv = mm(mem_ref[...], ca_wm_ref, ca_bm_ref)               # (hw, 2d)
    kc = mkv[:, 0:d]
    cv = mkv[:, d:2 * d]
    kp = mm(pos_ref[...], ca_wkp_ref, ca_bkp_ref)
    if is_first:
        kc = kc + kp
    # Per-head [content | sine] concat along the contraction axis, done once
    # at the head-batched level -> a single 2*hd-contraction score dot.
    q2 = jnp.concatenate([heads(qc, nq), heads(qs, nq)], axis=-1)  # (h,nq,2hd)
    k2 = jnp.concatenate([heads(kc, hw), heads(kp, hw)], axis=-1)  # (h,hw,2hd)
    ca = attention(q2, k2, heads(cv, hw), nq)                  # memory_mask=None
    ca = mm(ca, ca_wo_ref, ca_bo_ref)
    tgt = _layer_norm(tgt + ca, n2g_ref[...], n2b_ref[...])    # dropout2 = id

    # ------------------------- feed-forward block -------------------------
    hmid = jnp.maximum(mm(tgt, w1_ref, b1_ref), 0.0)           # relu
    ffn = mm(hmid, w2_ref, b2_ref)
    out_ref[...] = _layer_norm(tgt + ffn, n3g_ref[...], n3b_ref[...])  # drop3=id


# ------------------------------ forward wrapper -------------------------------

def decoder_layer_forward(fused_params, tgt, memory, pos, query_pos,
                          query_sine_embed, *, nhead, is_first=True):
    nq, bs, d = tgt.shape
    hw = memory.shape[0]

    # One seq-first -> batch-first transpose per tensor; the per-batch slicing
    # itself is expressed in the BlockSpec index_map (grid over batch).
    tgt_b = tgt.transpose(1, 0, 2)
    mem_b = memory.transpose(1, 0, 2)
    pos_b = pos.transpose(1, 0, 2)
    qp_b = query_pos.transpose(1, 0, 2)
    qse_b = query_sine_embed.transpose(1, 0, 2)

    def act_spec(length):
        return pl.BlockSpec((None, length, d), lambda b: (b, 0, 0))

    def const_spec(w):
        nd = w.ndim
        return pl.BlockSpec(w.shape, lambda b: (0,) * nd)

    weights = fused_params["args"]
    kernel = functools.partial(_fused_decoder_layer_kernel,
                               nq=nq, hw=hw, nhead=nhead, d=d,
                               is_first=is_first)
    out_b = pl.pallas_call(
        kernel,
        grid=(bs,),
        in_specs=[act_spec(nq), act_spec(hw), act_spec(hw),
                  act_spec(nq), act_spec(nq)] +
                 [const_spec(w) for w in weights],
        out_specs=pl.BlockSpec((None, nq, d), lambda b: (b, 0, 0)),
        out_shape=jax.ShapeDtypeStruct((bs, nq, d), jnp.float32),
        compiler_params=pltpu.CompilerParams(
            dimension_semantics=("parallel",)),
    )(tgt_b, mem_b, pos_b, qp_b, qse_b, *weights)
    return out_b.transpose(1, 0, 2)               # back to (L, B, D)


# --------------------------- deterministic params -----------------------------

def make_linear_params(key, din, dout, scale=0.05):
    kw, kb = jax.random.split(key)
    w = scale * jax.random.normal(kw, (din, dout), jnp.float32)   # (Din, Dout)
    b = scale * jax.random.normal(kb, (dout,), jnp.float32)
    return w, b


def make_params(key, d_model, nhead, dim_feedforward):
    names = ["sa_qcontent", "sa_qpos", "sa_kcontent", "sa_kpos", "sa_v",
             "sa_out",
             "ca_qcontent", "ca_qpos", "ca_kcontent", "ca_kpos", "ca_v",
             "ca_qpos_sine", "ca_out"]
    keys = jax.random.split(key, len(names) + 2)
    params = {}
    for n, k in zip(names, keys[:len(names)]):
        params[n] = make_linear_params(k, d_model, d_model)
    params["linear1"] = make_linear_params(keys[-2], d_model, dim_feedforward)
    params["linear2"] = make_linear_params(keys[-1], dim_feedforward, d_model)
    for ln in ["norm1", "norm2", "norm3"]:
        params[ln] = (jnp.ones((d_model,), jnp.float32),
                      jnp.zeros((d_model,), jnp.float32))
    return params


def fuse_params(p, d_model, nhead):
    """Concatenate projection weights along Dout, fold in q-scaling, and cast
    matmul weights to bf16 (MXU native).  Biases / LayerNorm params stay f32
    (added / applied after the f32 accumulate)."""
    d = d_model
    sa_scale = float(d // nhead) ** -0.5          # self-attn head_dim**-0.5
    ca_scale = float(2 * d // nhead) ** -0.5      # cross-attn embed_dim = 2*d

    def row(b):
        return b.reshape(1, -1).astype(jnp.float32)

    def bfw(w):
        return w.astype(jnp.bfloat16)

    wqc, bqc = p["sa_qcontent"]
    wqp, bqp = p["sa_qpos"]
    wkc, bkc = p["sa_kcontent"]
    wkp, bkp = p["sa_kpos"]
    wv, bv = p["sa_v"]
    sa_wt = jnp.concatenate([wqc * sa_scale, wkc, wv], axis=1)       # (d, 3d)
    sa_bt = jnp.concatenate([bqc * sa_scale, bkc, bv])
    sa_wp = jnp.concatenate([wqp * sa_scale, wkp], axis=1)           # (d, 2d)
    sa_bp = jnp.concatenate([bqp * sa_scale, bkp])

    ca_wkc, ca_bkc = p["ca_kcontent"]
    ca_wv, ca_bv = p["ca_v"]
    ca_wm = jnp.concatenate([ca_wkc, ca_wv], axis=1)                 # (d, 2d)
    ca_bm = jnp.concatenate([ca_bkc, ca_bv])

    args = (
        bfw(sa_wt), row(sa_bt), bfw(sa_wp), row(sa_bp),
        bfw(p["sa_out"][0]), row(p["sa_out"][1]),
        row(p["norm1"][0]), row(p["norm1"][1]),
        bfw(p["ca_qcontent"][0] * ca_scale), row(p["ca_qcontent"][1] * ca_scale),
        bfw(p["ca_qpos"][0] * ca_scale), row(p["ca_qpos"][1] * ca_scale),
        bfw(p["ca_qpos_sine"][0] * ca_scale), row(p["ca_qpos_sine"][1] * ca_scale),
        bfw(ca_wm), row(ca_bm),
        bfw(p["ca_kpos"][0]), row(p["ca_kpos"][1]),
        bfw(p["ca_out"][0]), row(p["ca_out"][1]),
        row(p["norm2"][0]), row(p["norm2"][1]),
        bfw(p["linear1"][0]), row(p["linear1"][1]),
        bfw(p["linear2"][0]), row(p["linear2"][1]),
        row(p["norm3"][0]), row(p["norm3"][1]),
    )
    return {"args": args}


# ------------------------------------ main ------------------------------------

if __name__ == "__main__":
    d_model, nhead, dim_feedforward = 32, 4, 64
    num_queries, hw, bs = 8, 16, 2

    root = jax.random.PRNGKey(0)
    kp, k1, k2, k3, k4, k5 = jax.random.split(root, 6)
    raw_params = make_params(kp, d_model, nhead, dim_feedforward)
    fused = fuse_params(raw_params, d_model, nhead)

    tgt = jax.random.normal(k1, (num_queries, bs, d_model), jnp.float32)
    memory = jax.random.normal(k2, (hw, bs, d_model), jnp.float32)
    pos = jax.random.normal(k3, (hw, bs, d_model), jnp.float32)
    query_pos = jax.random.normal(k4, (num_queries, bs, d_model), jnp.float32)
    query_sine_embed = jax.random.normal(k5, (num_queries, bs, d_model),
                                         jnp.float32)

    fwd = jax.jit(functools.partial(decoder_layer_forward,
                                    nhead=nhead, is_first=True))
    out = fwd(fused, tgt, memory, pos, query_pos, query_sine_embed)
    out = jax.block_until_ready(out)

    assert out.shape == (num_queries, bs, d_model)
    assert bool(jnp.all(jnp.isfinite(out)))
    print("KERNEL_OK")
</pallas_src>

<mosaic_0001>
module attributes {stable_mosaic.version = 11 : i64} {
  func.func @_fused_decoder_layer_kernel(%arg0: i32, %arg1: memref<1x8x32xf32, #tpu.memory_space<vmem>>, %arg2: memref<1x16x32xf32, #tpu.memory_space<vmem>>, %arg3: memref<1x16x32xf32, #tpu.memory_space<vmem>>, %arg4: memref<1x8x32xf32, #tpu.memory_space<vmem>>, %arg5: memref<1x8x32xf32, #tpu.memory_space<vmem>>, %arg6: memref<32x96xbf16, #tpu.memory_space<vmem>>, %arg7: memref<1x96xf32, #tpu.memory_space<vmem>>, %arg8: memref<32x64xbf16, #tpu.memory_space<vmem>>, %arg9: memref<1x64xf32, #tpu.memory_space<vmem>>, %arg10: memref<32x32xbf16, #tpu.memory_space<vmem>>, %arg11: memref<1x32xf32, #tpu.memory_space<vmem>>, %arg12: memref<1x32xf32, #tpu.memory_space<vmem>>, %arg13: memref<1x32xf32, #tpu.memory_space<vmem>>, %arg14: memref<32x32xbf16, #tpu.memory_space<vmem>>, %arg15: memref<1x32xf32, #tpu.memory_space<vmem>>, %arg16: memref<32x32xbf16, #tpu.memory_space<vmem>>, %arg17: memref<1x32xf32, #tpu.memory_space<vmem>>, %arg18: memref<32x32xbf16, #tpu.memory_space<vmem>>, %arg19: memref<1x32xf32, #tpu.memory_space<vmem>>, %arg20: memref<32x64xbf16, #tpu.memory_space<vmem>>, %arg21: memref<1x64xf32, #tpu.memory_space<vmem>>, %arg22: memref<32x32xbf16, #tpu.memory_space<vmem>>, %arg23: memref<1x32xf32, #tpu.memory_space<vmem>>, %arg24: memref<32x32xbf16, #tpu.memory_space<vmem>>, %arg25: memref<1x32xf32, #tpu.memory_space<vmem>>, %arg26: memref<1x32xf32, #tpu.memory_space<vmem>>, %arg27: memref<1x32xf32, #tpu.memory_space<vmem>>, %arg28: memref<32x64xbf16, #tpu.memory_space<vmem>>, %arg29: memref<1x64xf32, #tpu.memory_space<vmem>>, %arg30: memref<64x32xbf16, #tpu.memory_space<vmem>>, %arg31: memref<1x32xf32, #tpu.memory_space<vmem>>, %arg32: memref<1x32xf32, #tpu.memory_space<vmem>>, %arg33: memref<1x32xf32, #tpu.memory_space<vmem>>, %arg34: memref<1x8x32xf32, #tpu.memory_space<vmem>>) attributes {dimension_semantics = [#tpu.dimension_semantics<parallel>], iteration_bounds = array<i64: 2>, scalar_prefetch = 0 : i64, scratch_operands = 0 : i64, tpu.core_type = #tpu.core_type<tc>, window_params = [{transform_indices = @transform_0, window_bounds = array<i64: 1, 8, 32>}, {transform_indices = @transform_1, window_bounds = array<i64: 1, 16, 32>}, {transform_indices = @transform_2, window_bounds = array<i64: 1, 16, 32>}, {transform_indices = @transform_3, window_bounds = array<i64: 1, 8, 32>}, {transform_indices = @transform_4, window_bounds = array<i64: 1, 8, 32>}, {pipeline_mode = #tpu.pipeline_mode<synchronous>, transform_indices = @transform_5, window_bounds = array<i64: 32, 96>}, {pipeline_mode = #tpu.pipeline_mode<synchronous>, transform_indices = @transform_6, window_bounds = array<i64: 1, 96>}, {pipeline_mode = #tpu.pipeline_mode<synchronous>, transform_indices = @transform_7, window_bounds = array<i64: 32, 64>}, {pipeline_mode = #tpu.pipeline_mode<synchronous>, transform_indices = @transform_8, window_bounds = array<i64: 1, 64>}, {pipeline_mode = #tpu.pipeline_mode<synchronous>, transform_indices = @transform_9, window_bounds = array<i64: 32, 32>}, {pipeline_mode = #tpu.pipeline_mode<synchronous>, transform_indices = @transform_10, window_bounds = array<i64: 1, 32>}, {pipeline_mode = #tpu.pipeline_mode<synchronous>, transform_indices = @transform_11, window_bounds = array<i64: 1, 32>}, {pipeline_mode = #tpu.pipeline_mode<synchronous>, transform_indices = @transform_12, window_bounds = array<i64: 1, 32>}, {pipeline_mode = #tpu.pipeline_mode<synchronous>, transform_indices = @transform_13, window_bounds = array<i64: 32, 32>}, {pipeline_mode = #tpu.pipeline_mode<synchronous>, transform_indices = @transform_14, window_bounds = array<i64: 1, 32>}, {pipeline_mode = #tpu.pipeline_mode<synchronous>, transform_indices = @transform_15, window_bounds = array<i64: 32, 32>}, {pipeline_mode = #tpu.pipeline_mode<synchronous>, transform_indices = @transform_16, window_bounds = array<i64: 1, 32>}, {pipeline_mode = #tpu.pipeline_mode<synchronous>, transform_indices = @transform_17, window_bounds = array<i64: 32, 32>}, {pipeline_mode = #tpu.pipeline_mode<synchronous>, transform_indices = @transform_18, window_bounds = array<i64: 1, 32>}, {pipeline_mode = #tpu.pipeline_mode<synchronous>, transform_indices = @transform_19, window_bounds = array<i64: 32, 64>}, {pipeline_mode = #tpu.pipeline_mode<synchronous>, transform_indices = @transform_20, window_bounds = array<i64: 1, 64>}, {pipeline_mode = #tpu.pipeline_mode<synchronous>, transform_indices = @transform_21, window_bounds = array<i64: 32, 32>}, {pipeline_mode = #tpu.pipeline_mode<synchronous>, transform_indices = @transform_22, window_bounds = array<i64: 1, 32>}, {pipeline_mode = #tpu.pipeline_mode<synchronous>, transform_indices = @transform_23, window_bounds = array<i64: 32, 32>}, {pipeline_mode = #tpu.pipeline_mode<synchronous>, transform_indices = @transform_24, window_bounds = array<i64: 1, 32>}, {pipeline_mode = #tpu.pipeline_mode<synchronous>, transform_indices = @transform_25, window_bounds = array<i64: 1, 32>}, {pipeline_mode = #tpu.pipeline_mode<synchronous>, transform_indices = @transform_26, window_bounds = array<i64: 1, 32>}, {pipeline_mode = #tpu.pipeline_mode<synchronous>, transform_indices = @transform_27, window_bounds = array<i64: 32, 64>}, {pipeline_mode = #tpu.pipeline_mode<synchronous>, transform_indices = @transform_28, window_bounds = array<i64: 1, 64>}, {pipeline_mode = #tpu.pipeline_mode<synchronous>, transform_indices = @transform_29, window_bounds = array<i64: 64, 32>}, {pipeline_mode = #tpu.pipeline_mode<synchronous>, transform_indices = @transform_30, window_bounds = array<i64: 1, 32>}, {pipeline_mode = #tpu.pipeline_mode<synchronous>, transform_indices = @transform_31, window_bounds = array<i64: 1, 32>}, {pipeline_mode = #tpu.pipeline_mode<synchronous>, transform_indices = @transform_32, window_bounds = array<i64: 1, 32>}, {transform_indices = @transform_33, window_bounds = array<i64: 1, 8, 32>}]} {
    %c0 = arith.constant 0 : index
    %c0_0 = arith.constant 0 : index
    %c0_1 = arith.constant 0 : index
    %0 = vector.load %arg1[%c0, %c0_0, %c0_1] : memref<1x8x32xf32, #tpu.memory_space<vmem>>, vector<1x8x32xf32>
    %1 = vector.shape_cast %0 : vector<1x8x32xf32> to vector<8x32xf32>
    %c0_2 = arith.constant 0 : index
    %c0_3 = arith.constant 0 : index
    %c0_4 = arith.constant 0 : index
    %2 = vector.load %arg4[%c0_2, %c0_3, %c0_4] : memref<1x8x32xf32, #tpu.memory_space<vmem>>, vector<1x8x32xf32>
    %3 = vector.shape_cast %2 : vector<1x8x32xf32> to vector<8x32xf32>
    %4 = arith.truncf %1 : vector<8x32xf32> to vector<8x32xbf16>
    %c0_5 = arith.constant 0 : index
    %c0_6 = arith.constant 0 : index
    %5 = vector.load %arg6[%c0_5, %c0_6] : memref<32x96xbf16, #tpu.memory_space<vmem>>, vector<32x96xbf16>
    %cst = arith.constant dense<0.000000e+00> : vector<8x96xf32>
    %6 = tpu.matmul %4, %5, %cst {dimension_numbers = #tpu.dot_dimension_numbers<[1], [0], [0], [1], [0, 0, 1, 1], [], []>} : vector<8x32xbf16>, vector<32x96xbf16>, vector<8x96xf32> -> vector<8x96xf32>
    %c0_7 = arith.constant 0 : index
    %c0_8 = arith.constant 0 : index
    %7 = vector.load %arg7[%c0_7, %c0_8] : memref<1x96xf32, #tpu.memory_space<vmem>>, vector<1x96xf32>
    %8 = vector.broadcast %7 : vector<1x96xf32> to vector<8x96xf32>
    %9 = arith.addf %6, %8 : vector<8x96xf32>
    %10 = arith.truncf %3 : vector<8x32xf32> to vector<8x32xbf16>
    %c0_9 = arith.constant 0 : index
    %c0_10 = arith.constant 0 : index
    %11 = vector.load %arg8[%c0_9, %c0_10] : memref<32x64xbf16, #tpu.memory_space<vmem>>, vector<32x64xbf16>
    %cst_11 = arith.constant dense<0.000000e+00> : vector<8x64xf32>
    %12 = tpu.matmul %10, %11, %cst_11 {dimension_numbers = #tpu.dot_dimension_numbers<[1], [0], [0], [1], [0, 0, 1, 1], [], []>} : vector<8x32xbf16>, vector<32x64xbf16>, vector<8x64xf32> -> vector<8x64xf32>
    %c0_12 = arith.constant 0 : index
    %c0_13 = arith.constant 0 : index
    %13 = vector.load %arg9[%c0_12, %c0_13] : memref<1x64xf32, #tpu.memory_space<vmem>>, vector<1x64xf32>
    %14 = vector.broadcast %13 : vector<1x64xf32> to vector<8x64xf32>
    %15 = arith.addf %12, %14 : vector<8x64xf32>
    %16 = vector.extract_strided_slice %9 {offsets = [0, 0], sizes = [8, 32], strides = [1, 1]} : vector<8x96xf32> to vector<8x32xf32>
    %17 = vector.extract_strided_slice %15 {offsets = [0, 0], sizes = [8, 32], strides = [1, 1]} : vector<8x64xf32> to vector<8x32xf32>
    %18 = arith.addf %16, %17 : vector<8x32xf32>
    %19 = vector.shape_cast %18 : vector<8x32xf32> to vector<8x4x8xf32>
    %20 = tpu.transpose %19, [1, 0, 2] : vector<8x4x8xf32> -> vector<4x8x8xf32>
    %21 = vector.extract_strided_slice %9 {offsets = [0, 32], sizes = [8, 32], strides = [1, 1]} : vector<8x96xf32> to vector<8x32xf32>
    %22 = vector.extract_strided_slice %15 {offsets = [0, 32], sizes = [8, 32], strides = [1, 1]} : vector<8x64xf32> to vector<8x32xf32>
    %23 = arith.addf %21, %22 : vector<8x32xf32>
    %24 = vector.shape_cast %23 : vector<8x32xf32> to vector<8x4x8xf32>
    %25 = tpu.transpose %24, [1, 0, 2] : vector<8x4x8xf32> -> vector<4x8x8xf32>
    %26 = vector.extract_strided_slice %9 {offsets = [0, 64], sizes = [8, 32], strides = [1, 1]} : vector<8x96xf32> to vector<8x32xf32>
    %27 = vector.shape_cast %26 : vector<8x32xf32> to vector<8x4x8xf32>
    %28 = tpu.transpose %27, [1, 0, 2] : vector<8x4x8xf32> -> vector<4x8x8xf32>
    %29 = arith.truncf %20 : vector<4x8x8xf32> to vector<4x8x8xbf16>
    %30 = arith.truncf %25 : vector<4x8x8xf32> to vector<4x8x8xbf16>
    "tpu.trace_start"() <{level = 10 : i32, message = "hqd,hkd->hqk"}> : () -> ()
    %cst_14 = arith.constant dense<0.000000e+00> : vector<4x8x8xf32>
    %31 = tpu.matmul %29, %30, %cst_14 {dimension_numbers = #tpu.dot_dimension_numbers<[2], [2], [1], [1], [0, 0, 0, 1, 1, 1], [0], [0]>} : vector<4x8x8xbf16>, vector<4x8x8xbf16>, vector<4x8x8xf32> -> vector<4x8x8xf32>
    "tpu.trace_stop"() : () -> ()
    %cst_15 = arith.constant dense<0xFF800000> : vector<4x8xf32>
    %32 = vector.multi_reduction <maximumf>, %31, %cst_15 [2] : vector<4x8x8xf32> to vector<4x8xf32>
    %33 = vector.shape_cast %32 : vector<4x8xf32> to vector<4x8x1xf32>
    %34 = vector.broadcast %33 : vector<4x8x1xf32> to vector<4x8x8xf32>
    %35 = arith.subf %31, %34 : vector<4x8x8xf32>
    %36 = math.exp %35 : vector<4x8x8xf32>
    %cst_16 = arith.constant dense<0.000000e+00> : vector<4x8xf32>
    %37 = vector.multi_reduction <add>, %36, %cst_16 [2] : vector<4x8x8xf32> to vector<4x8xf32>
    %38 = vector.shape_cast %37 : vector<4x8xf32> to vector<4x8x1xf32>
    %39 = tpu.reciprocal %38 {approx = true} : vector<4x8x1xf32> -> vector<4x8x1xf32>
    %40 = vector.broadcast %39 : vector<4x8x1xf32> to vector<4x8x8xf32>
    %41 = arith.mulf %36, %40 : vector<4x8x8xf32>
    %42 = arith.truncf %41 : vector<4x8x8xf32> to vector<4x8x8xbf16>
    %43 = arith.truncf %28 : vector<4x8x8xf32> to vector<4x8x8xbf16>
    "tpu.trace_start"() <{level = 10 : i32, message = "hqk,hkd->hqd"}> : () -> ()
    %cst_17 = arith.constant dense<0.000000e+00> : vector<4x8x8xf32>
    %44 = tpu.matmul %42, %43, %cst_17 {dimension_numbers = #tpu.dot_dimension_numbers<[2], [1], [1], [2], [0, 0, 0, 1, 1, 2], [0], [0]>} : vector<4x8x8xbf16>, vector<4x8x8xbf16>, vector<4x8x8xf32> -> vector<4x8x8xf32>
    "tpu.trace_stop"() : () -> ()
    %45 = tpu.transpose %44, [1, 0, 2] : vector<4x8x8xf32> -> vector<8x4x8xf32>
    %46 = vector.shape_cast %45 : vector<8x4x8xf32> to vector<8x32xf32>
    %47 = arith.truncf %46 : vector<8x32xf32> to vector<8x32xbf16>
    %c0_18 = arith.constant 0 : index
    %c0_19 = arith.constant 0 : index
    %48 = vector.load %arg10[%c0_18, %c0_19] : memref<32x32xbf16, #tpu.memory_space<vmem>>, vector<32x32xbf16>
    %cst_20 = arith.constant dense<0.000000e+00> : vector<8x32xf32>
    %49 = tpu.matmul %47, %48, %cst_20 {dimension_numbers = #tpu.dot_dimension_numbers<[1], [0], [0], [1], [0, 0, 1, 1], [], []>} : vector<8x32xbf16>, vector<32x32xbf16>, vector<8x32xf32> -> vector<8x32xf32>
    %c0_21 = arith.constant 0 : index
    %c0_22 = arith.constant 0 : index
    %50 = vector.load %arg11[%c0_21, %c0_22] : memref<1x32xf32, #tpu.memory_space<vmem>>, vector<1x32xf32>
    %51 = vector.broadcast %50 : vector<1x32xf32> to vector<8x32xf32>
    %52 = arith.addf %49, %51 : vector<8x32xf32>
    %53 = arith.addf %1, %52 : vector<8x32xf32>
    %c0_23 = arith.constant 0 : index
    %c0_24 = arith.constant 0 : index
    %54 = vector.load %arg12[%c0_23, %c0_24] : memref<1x32xf32, #tpu.memory_space<vmem>>, vector<1x32xf32>
    %c0_25 = arith.constant 0 : index
    %c0_26 = arith.constant 0 : index
    %55 = vector.load %arg13[%c0_25, %c0_26] : memref<1x32xf32, #tpu.memory_space<vmem>>, vector<1x32xf32>
    %cst_27 = arith.constant dense<0.000000e+00> : vector<8xf32>
    %56 = vector.multi_reduction <add>, %53, %cst_27 [1] : vector<8x32xf32> to vector<8xf32>
    %57 = vector.shape_cast %56 : vector<8xf32> to vector<8x1xf32>
    %cst_28 = arith.constant 3.200000e+01 : f32
    %58 = vector.broadcast %cst_28 : f32 to vector<8x1xf32>
    %59 = arith.divf %57, %58 : vector<8x1xf32>
    %60 = vector.broadcast %59 : vector<8x1xf32> to vector<8x32xf32>
    %61 = arith.subf %53, %60 : vector<8x32xf32>
    %62 = arith.mulf %61, %61 : vector<8x32xf32>
    %cst_29 = arith.constant dense<0.000000e+00> : vector<8xf32>
    %63 = vector.multi_reduction <add>, %62, %cst_29 [1] : vector<8x32xf32> to vector<8xf32>
    %64 = vector.shape_cast %63 : vector<8xf32> to vector<8x1xf32>
    %cst_30 = arith.constant 3.200000e+01 : f32
    %65 = vector.broadcast %cst_30 : f32 to vector<8x1xf32>
    %66 = arith.divf %64, %65 : vector<8x1xf32>
    %cst_31 = arith.constant 9.99999974E-6 : f32
    %67 = vector.broadcast %cst_31 : f32 to vector<8x1xf32>
    %68 = arith.addf %66, %67 : vector<8x1xf32>
    %69 = math.rsqrt %68 : vector<8x1xf32>
    %70 = vector.broadcast %69 : vector<8x1xf32> to vector<8x32xf32>
    %71 = arith.mulf %61, %70 : vector<8x32xf32>
    %72 = vector.broadcast %54 : vector<1x32xf32> to vector<8x32xf32>
    %73 = arith.mulf %71, %72 : vector<8x32xf32>
    %74 = vector.broadcast %55 : vector<1x32xf32> to vector<8x32xf32>
    %75 = arith.addf %73, %74 : vector<8x32xf32>
    %76 = arith.truncf %75 : vector<8x32xf32> to vector<8x32xbf16>
    %c0_32 = arith.constant 0 : index
    %c0_33 = arith.constant 0 : index
    %77 = vector.load %arg14[%c0_32, %c0_33] : memref<32x32xbf16, #tpu.memory_space<vmem>>, vector<32x32xbf16>
    %cst_34 = arith.constant dense<0.000000e+00> : vector<8x32xf32>
    %78 = tpu.matmul %76, %77, %cst_34 {dimension_numbers = #tpu.dot_dimension_numbers<[1], [0], [0], [1], [0, 0, 1, 1], [], []>} : vector<8x32xbf16>, vector<32x32xbf16>, vector<8x32xf32> -> vector<8x32xf32>
    %c0_35 = arith.constant 0 : index
    %c0_36 = arith.constant 0 : index
    %79 = vector.load %arg15[%c0_35, %c0_36] : memref<1x32xf32, #tpu.memory_space<vmem>>, vector<1x32xf32>
    %80 = vector.broadcast %79 : vector<1x32xf32> to vector<8x32xf32>
    %81 = arith.addf %78, %80 : vector<8x32xf32>
    %82 = arith.truncf %3 : vector<8x32xf32> to vector<8x32xbf16>
    %c0_37 = arith.constant 0 : index
    %c0_38 = arith.constant 0 : index
    %83 = vector.load %arg16[%c0_37, %c0_38] : memref<32x32xbf16, #tpu.memory_space<vmem>>, vector<32x32xbf16>
    %cst_39 = arith.constant dense<0.000000e+00> : vector<8x32xf32>
    %84 = tpu.matmul %82, %83, %cst_39 {dimension_numbers = #tpu.dot_dimension_numbers<[1], [0], [0], [1], [0, 0, 1, 1], [], []>} : vector<8x32xbf16>, vector<32x32xbf16>, vector<8x32xf32> -> vector<8x32xf32>
    %c0_40 = arith.constant 0 : index
    %c0_41 = arith.constant 0 : index
    %85 = vector.load %arg17[%c0_40, %c0_41] : memref<1x32xf32, #tpu.memory_space<vmem>>, vector<1x32xf32>
    %86 = vector.broadcast %85 : vector<1x32xf32> to vector<8x32xf32>
    %87 = arith.addf %84, %86 : vector<8x32xf32>
    %88 = arith.addf %81, %87 : vector<8x32xf32>
    %c0_42 = arith.constant 0 : index
    %c0_43 = arith.constant 0 : index
    %c0_44 = arith.constant 0 : index
    %89 = vector.load %arg5[%c0_42, %c0_43, %c0_44] : memref<1x8x32xf32, #tpu.memory_space<vmem>>, vector<1x8x32xf32>
    %90 = vector.shape_cast %89 : vector<1x8x32xf32> to vector<8x32xf32>
    %91 = arith.truncf %90 : vector<8x32xf32> to vector<8x32xbf16>
    %c0_45 = arith.constant 0 : index
    %c0_46 = arith.constant 0 : index
    %92 = vector.load %arg18[%c0_45, %c0_46] : memref<32x32xbf16, #tpu.memory_space<vmem>>, vector<32x32xbf16>
    %cst_47 = arith.constant dense<0.000000e+00> : vector<8x32xf32>
    %93 = tpu.matmul %91, %92, %cst_47 {dimension_numbers = #tpu.dot_dimension_numbers<[1], [0], [0], [1], [0, 0, 1, 1], [], []>} : vector<8x32xbf16>, vector<32x32xbf16>, vector<8x32xf32> -> vector<8x32xf32>
    %c0_48 = arith.constant 0 : index
    %c0_49 = arith.constant 0 : index
    %94 = vector.load %arg19[%c0_48, %c0_49] : memref<1x32xf32, #tpu.memory_space<vmem>>, vector<1x32xf32>
    %95 = vector.broadcast %94 : vector<1x32xf32> to vector<8x32xf32>
    %96 = arith.addf %93, %95 : vector<8x32xf32>
    %c0_50 = arith.constant 0 : index
    %c0_51 = arith.constant 0 : index
    %c0_52 = arith.constant 0 : index
    %97 = vector.load %arg2[%c0_50, %c0_51, %c0_52] : memref<1x16x32xf32, #tpu.memory_space<vmem>>, vector<1x16x32xf32>
    %98 = vector.shape_cast %97 : vector<1x16x32xf32> to vector<16x32xf32>
    %99 = arith.truncf %98 : vector<16x32xf32> to vector<16x32xbf16>
    %c0_53 = arith.constant 0 : index
    %c0_54 = arith.constant 0 : index
    %100 = vector.load %arg20[%c0_53, %c0_54] : memref<32x64xbf16, #tpu.memory_space<vmem>>, vector<32x64xbf16>
    %cst_55 = arith.constant dense<0.000000e+00> : vector<16x64xf32>
    %101 = tpu.matmul %99, %100, %cst_55 {dimension_numbers = #tpu.dot_dimension_numbers<[1], [0], [0], [1], [0, 0, 1, 1], [], []>} : vector<16x32xbf16>, vector<32x64xbf16>, vector<16x64xf32> -> vector<16x64xf32>
    %c0_56 = arith.constant 0 : index
    %c0_57 = arith.constant 0 : index
    %102 = vector.load %arg21[%c0_56, %c0_57] : memref<1x64xf32, #tpu.memory_space<vmem>>, vector<1x64xf32>
    %103 = vector.broadcast %102 : vector<1x64xf32> to vector<16x64xf32>
    %104 = arith.addf %101, %103 : vector<16x64xf32>
    %105 = vector.extract_strided_slice %104 {offsets = [0, 0], sizes = [16, 32], strides = [1, 1]} : vector<16x64xf32> to vector<16x32xf32>
    %106 = vector.extract_strided_slice %104 {offsets = [0, 32], sizes = [16, 32], strides = [1, 1]} : vector<16x64xf32> to vector<16x32xf32>
    %c0_58 = arith.constant 0 : index
    %c0_59 = arith.constant 0 : index
    %c0_60 = arith.constant 0 : index
    %107 = vector.load %arg3[%c0_58, %c0_59, %c0_60] : memref<1x16x32xf32, #tpu.memory_space<vmem>>, vector<1x16x32xf32>
    %108 = vector.shape_cast %107 : vector<1x16x32xf32> to vector<16x32xf32>
    %109 = arith.truncf %108 : vector<16x32xf32> to vector<16x32xbf16>
    %c0_61 = arith.constant 0 : index
    %c0_62 = arith.constant 0 : index
    %110 = vector.load %arg22[%c0_61, %c0_62] : memref<32x32xbf16, #tpu.memory_space<vmem>>, vector<32x32xbf16>
    %cst_63 = arith.constant dense<0.000000e+00> : vector<16x32xf32>
    %111 = tpu.matmul %109, %110, %cst_63 {dimension_numbers = #tpu.dot_dimension_numbers<[1], [0], [0], [1], [0, 0, 1, 1], [], []>} : vector<16x32xbf16>, vector<32x32xbf16>, vector<16x32xf32> -> vector<16x32xf32>
    %c0_64 = arith.constant 0 : index
    %c0_65 = arith.constant 0 : index
    %112 = vector.load %arg23[%c0_64, %c0_65] : memref<1x32xf32, #tpu.memory_space<vmem>>, vector<1x32xf32>
    %113 = vector.broadcast %112 : vector<1x32xf32> to vector<16x32xf32>
    %114 = arith.addf %111, %113 : vector<16x32xf32>
    %115 = arith.addf %105, %114 : vector<16x32xf32>
    %116 = vector.shape_cast %88 : vector<8x32xf32> to vector<8x4x8xf32>
    %117 = tpu.transpose %116, [1, 0, 2] : vector<8x4x8xf32> -> vector<4x8x8xf32>
    %118 = vector.shape_cast %96 : vector<8x32xf32> to vector<8x4x8xf32>
    %119 = tpu.transpose %118, [1, 0, 2] : vector<8x4x8xf32> -> vector<4x8x8xf32>
    %120 = tpu.concatenate %117, %119 in 2 : vector<4x8x8xf32>, vector<4x8x8xf32> -> vector<4x8x16xf32>
    %121 = vector.shape_cast %115 : vector<16x32xf32> to vector<16x4x8xf32>
    %122 = tpu.transpose %121, [1, 0, 2] : vector<16x4x8xf32> -> vector<4x16x8xf32>
    %123 = vector.shape_cast %114 : vector<16x32xf32> to vector<16x4x8xf32>
    %124 = tpu.transpose %123, [1, 0, 2] : vector<16x4x8xf32> -> vector<4x16x8xf32>
    %125 = tpu.concatenate %122, %124 in 2 : vector<4x16x8xf32>, vector<4x16x8xf32> -> vector<4x16x16xf32>
    %126 = vector.shape_cast %106 : vector<16x32xf32> to vector<16x4x8xf32>
    %127 = tpu.transpose %126, [1, 0, 2] : vector<16x4x8xf32> -> vector<4x16x8xf32>
    %128 = arith.truncf %120 : vector<4x8x16xf32> to vector<4x8x16xbf16>
    %129 = arith.truncf %125 : vector<4x16x16xf32> to vector<4x16x16xbf16>
    "tpu.trace_start"() <{level = 10 : i32, message = "hqd,hkd->hqk"}> : () -> ()
    %cst_66 = arith.constant dense<0.000000e+00> : vector<4x8x16xf32>
    %130 = tpu.matmul %128, %129, %cst_66 {dimension_numbers = #tpu.dot_dimension_numbers<[2], [2], [1], [1], [0, 0, 0, 1, 1, 1], [0], [0]>} : vector<4x8x16xbf16>, vector<4x16x16xbf16>, vector<4x8x16xf32> -> vector<4x8x16xf32>
    "tpu.trace_stop"() : () -> ()
    %cst_67 = arith.constant dense<0xFF800000> : vector<4x8xf32>
    %131 = vector.multi_reduction <maximumf>, %130, %cst_67 [2] : vector<4x8x16xf32> to vector<4x8xf32>
    %132 = vector.shape_cast %131 : vector<4x8xf32> to vector<4x8x1xf32>
    %133 = vector.broadcast %132 : vector<4x8x1xf32> to vector<4x8x16xf32>
    %134 = arith.subf %130, %133 : vector<4x8x16xf32>
    %135 = math.exp %134 : vector<4x8x16xf32>
    %cst_68 = arith.constant dense<0.000000e+00> : vector<4x8xf32>
    %136 = vector.multi_reduction <add>, %135, %cst_68 [2] : vector<4x8x16xf32> to vector<4x8xf32>
    %137 = vector.shape_cast %136 : vector<4x8xf32> to vector<4x8x1xf32>
    %138 = tpu.reciprocal %137 {approx = true} : vector<4x8x1xf32> -> vector<4x8x1xf32>
    %139 = vector.broadcast %138 : vector<4x8x1xf32> to vector<4x8x16xf32>
    %140 = arith.mulf %135, %139 : vector<4x8x16xf32>
    %141 = arith.truncf %140 : vector<4x8x16xf32> to vector<4x8x16xbf16>
    %142 = arith.truncf %127 : vector<4x16x8xf32> to vector<4x16x8xbf16>
    "tpu.trace_start"() <{level = 10 : i32, message = "hqk,hkd->hqd"}> : () -> ()
    %cst_69 = arith.constant dense<0.000000e+00> : vector<4x8x8xf32>
    %143 = tpu.matmul %141, %142, %cst_69 {dimension_numbers = #tpu.dot_dimension_numbers<[2], [1], [1], [2], [0, 0, 0, 1, 1, 2], [0], [0]>} : vector<4x8x16xbf16>, vector<4x16x8xbf16>, vector<4x8x8xf32> -> vector<4x8x8xf32>
    "tpu.trace_stop"() : () -> ()
    %144 = tpu.transpose %143, [1, 0, 2] : vector<4x8x8xf32> -> vector<8x4x8xf32>
    %145 = vector.shape_cast %144 : vector<8x4x8xf32> to vector<8x32xf32>
    %146 = arith.truncf %145 : vector<8x32xf32> to vector<8x32xbf16>
    %c0_70 = arith.constant 0 : index
    %c0_71 = arith.constant 0 : index
    %147 = vector.load %arg24[%c0_70, %c0_71] : memref<32x32xbf16, #tpu.memory_space<vmem>>, vector<32x32xbf16>
    %cst_72 = arith.constant dense<0.000000e+00> : vector<8x32xf32>
    %148 = tpu.matmul %146, %147, %cst_72 {dimension_numbers = #tpu.dot_dimension_numbers<[1], [0], [0], [1], [0, 0, 1, 1], [], []>} : vector<8x32xbf16>, vector<32x32xbf16>, vector<8x32xf32> -> vector<8x32xf32>
    %c0_73 = arith.constant 0 : index
    %c0_74 = arith.constant 0 : index
    %149 = vector.load %arg25[%c0_73, %c0_74] : memref<1x32xf32, #tpu.memory_space<vmem>>, vector<1x32xf32>
    %150 = vector.broadcast %149 : vector<1x32xf32> to vector<8x32xf32>
    %151 = arith.addf %148, %150 : vector<8x32xf32>
    %152 = arith.addf %75, %151 : vector<8x32xf32>
    %c0_75 = arith.constant 0 : index
    %c0_76 = arith.constant 0 : index
    %153 = vector.load %arg26[%c0_75, %c0_76] : memref<1x32xf32, #tpu.memory_space<vmem>>, vector<1x32xf32>
    %c0_77 = arith.constant 0 : index
    %c0_78 = arith.constant 0 : index
    %154 = vector.load %arg27[%c0_77, %c0_78] : memref<1x32xf32, #tpu.memory_space<vmem>>, vector<1x32xf32>
    %cst_79 = arith.constant dense<0.000000e+00> : vector<8xf32>
    %155 = vector.multi_reduction <add>, %152, %cst_79 [1] : vector<8x32xf32> to vector<8xf32>
    %156 = vector.shape_cast %155 : vector<8xf32> to vector<8x1xf32>
    %cst_80 = arith.constant 3.200000e+01 : f32
    %157 = vector.broadcast %cst_80 : f32 to vector<8x1xf32>
    %158 = arith.divf %156, %157 : vector<8x1xf32>
    %159 = vector.broadcast %158 : vector<8x1xf32> to vector<8x32xf32>
    %160 = arith.subf %152, %159 : vector<8x32xf32>
    %161 = arith.mulf %160, %160 : vector<8x32xf32>
    %cst_81 = arith.constant dense<0.000000e+00> : vector<8xf32>
    %162 = vector.multi_reduction <add>, %161, %cst_81 [1] : vector<8x32xf32> to vector<8xf32>
    %163 = vector.shape_cast %162 : vector<8xf32> to vector<8x1xf32>
    %cst_82 = arith.constant 3.200000e+01 : f32
    %164 = vector.broadcast %cst_82 : f32 to vector<8x1xf32>
    %165 = arith.divf %163, %164 : vector<8x1xf32>
    %cst_83 = arith.constant 9.99999974E-6 : f32
    %166 = vector.broadcast %cst_83 : f32 to vector<8x1xf32>
    %167 = arith.addf %165, %166 : vector<8x1xf32>
    %168 = math.rsqrt %167 : vector<8x1xf32>
    %169 = vector.broadcast %168 : vector<8x1xf32> to vector<8x32xf32>
    %170 = arith.mulf %160, %169 : vector<8x32xf32>
    %171 = vector.broadcast %153 : vector<1x32xf32> to vector<8x32xf32>
    %172 = arith.mulf %170, %171 : vector<8x32xf32>
    %173 = vector.broadcast %154 : vector<1x32xf32> to vector<8x32xf32>
    %174 = arith.addf %172, %173 : vector<8x32xf32>
    %175 = arith.truncf %174 : vector<8x32xf32> to vector<8x32xbf16>
    %c0_84 = arith.constant 0 : index
    %c0_85 = arith.constant 0 : index
    %176 = vector.load %arg28[%c0_84, %c0_85] : memref<32x64xbf16, #tpu.memory_space<vmem>>, vector<32x64xbf16>
    %cst_86 = arith.constant dense<0.000000e+00> : vector<8x64xf32>
    %177 = tpu.matmul %175, %176, %cst_86 {dimension_numbers = #tpu.dot_dimension_numbers<[1], [0], [0], [1], [0, 0, 1, 1], [], []>} : vector<8x32xbf16>, vector<32x64xbf16>, vector<8x64xf32> -> vector<8x64xf32>
    %c0_87 = arith.constant 0 : index
    %c0_88 = arith.constant 0 : index
    %178 = vector.load %arg29[%c0_87, %c0_88] : memref<1x64xf32, #tpu.memory_space<vmem>>, vector<1x64xf32>
    %179 = vector.broadcast %178 : vector<1x64xf32> to vector<8x64xf32>
    %180 = arith.addf %177, %179 : vector<8x64xf32>
    %cst_89 = arith.constant 0.000000e+00 : f32
    %181 = vector.broadcast %cst_89 : f32 to vector<8x64xf32>
    %182 = arith.maximumf %180, %181 : vector<8x64xf32>
    %183 = arith.truncf %182 : vector<8x64xf32> to vector<8x64xbf16>
    %c0_90 = arith.constant 0 : index
    %c0_91 = arith.constant 0 : index
    %184 = vector.load %arg30[%c0_90, %c0_91] : memref<64x32xbf16, #tpu.memory_space<vmem>>, vector<64x32xbf16>
    %cst_92 = arith.constant dense<0.000000e+00> : vector<8x32xf32>
    %185 = tpu.matmul %183, %184, %cst_92 {dimension_numbers = #tpu.dot_dimension_numbers<[1], [0], [0], [1], [0, 0, 1, 1], [], []>} : vector<8x64xbf16>, vector<64x32xbf16>, vector<8x32xf32> -> vector<8x32xf32>
    %c0_93 = arith.constant 0 : index
    %c0_94 = arith.constant 0 : index
    %186 = vector.load %arg31[%c0_93, %c0_94] : memref<1x32xf32, #tpu.memory_space<vmem>>, vector<1x32xf32>
    %187 = vector.broadcast %186 : vector<1x32xf32> to vector<8x32xf32>
    %188 = arith.addf %185, %187 : vector<8x32xf32>
    %189 = arith.addf %174, %188 : vector<8x32xf32>
    %c0_95 = arith.constant 0 : index
    %c0_96 = arith.constant 0 : index
    %190 = vector.load %arg32[%c0_95, %c0_96] : memref<1x32xf32, #tpu.memory_space<vmem>>, vector<1x32xf32>
    %c0_97 = arith.constant 0 : index
    %c0_98 = arith.constant 0 : index
    %191 = vector.load %arg33[%c0_97, %c0_98] : memref<1x32xf32, #tpu.memory_space<vmem>>, vector<1x32xf32>
    %cst_99 = arith.constant dense<0.000000e+00> : vector<8xf32>
    %192 = vector.multi_reduction <add>, %189, %cst_99 [1] : vector<8x32xf32> to vector<8xf32>
    %193 = vector.shape_cast %192 : vector<8xf32> to vector<8x1xf32>
    %cst_100 = arith.constant 3.200000e+01 : f32
    %194 = vector.broadcast %cst_100 : f32 to vector<8x1xf32>
    %195 = arith.divf %193, %194 : vector<8x1xf32>
    %196 = vector.broadcast %195 : vector<8x1xf32> to vector<8x32xf32>
    %197 = arith.subf %189, %196 : vector<8x32xf32>
    %198 = arith.mulf %197, %197 : vector<8x32xf32>
    %cst_101 = arith.constant dense<0.000000e+00> : vector<8xf32>
    %199 = vector.multi_reduction <add>, %198, %cst_101 [1] : vector<8x32xf32> to vector<8xf32>
    %200 = vector.shape_cast %199 : vector<8xf32> to vector<8x1xf32>
    %cst_102 = arith.constant 3.200000e+01 : f32
    %201 = vector.broadcast %cst_102 : f32 to vector<8x1xf32>
    %202 = arith.divf %200, %201 : vector<8x1xf32>
    %cst_103 = arith.constant 9.99999974E-6 : f32
    %203 = vector.broadcast %cst_103 : f32 to vector<8x1xf32>
    %204 = arith.addf %202, %203 : vector<8x1xf32>
    %205 = math.rsqrt %204 : vector<8x1xf32>
    %206 = vector.broadcast %205 : vector<8x1xf32> to vector<8x32xf32>
    %207 = arith.mulf %197, %206 : vector<8x32xf32>
    %208 = vector.broadcast %190 : vector<1x32xf32> to vector<8x32xf32>
    %209 = arith.mulf %207, %208 : vector<8x32xf32>
    %210 = vector.broadcast %191 : vector<1x32xf32> to vector<8x32xf32>
    %211 = arith.addf %209, %210 : vector<8x32xf32>
    %c0_104 = arith.constant 0 : index
    %c0_105 = arith.constant 0 : index
    %c0_106 = arith.constant 0 : index
    %212 = vector.load %arg34[%c0_104, %c0_105, %c0_106] : memref<1x8x32xf32, #tpu.memory_space<vmem>>, vector<1x8x32xf32>
    %213 = vector.shape_cast %212 : vector<1x8x32xf32> to vector<8x32xf32>
    %214 = vector.shape_cast %211 : vector<8x32xf32> to vector<1x8x32xf32>
    tpu.vector_store %arg34[%c0_104, %c0_105, %c0_106], %214 {strides = array<i32>} : memref<1x8x32xf32, #tpu.memory_space<vmem>>, vector<1x8x32xf32>,
    return
  }
  func.func @transform_0(%arg0: i32) -> (i32, i32, i32) {
    %c0_i32 = arith.constant 0 : i32
    %c0_i32_0 = arith.constant 0 : i32
    %c0_i32_1 = arith.constant 0 : i32
    return %arg0, %c0_i32, %c0_i32_0 : i32, i32, i32
  }
  func.func @transform_1(%arg0: i32) -> (i32, i32, i32) {
    %c0_i32 = arith.constant 0 : i32
    %c0_i32_0 = arith.constant 0 : i32
    %c0_i32_1 = arith.constant 0 : i32
    return %arg0, %c0_i32, %c0_i32_0 : i32, i32, i32
  }
  func.func @transform_2(%arg0: i32) -> (i32, i32, i32) {
    %c0_i32 = arith.constant 0 : i32
    %c0_i32_0 = arith.constant 0 : i32
    %c0_i32_1 = arith.constant 0 : i32
    return %arg0, %c0_i32, %c0_i32_0 : i32, i32, i32
  }
  func.func @transform_3(%arg0: i32) -> (i32, i32, i32) {
    %c0_i32 = arith.constant 0 : i32
    %c0_i32_0 = arith.constant 0 : i32
    %c0_i32_1 = arith.constant 0 : i32
    return %arg0, %c0_i32, %c0_i32_0 : i32, i32, i32
  }
  func.func @transform_4(%arg0: i32) -> (i32, i32, i32) {
    %c0_i32 = arith.constant 0 : i32
    %c0_i32_0 = arith.constant 0 : i32
    %c0_i32_1 = arith.constant 0 : i32
    return %arg0, %c0_i32, %c0_i32_0 : i32, i32, i32
  }
  func.func @transform_5(%arg0: i32) -> (i32, i32) {
    %c0_i32 = arith.constant 0 : i32
    %c0_i32_0 = arith.constant 0 : i32
    %c0_i32_1 = arith.constant 0 : i32
    return %c0_i32, %c0_i32_0 : i32, i32
  }
  func.func @transform_6(%arg0: i32) -> (i32, i32) {
    %c0_i32 = arith.constant 0 : i32
    %c0_i32_0 = arith.constant 0 : i32
    %c0_i32_1 = arith.constant 0 : i32
    return %c0_i32, %c0_i32_0 : i32, i32
  }
  func.func @transform_7(%arg0: i32) -> (i32, i32) {
    %c0_i32 = arith.constant 0 : i32
    %c0_i32_0 = arith.constant 0 : i32
    %c0_i32_1 = arith.constant 0 : i32
    return %c0_i32, %c0_i32_0 : i32, i32
  }
  func.func @transform_8(%arg0: i32) -> (i32, i32) {
    %c0_i32 = arith.constant 0 : i32
    %c0_i32_0 = arith.constant 0 : i32
    %c0_i32_1 = arith.constant 0 : i32
    return %c0_i32, %c0_i32_0 : i32, i32
  }
  func.func @transform_9(%arg0: i32) -> (i32, i32) {
    %c0_i32 = arith.constant 0 : i32
    %c0_i32_0 = arith.constant 0 : i32
    %c0_i32_1 = arith.constant 0 : i32
    return %c0_i32, %c0_i32_0 : i32, i32
  }
  func.func @transform_10(%arg0: i32) -> (i32, i32) {
    %c0_i32 = arith.constant 0 : i32
    %c0_i32_0 = arith.constant 0 : i32
    %c0_i32_1 = arith.constant 0 : i32
    return %c0_i32, %c0_i32_0 : i32, i32
  }
  func.func @transform_11(%arg0: i32) -> (i32, i32) {
    %c0_i32 = arith.constant 0 : i32
    %c0_i32_0 = arith.constant 0 : i32
    %c0_i32_1 = arith.constant 0 : i32
    return %c0_i32, %c0_i32_0 : i32, i32
  }
  func.func @transform_12(%arg0: i32) -> (i32, i32) {
    %c0_i32 = arith.constant 0 : i32
    %c0_i32_0 = arith.constant 0 : i32
    %c0_i32_1 = arith.constant 0 : i32
    return %c0_i32, %c0_i32_0 : i32, i32
  }
  func.func @transform_13(%arg0: i32) -> (i32, i32) {
    %c0_i32 = arith.constant 0 : i32
    %c0_i32_0 = arith.constant 0 : i32
    %c0_i32_1 = arith.constant 0 : i32
    return %c0_i32, %c0_i32_0 : i32, i32
  }
  func.func @transform_14(%arg0: i32) -> (i32, i32) {
    %c0_i32 = arith.constant 0 : i32
    %c0_i32_0 = arith.constant 0 : i32
    %c0_i32_1 = arith.constant 0 : i32
    return %c0_i32, %c0_i32_0 : i32, i32
  }
  func.func @transform_15(%arg0: i32) -> (i32, i32) {
    %c0_i32 = arith.constant 0 : i32
    %c0_i32_0 = arith.constant 0 : i32
    %c0_i32_1 = arith.constant 0 : i32
    return %c0_i32, %c0_i32_0 : i32, i32
  }
  func.func @transform_16(%arg0: i32) -> (i32, i32) {
    %c0_i32 = arith.constant 0 : i32
    %c0_i32_0 = arith.constant 0 : i32
    %c0_i32_1 = arith.constant 0 : i32
    return %c0_i32, %c0_i32_0 : i32, i32
  }
  func.func @transform_17(%arg0: i32) -> (i32, i32) {
    %c0_i32 = arith.constant 0 : i32
    %c0_i32_0 = arith.constant 0 : i32
    %c0_i32_1 = arith.constant 0 : i32
    return %c0_i32, %c0_i32_0 : i32, i32
  }
  func.func @transform_18(%arg0: i32) -> (i32, i32) {
    %c0_i32 = arith.constant 0 : i32
    %c0_i32_0 = arith.constant 0 : i32
    %c0_i32_1 = arith.constant 0 : i32
    return %c0_i32, %c0_i32_0 : i32, i32
  }
  func.func @transform_19(%arg0: i32) -> (i32, i32) {
    %c0_i32 = arith.constant 0 : i32
    %c0_i32_0 = arith.constant 0 : i32
    %c0_i32_1 = arith.constant 0 : i32
    return %c0_i32, %c0_i32_0 : i32, i32
  }
  func.func @transform_20(%arg0: i32) -> (i32, i32) {
    %c0_i32 = arith.constant 0 : i32
    %c0_i32_0 = arith.constant 0 : i32
    %c0_i32_1 = arith.constant 0 : i32
    return %c0_i32, %c0_i32_0 : i32, i32
  }
  func.func @transform_21(%arg0: i32) -> (i32, i32) {
    %c0_i32 = arith.constant 0 : i32
    %c0_i32_0 = arith.constant 0 : i32
    %c0_i32_1 = arith.constant 0 : i32
    return %c0_i32, %c0_i32_0 : i32, i32
  }
  func.func @transform_22(%arg0: i32) -> (i32, i32) {
    %c0_i32 = arith.constant 0 : i32
    %c0_i32_0 = arith.constant 0 : i32
    %c0_i32_1 = arith.constant 0 : i32
    return %c0_i32, %c0_i32_0 : i32, i32
  }
  func.func @transform_23(%arg0: i32) -> (i32, i32) {
    %c0_i32 = arith.constant 0 : i32
    %c0_i32_0 = arith.constant 0 : i32
    %c0_i32_1 = arith.constant 0 : i32
    return %c0_i32, %c0_i32_0 : i32, i32
  }
  func.func @transform_24(%arg0: i32) -> (i32, i32) {
    %c0_i32 = arith.constant 0 : i32
    %c0_i32_0 = arith.constant 0 : i32
    %c0_i32_1 = arith.constant 0 : i32
    return %c0_i32, %c0_i32_0 : i32, i32
  }
  func.func @transform_25(%arg0: i32) -> (i32, i32) {
    %c0_i32 = arith.constant 0 : i32
    %c0_i32_0 = arith.constant 0 : i32
    %c0_i32_1 = arith.constant 0 : i32
    return %c0_i32, %c0_i32_0 : i32, i32
  }
  func.func @transform_26(%arg0: i32) -> (i32, i32) {
    %c0_i32 = arith.constant 0 : i32
    %c0_i32_0 = arith.constant 0 : i32
    %c0_i32_1 = arith.constant 0 : i32
    return %c0_i32, %c0_i32_0 : i32, i32
  }
  func.func @transform_27(%arg0: i32) -> (i32, i32) {
    %c0_i32 = arith.constant 0 : i32
    %c0_i32_0 = arith.constant 0 : i32
    %c0_i32_1 = arith.constant 0 : i32
    return %c0_i32, %c0_i32_0 : i32, i32
  }
  func.func @transform_28(%arg0: i32) -> (i32, i32) {
    %c0_i32 = arith.constant 0 : i32
    %c0_i32_0 = arith.constant 0 : i32
    %c0_i32_1 = arith.constant 0 : i32
    return %c0_i32, %c0_i32_0 : i32, i32
  }
  func.func @transform_29(%arg0: i32) -> (i32, i32) {
    %c0_i32 = arith.constant 0 : i32
    %c0_i32_0 = arith.constant 0 : i32
    %c0_i32_1 = arith.constant 0 : i32
    return %c0_i32, %c0_i32_0 : i32, i32
  }
  func.func @transform_30(%arg0: i32) -> (i32, i32) {
    %c0_i32 = arith.constant 0 : i32
    %c0_i32_0 = arith.constant 0 : i32
    %c0_i32_1 = arith.constant 0 : i32
    return %c0_i32, %c0_i32_0 : i32, i32
  }
  func.func @transform_31(%arg0: i32) -> (i32, i32) {
    %c0_i32 = arith.constant 0 : i32
    %c0_i32_0 = arith.constant 0 : i32
    %c0_i32_1 = arith.constant 0 : i32
    return %c0_i32, %c0_i32_0 : i32, i32
  }
  func.func @transform_32(%arg0: i32) -> (i32, i32) {
    %c0_i32 = arith.constant 0 : i32
    %c0_i32_0 = arith.constant 0 : i32
    %c0_i32_1 = arith.constant 0 : i32
    return %c0_i32, %c0_i32_0 : i32, i32
  }
  func.func @transform_33(%arg0: i32) -> (i32, i32, i32) {
    %c0_i32 = arith.constant 0 : i32
    %c0_i32_0 = arith.constant 0 : i32
    %c0_i32_1 = arith.constant 0 : i32
    return %arg0, %c0_i32, %c0_i32_0 : i32, i32, i32
  }
}

</mosaic_0001>

<llo_original>
// kernel: decoder_layer_forward.1
$region0: #{decoder_layer_forward.1}
  #allocation0 [shape = 'u32[]', space=smem, size = 0x4, offset = 0x4, fixed_abs, tag = 'smem constant byte address 0x4 - core index']
  #allocation1 [shape = 'u32[72,128]{1,0:T(1,128)}', space=vmem, size = 0x9000, scoped, tag = 'internal scratch']
  %s0 = inlined_call_operand.smem [shape: u32[34], index: -1, kind: input, shape index: {}]
  %s1 = sld [smem:[%s0]]
  %s2 = scalar_lea.smem %s0, 1
  %s3 = sld [smem:[%s2]]
  %s4 = scalar_lea.smem %s0, 2
  %s5 = sld [smem:[%s4]]
  %s6 = scalar_lea.smem %s0, 3
  %s7 = sld [smem:[%s6]]
  %s8 = scalar_lea.smem %s0, 4
  %s9 = sld [smem:[%s8]]
  %s10 = scalar_lea.smem %s0, 5
  %s11 = sld [smem:[%s10]]
  %s12 = scalar_lea.smem %s0, 6
  %s13 = sld [smem:[%s12]]
  %s14 = scalar_lea.smem %s0, 7
  %s15 = sld [smem:[%s14]]
  %s16 = scalar_lea.smem %s0, 8
  %s17 = sld [smem:[%s16]]
  %s18 = scalar_lea.smem %s0, 9
  %s19 = sld [smem:[%s18]]
  %s20 = scalar_lea.smem %s0, 10
  %s21 = sld [smem:[%s20]]
  %s22 = scalar_lea.smem %s0, 11
  %s23 = sld [smem:[%s22]]
  %s24 = scalar_lea.smem %s0, 12
  %s25 = sld [smem:[%s24]]
  %s26 = scalar_lea.smem %s0, 13
  %s27 = sld [smem:[%s26]]
  %s28 = scalar_lea.smem %s0, 14
  %s29 = sld [smem:[%s28]]
  %s30 = scalar_lea.smem %s0, 15
  %s31 = sld [smem:[%s30]]
  %s32 = scalar_lea.smem %s0, 16
  %s33 = sld [smem:[%s32]]
  %s34 = scalar_lea.smem %s0, 17
  %s35 = sld [smem:[%s34]]
  %s36 = scalar_lea.smem %s0, 18
  %s37 = sld [smem:[%s36]]
  %s38 = scalar_lea.smem %s0, 19
  %s39 = sld [smem:[%s38]]
  %s40 = scalar_lea.smem %s0, 20
  %s41 = sld [smem:[%s40]]
  %s42 = scalar_lea.smem %s0, 21
  %s43 = sld [smem:[%s42]]
  %s44 = scalar_lea.smem %s0, 22
  %s45 = sld [smem:[%s44]]
  %s46 = scalar_lea.smem %s0, 23
  %s47 = sld [smem:[%s46]]
  %s48 = scalar_lea.smem %s0, 24
  %s49 = sld [smem:[%s48]]
  %s50 = scalar_lea.smem %s0, 25
  %s51 = sld [smem:[%s50]]
  %s52 = scalar_lea.smem %s0, 26
  %s53 = sld [smem:[%s52]]
  %s54 = scalar_lea.smem %s0, 27
  %s55 = sld [smem:[%s54]]
  %s56 = scalar_lea.smem %s0, 28
  %s57 = sld [smem:[%s56]]
  %s58 = scalar_lea.smem %s0, 29
  %s59 = sld [smem:[%s58]]
  %s60 = scalar_lea.smem %s0, 30
  %s61 = sld [smem:[%s60]]
  %s62 = scalar_lea.smem %s0, 31
  %s63 = sld [smem:[%s62]]
  %s64 = scalar_lea.smem %s0, 32
  %s65 = sld [smem:[%s64]]
  %s66 = scalar_lea.smem %s0, 33
  %s67 = sld [smem:[%s66]]
  %s68 = sld [smem:[#allocation0]]
  $region193: #{decoder_layer_forward.1} parent=0
    _
  %s70 = ssub.s32 1, %s68
  %s71 = scalar_select 0, %s70, %s68
  $region1: #{decoder_layer_forward.1} parent=0
    #allocation2 [shape = 'u8[512]{0}', space=vmem, size = 0x400, scoped, tag = 'input window, operand 6, single buffered']
    #allocation3 [shape = 's32[2]{0}', space=sflag, size = 0x8, scoped, tag = 'scoped memory for decoder_layer_forward.1']
    #allocation4 [shape = 'u8[512]{0}', space=vmem, size = 0x400, scoped, tag = 'input window, operand 25, single buffered']
    #allocation5 [shape = 's32[1]{0}', space=sflag, size = 0x4, scoped, tag = 'scoped memory for decoder_layer_forward.1']
    #allocation6 [shape = 'u8[512]{0}', space=vmem, size = 0x400, scoped, tag = 'input window, operand 26, single buffered']
    #allocation7 [shape = 'u8[512]{0}', space=vmem, size = 0x400, scoped, tag = 'input window, operand 28, single buffered']
    #allocation8 [shape = 's32[1]{0}', space=sflag, size = 0x4, scoped, tag = 'scoped memory for decoder_layer_forward.1']
    #allocation9 [shape = 'u8[512]{0}', space=vmem, size = 0x400, scoped, tag = 'input window, operand 30, single buffered']
    #allocation10 [shape = 'u8[512]{0}', space=vmem, size = 0x400, scoped, tag = 'input window, operand 31, single buffered']
    #allocation11 [shape = 's32[1]{0}', space=sflag, size = 0x4, scoped, tag = 'scoped memory for decoder_layer_forward.1']
    #allocation12 [shape = 'u8[512]{0}', space=vmem, size = 0x400, scoped, tag = 'input window, operand 32, single buffered']
    %72 = vsyncpa [#allocation3], 0
    %73 = vsyncpa [#allocation5], 0
    %74 = vsyncpa [#allocation8], 0
    %75 = vsyncpa [#allocation11], 0
    loop: start=0, step=1, limit=4
    $region2: #{decoder_layer_forward.1} parent=1 // loop_pre_header
      _
    $region3: #{decoder_layer_forward.1} parent=1 // loop_header
      %s77 = sphi 0, %s81
      %p78 = scmp.ge.s32.totalorder %s77, 4
      %s87 = sphi 0, %s89
      %s90 = sphi 0, %s87
      %s91 = sphi 0, %s90
      %s107 = sphi 0, %s91
      %s113 = sphi 0, %s115
      %s116 = sphi 0, %s113
      %s117 = sphi 0, %s116
      %s133 = sphi 0, %s117
      %s139 = sphi 0, %s141
      %s142 = sphi 0, %s139
      %s143 = sphi 0, %s142
      %s159 = sphi 0, %s143
      %s165 = sphi 0, %s167
      %s168 = sphi 0, %s165
      %s169 = sphi 0, %s168
      %s185 = sphi 0, %s169
      %s191 = sphi 0, %s193
      %s194 = sphi 0, %s191
      %s195 = sphi 0, %s194
      %s211 = sphi 0, %s195
      %s215 = sphi 0, %s215
      %s217 = sphi 0, %s215
      %s218 = sphi 0, %s217
      %s232 = sphi 0, %s218
      %s236 = sphi 0, %s236
      %s238 = sphi 0, %s236
      %s239 = sphi 0, %s238
      %s253 = sphi 0, %s239
      %s257 = sphi 0, %s257
      %s259 = sphi 0, %s257
      %s260 = sphi 0, %s259
      %s274 = sphi 0, %s260
      %s278 = sphi 0, %s278
      %s280 = sphi 0, %s278
      %s281 = sphi 0, %s280
      %s295 = sphi 0, %s281
      %s299 = sphi 0, %s299
      %s301 = sphi 0, %s299
      %s302 = sphi 0, %s301
      %s316 = sphi 0, %s302
      %s320 = sphi 0, %s320
      %s322 = sphi 0, %s320
      %s323 = sphi 0, %s322
      %s337 = sphi 0, %s323
      %s341 = sphi 0, %s341
      %s343 = sphi 0, %s341
      %s344 = sphi 0, %s343
      %s358 = sphi 0, %s344
      %s362 = sphi 0, %s362
      %s364 = sphi 0, %s362
      %s365 = sphi 0, %s364
      %s379 = sphi 0, %s365
      %s383 = sphi 0, %s383
      %s385 = sphi 0, %s383
      %s386 = sphi 0, %s385
      %s400 = sphi 0, %s386
      %s404 = sphi 0, %s404
      %s406 = sphi 0, %s404
      %s407 = sphi 0, %s406
      %s421 = sphi 0, %s407
      %s425 = sphi 0, %s425
      %s427 = sphi 0, %s425
      %s428 = sphi 0, %s427
      %s442 = sphi 0, %s428
      %s446 = sphi 0, %s446
      %s448 = sphi 0, %s446
      %s449 = sphi 0, %s448
      %s463 = sphi 0, %s449
      %s467 = sphi 0, %s467
      %s469 = sphi 0, %s467
      %s470 = sphi 0, %s469
      %s484 = sphi 0, %s470
      %s488 = sphi 0, %s488
      %s490 = sphi 0, %s488
      %s491 = sphi 0, %s490
      %s505 = sphi 0, %s491
      %s509 = sphi 0, %s509
      %s511 = sphi 0, %s509
      %s512 = sphi 0, %s511
      %s526 = sphi 0, %s512
      %s530 = sphi 0, %s530
      %s532 = sphi 0, %s530
      %s533 = sphi 0, %s532
      %s547 = sphi 0, %s533
      %s551 = sphi 0, %s551
      %s553 = sphi 0, %s551
      %s554 = sphi 0, %s553
      %s568 = sphi 0, %s554
      %s572 = sphi 0, %s572
      %s574 = sphi 0, %s572
      %s575 = sphi 0, %s574
      %s589 = sphi 0, %s575
      %s593 = sphi 0, %s593
      %s595 = sphi 0, %s593
      %s596 = sphi 0, %s595
      %s610 = sphi 0, %s596
      %s614 = sphi 0, %s614
      %s616 = sphi 0, %s614
      %s617 = sphi 0, %s616
      %s631 = sphi 0, %s617
      %s635 = sphi 0, %s635
      %s637 = sphi 0, %s635
      %s638 = sphi 0, %s637
      %s652 = sphi 0, %s638
      %s656 = sphi 0, %s656
      %s658 = sphi 0, %s656
      %s659 = sphi 0, %s658
      %s673 = sphi 0, %s659
      %s677 = sphi 0, %s677
      %s679 = sphi 0, %s677
      %s680 = sphi 0, %s679
      %s694 = sphi 0, %s680
      %s698 = sphi 0, %s698
      %s700 = sphi 0, %s698
      %s701 = sphi 0, %s700
      %s715 = sphi 0, %s701
      %s719 = sphi 0, %s719
      %s721 = sphi 0, %s719
      %s722 = sphi 0, %s721
      %s736 = sphi 0, %s722
      %s740 = sphi 0, %s740
      %s742 = sphi 0, %s740
      %s743 = sphi 0, %s742
      %s757 = sphi 0, %s743
      %s761 = sphi 0, %s761
      %s763 = sphi 0, %s761
      %s764 = sphi 0, %s763
      %s778 = sphi 0, %s764
      %s782 = sphi 0, %s782
      %s784 = sphi 0, %s782
      %s785 = sphi 0, %s784
      %s799 = sphi 0, %s785
      %s805 = sphi 0, %s807
      %s808 = sphi 0, %s805
      %s809 = sphi 0, %s808
      %s825 = sphi 0, %s809
    $region4: #{decoder_layer_forward.1} parent=1 // loop_header_branch
      %80 = sbr.rel (%p78) target = $region8
    $region5: #{decoder_layer_forward.1} parent=1 // loop_body
      %s82 = ssub.s32 %s77, 1
      %s83 = ssub.s32 %s77, 2
      %s84 = sadd.s32 %s77, 1
      %s85 = ssub.s32 %s77, %s84
      %p86 = scmp.eq.s32.totalorder %s85, 0
      %s88 = sadd.s32 %s87, 1
      %s89 = scalar_select %p86, %s87, %s88
      %p92 = pneg %p86
      %p93 = scmp.eq.s32.totalorder %s77, 1
      %p94 = por %p92, %p93
      %p95 = scmp.ne.s32.totalorder %s87, %s90
      %p96 = scmp.eq.s32.totalorder %s77, 0
      %p97 = por %p95, %p96
      %p98 = scmp.ne.s32.totalorder %s87, %s90
      %p99 = scmp.eq.s32.totalorder %s82, 1
      %p100 = por %p98, %p99
      %p101 = scmp.ne.s32.totalorder %s90, %s91
      %p102 = scmp.eq.s32.totalorder %s82, 0
      %p103 = por %p101, %p102
      %p104 = scmp.ne.s32.totalorder %s90, %s91
      %p105 = scmp.eq.s32.totalorder %s83, 1
      %p106 = por %p104, %p105
      %p108 = scmp.ne.s32.totalorder %s91, %s107
      %p109 = scmp.eq.s32.totalorder %s83, 0
      %p110 = por %p108, %p109
      %s111 = ssub.s32 %s77, %s84
      %p112 = scmp.eq.s32.totalorder %s111, 0
      %s114 = sadd.s32 %s113, 1
      %s115 = scalar_select %p112, %s113, %s114
      %p118 = pneg %p112
      %p119 = scmp.eq.s32.totalorder %s77, 1
      %p120 = por %p118, %p119
      %p121 = scmp.ne.s32.totalorder %s113, %s116
      %p122 = scmp.eq.s32.totalorder %s77, 0
      %p123 = por %p121, %p122
      %p124 = scmp.ne.s32.totalorder %s113, %s116
      %p125 = scmp.eq.s32.totalorder %s82, 1
      %p126 = por %p124, %p125
      %p127 = scmp.ne.s32.totalorder %s116, %s117
      %p128 = scmp.eq.s32.totalorder %s82, 0
      %p129 = por %p127, %p128
      %p130 = scmp.ne.s32.totalorder %s116, %s117
      %p131 = scmp.eq.s32.totalorder %s83, 1
      %p132 = por %p130, %p131
      %p134 = scmp.ne.s32.totalorder %s117, %s133
      %p135 = scmp.eq.s32.totalorder %s83, 0
      %p136 = por %p134, %p135
      %s137 = ssub.s32 %s77, %s84
      %p138 = scmp.eq.s32.totalorder %s137, 0
      %s140 = sadd.s32 %s139, 1
      %s141 = scalar_select %p138, %s139, %s140
      %p144 = pneg %p138
      %p145 = scmp.eq.s32.totalorder %s77, 1
      %p146 = por %p144, %p145
      %p147 = scmp.ne.s32.totalorder %s139, %s142
      %p148 = scmp.eq.s32.totalorder %s77, 0
      %p149 = por %p147, %p148
      %p150 = scmp.ne.s32.totalorder %s139, %s142
      %p151 = scmp.eq.s32.totalorder %s82, 1
      %p152 = por %p150, %p151
      %p153 = scmp.ne.s32.totalorder %s142, %s143
      %p154 = scmp.eq.s32.totalorder %s82, 0
      %p155 = por %p153, %p154
      %p156 = scmp.ne.s32.totalorder %s142, %s143
      %p157 = scmp.eq.s32.totalorder %s83, 1
      %p158 = por %p156, %p157
      %p160 = scmp.ne.s32.totalorder %s143, %s159
      %p161 = scmp.eq.s32.totalorder %s83, 0
      %p162 = por %p160, %p161
      %s163 = ssub.s32 %s77, %s84
      %p164 = scmp.eq.s32.totalorder %s163, 0
      %s166 = sadd.s32 %s165, 1
      %s167 = scalar_select %p164, %s165, %s166
      %p170 = pneg %p164
      %p171 = scmp.eq.s32.totalorder %s77, 1
      %p172 = por %p170, %p171
      %p173 = scmp.ne.s32.totalorder %s165, %s168
      %p174 = scmp.eq.s32.totalorder %s77, 0
      %p175 = por %p173, %p174
      %p176 = scmp.ne.s32.totalorder %s165, %s168
      %p177 = scmp.eq.s32.totalorder %s82, 1
      %p178 = por %p176, %p177
      %p179 = scmp.ne.s32.totalorder %s168, %s169
      %p180 = scmp.eq.s32.totalorder %s82, 0
      %p181 = por %p179, %p180
      %p182 = scmp.ne.s32.totalorder %s168, %s169
      %p183 = scmp.eq.s32.totalorder %s83, 1
      %p184 = por %p182, %p183
      %p186 = scmp.ne.s32.totalorder %s169, %s185
      %p187 = scmp.eq.s32.totalorder %s83, 0
      %p188 = por %p186, %p187
      %s189 = ssub.s32 %s77, %s84
      %p190 = scmp.eq.s32.totalorder %s189, 0
      %s192 = sadd.s32 %s191, 1
      %s193 = scalar_select %p190, %s191, %s192
      %p196 = pneg %p190
      %p197 = scmp.eq.s32.totalorder %s77, 1
      %p198 = por %p196, %p197
      %p199 = scmp.ne.s32.totalorder %s191, %s194
      %p200 = scmp.eq.s32.totalorder %s77, 0
      %p201 = por %p199, %p200
      %p202 = scmp.ne.s32.totalorder %s191, %s194
      %p203 = scmp.eq.s32.totalorder %s82, 1
      %p204 = por %p202, %p203
      %p205 = scmp.ne.s32.totalorder %s194, %s195
      %p206 = scmp.eq.s32.totalorder %s82, 0
      %p207 = por %p205, %p206
      %p208 = scmp.ne.s32.totalorder %s194, %s195
      %p209 = scmp.eq.s32.totalorder %s83, 1
      %p210 = por %p208, %p209
      %p212 = scmp.ne.s32.totalorder %s195, %s211
      %p213 = scmp.eq.s32.totalorder %s83, 0
      %p214 = por %p212, %p213
      %s216 = sadd.s32 %s215, 1
      %p219 = scmp.eq.s32.totalorder %s77, 1
      %p220 = scmp.ne.s32.totalorder %s215, %s217
      %p221 = scmp.eq.s32.totalorder %s77, 0
      %p222 = por %p220, %p221
      %p223 = scmp.ne.s32.totalorder %s215, %s217
      %p224 = scmp.eq.s32.totalorder %s82, 1
      %p225 = por %p223, %p224
      %p226 = scmp.ne.s32.totalorder %s217, %s218
      %p227 = scmp.eq.s32.totalorder %s82, 0
      %p228 = por %p226, %p227
      %p229 = scmp.ne.s32.totalorder %s217, %s218
      %p230 = scmp.eq.s32.totalorder %s83, 1
      %p231 = por %p229, %p230
      %p233 = scmp.ne.s32.totalorder %s218, %s232
      %p234 = scmp.eq.s32.totalorder %s83, 0
      %p235 = por %p233, %p234
      %s237 = sadd.s32 %s236, 1
      %p240 = scmp.eq.s32.totalorder %s77, 1
      %p241 = scmp.ne.s32.totalorder %s236, %s238
      %p242 = scmp.eq.s32.totalorder %s77, 0
      %p243 = por %p241, %p242
      %p244 = scmp.ne.s32.totalorder %s236, %s238
      %p245 = scmp.eq.s32.totalorder %s82, 1
      %p246 = por %p244, %p245
      %p247 = scmp.ne.s32.totalorder %s238, %s239
      %p248 = scmp.eq.s32.totalorder %s82, 0
      %p249 = por %p247, %p248
      %p250 = scmp.ne.s32.totalorder %s238, %s239
      %p251 = scmp.eq.s32.totalorder %s83, 1
      %p252 = por %p250, %p251
      %p254 = scmp.ne.s32.totalorder %s239, %s253
      %p255 = scmp.eq.s32.totalorder %s83, 0
      %p256 = por %p254, %p255
      %s258 = sadd.s32 %s257, 1
      %p261 = scmp.eq.s32.totalorder %s77, 1
      %p262 = scmp.ne.s32.totalorder %s257, %s259
      %p263 = scmp.eq.s32.totalorder %s77, 0
      %p264 = por %p262, %p263
      %p265 = scmp.ne.s32.totalorder %s257, %s259
      %p266 = scmp.eq.s32.totalorder %s82, 1
      %p267 = por %p265, %p266
      %p268 = scmp.ne.s32.totalorder %s259, %s260
      %p269 = scmp.eq.s32.totalorder %s82, 0
      %p270 = por %p268, %p269
      %p271 = scmp.ne.s32.totalorder %s259, %s260
      %p272 = scmp.eq.s32.totalorder %s83, 1
      %p273 = por %p271, %p272
      %p275 = scmp.ne.s32.totalorder %s260, %s274
      %p276 = scmp.eq.s32.totalorder %s83, 0
      %p277 = por %p275, %p276
      %s279 = sadd.s32 %s278, 1
      %p282 = scmp.eq.s32.totalorder %s77, 1
      %p283 = scmp.ne.s32.totalorder %s278, %s280
      %p284 = scmp.eq.s32.totalorder %s77, 0
      %p285 = por %p283, %p284
      %p286 = scmp.ne.s32.totalorder %s278, %s280
      %p287 = scmp.eq.s32.totalorder %s82, 1
      %p288 = por %p286, %p287
      %p289 = scmp.ne.s32.totalorder %s280, %s281
      %p290 = scmp.eq.s32.totalorder %s82, 0
      %p291 = por %p289, %p290
      %p292 = scmp.ne.s32.totalorder %s280, %s281
      %p293 = scmp.eq.s32.totalorder %s83, 1
      %p294 = por %p292, %p293
      %p296 = scmp.ne.s32.totalorder %s281, %s295
      %p297 = scmp.eq.s32.totalorder %s83, 0
      %p298 = por %p296, %p297
      %s300 = sadd.s32 %s299, 1
      %p303 = scmp.eq.s32.totalorder %s77, 1
      %p304 = scmp.ne.s32.totalorder %s299, %s301
      %p305 = scmp.eq.s32.totalorder %s77, 0
      %p306 = por %p304, %p305
      %p307 = scmp.ne.s32.totalorder %s299, %s301
      %p308 = scmp.eq.s32.totalorder %s82, 1
      %p309 = por %p307, %p308
      %p310 = scmp.ne.s32.totalorder %s301, %s302
      %p311 = scmp.eq.s32.totalorder %s82, 0
      %p312 = por %p310, %p311
      %p313 = scmp.ne.s32.totalorder %s301, %s302
      %p314 = scmp.eq.s32.totalorder %s83, 1
      %p315 = por %p313, %p314
      %p317 = scmp.ne.s32.totalorder %s302, %s316
      %p318 = scmp.eq.s32.totalorder %s83, 0
      %p319 = por %p317, %p318
      %s321 = sadd.s32 %s320, 1
      %p324 = scmp.eq.s32.totalorder %s77, 1
      %p325 = scmp.ne.s32.totalorder %s320, %s322
      %p326 = scmp.eq.s32.totalorder %s77, 0
      %p327 = por %p325, %p326
      %p328 = scmp.ne.s32.totalorder %s320, %s322
      %p329 = scmp.eq.s32.totalorder %s82, 1
      %p330 = por %p328, %p329
      %p331 = scmp.ne.s32.totalorder %s322, %s323
      %p332 = scmp.eq.s32.totalorder %s82, 0
      %p333 = por %p331, %p332
      %p334 = scmp.ne.s32.totalorder %s322, %s323
      %p335 = scmp.eq.s32.totalorder %s83, 1
      %p336 = por %p334, %p335
      %p338 = scmp.ne.s32.totalorder %s323, %s337
      %p339 = scmp.eq.s32.totalorder %s83, 0
      %p340 = por %p338, %p339
      %s342 = sadd.s32 %s341, 1
      %p345 = scmp.eq.s32.totalorder %s77, 1
      %p346 = scmp.ne.s32.totalorder %s341, %s343
      %p347 = scmp.eq.s32.totalorder %s77, 0
      %p348 = por %p346, %p347
      %p349 = scmp.ne.s32.totalorder %s341, %s343
      %p350 = scmp.eq.s32.totalorder %s82, 1
      %p351 = por %p349, %p350
      %p352 = scmp.ne.s32.totalorder %s343, %s344
      %p353 = scmp.eq.s32.totalorder %s82, 0
      %p354 = por %p352, %p353
      %p355 = scmp.ne.s32.totalorder %s343, %s344
      %p356 = scmp.eq.s32.totalorder %s83, 1
      %p357 = por %p355, %p356
      %p359 = scmp.ne.s32.totalorder %s344, %s358
      %p360 = scmp.eq.s32.totalorder %s83, 0
      %p361 = por %p359, %p360
      %s363 = sadd.s32 %s362, 1
      %p366 = scmp.eq.s32.totalorder %s77, 1
      %p367 = scmp.ne.s32.totalorder %s362, %s364
      %p368 = scmp.eq.s32.totalorder %s77, 0
      %p369 = por %p367, %p368
      %p370 = scmp.ne.s32.totalorder %s362, %s364
      %p371 = scmp.eq.s32.totalorder %s82, 1
      %p372 = por %p370, %p371
      %p373 = scmp.ne.s32.totalorder %s364, %s365
      %p374 = scmp.eq.s32.totalorder %s82, 0
      %p375 = por %p373, %p374
      %p376 = scmp.ne.s32.totalorder %s364, %s365
      %p377 = scmp.eq.s32.totalorder %s83, 1
      %p378 = por %p376, %p377
      %p380 = scmp.ne.s32.totalorder %s365, %s379
      %p381 = scmp.eq.s32.totalorder %s83, 0
      %p382 = por %p380, %p381
      %s384 = sadd.s32 %s383, 1
      %p387 = scmp.eq.s32.totalorder %s77, 1
      %p388 = scmp.ne.s32.totalorder %s383, %s385
      %p389 = scmp.eq.s32.totalorder %s77, 0
      %p390 = por %p388, %p389
      %p391 = scmp.ne.s32.totalorder %s383, %s385
      %p392 = scmp.eq.s32.totalorder %s82, 1
      %p393 = por %p391, %p392
      %p394 = scmp.ne.s32.totalorder %s385, %s386
      %p395 = scmp.eq.s32.totalorder %s82, 0
      %p396 = por %p394, %p395
      %p397 = scmp.ne.s32.totalorder %s385, %s386
      %p398 = scmp.eq.s32.totalorder %s83, 1
      %p399 = por %p397, %p398
      %p401 = scmp.ne.s32.totalorder %s386, %s400
      %p402 = scmp.eq.s32.totalorder %s83, 0
      %p403 = por %p401, %p402
      %s405 = sadd.s32 %s404, 1
      %p408 = scmp.eq.s32.totalorder %s77, 1
      %p409 = scmp.ne.s32.totalorder %s404, %s406
      %p410 = scmp.eq.s32.totalorder %s77, 0
      %p411 = por %p409, %p410
      %p412 = scmp.ne.s32.totalorder %s404, %s406
      %p413 = scmp.eq.s32.totalorder %s82, 1
      %p414 = por %p412, %p413
      %p415 = scmp.ne.s32.totalorder %s406, %s407
      %p416 = scmp.eq.s32.totalorder %s82, 0
      %p417 = por %p415, %p416
      %p418 = scmp.ne.s32.totalorder %s406, %s407
      %p419 = scmp.eq.s32.totalorder %s83, 1
      %p420 = por %p418, %p419
      %p422 = scmp.ne.s32.totalorder %s407, %s421
      %p423 = scmp.eq.s32.totalorder %s83, 0
      %p424 = por %p422, %p423
      %s426 = sadd.s32 %s425, 1
      %p429 = scmp.eq.s32.totalorder %s77, 1
      %p430 = scmp.ne.s32.totalorder %s425, %s427
      %p431 = scmp.eq.s32.totalorder %s77, 0
      %p432 = por %p430, %p431
      %p433 = scmp.ne.s32.totalorder %s425, %s427
      %p434 = scmp.eq.s32.totalorder %s82, 1
      %p435 = por %p433, %p434
      %p436 = scmp.ne.s32.totalorder %s427, %s428
      %p437 = scmp.eq.s32.totalorder %s82, 0
      %p438 = por %p436, %p437
      %p439 = scmp.ne.s32.totalorder %s427, %s428
      %p440 = scmp.eq.s32.totalorder %s83, 1
      %p441 = por %p439, %p440
      %p443 = scmp.ne.s32.totalorder %s428, %s442
      %p444 = scmp.eq.s32.totalorder %s83, 0
      %p445 = por %p443, %p444
      %s447 = sadd.s32 %s446, 1
      %p450 = scmp.eq.s32.totalorder %s77, 1
      %p451 = scmp.ne.s32.totalorder %s446, %s448
      %p452 = scmp.eq.s32.totalorder %s77, 0
      %p453 = por %p451, %p452
      %p454 = scmp.ne.s32.totalorder %s446, %s448
      %p455 = scmp.eq.s32.totalorder %s82, 1
      %p456 = por %p454, %p455
      %p457 = scmp.ne.s32.totalorder %s448, %s449
      %p458 = scmp.eq.s32.totalorder %s82, 0
      %p459 = por %p457, %p458
      %p460 = scmp.ne.s32.totalorder %s448, %s449
      %p461 = scmp.eq.s32.totalorder %s83, 1
      %p462 = por %p460, %p461
      %p464 = scmp.ne.s32.totalorder %s449, %s463
      %p465 = scmp.eq.s32.totalorder %s83, 0
      %p466 = por %p464, %p465
      %s468 = sadd.s32 %s467, 1
      %p471 = scmp.eq.s32.totalorder %s77, 1
      %p472 = scmp.ne.s32.totalorder %s467, %s469
      %p473 = scmp.eq.s32.totalorder %s77, 0
      %p474 = por %p472, %p473
      %p475 = scmp.ne.s32.totalorder %s467, %s469
      %p476 = scmp.eq.s32.totalorder %s82, 1
      %p477 = por %p475, %p476
      %p478 = scmp.ne.s32.totalorder %s469, %s470
      %p479 = scmp.eq.s32.totalorder %s82, 0
      %p480 = por %p478, %p479
      %p481 = scmp.ne.s32.totalorder %s469, %s470
      %p482 = scmp.eq.s32.totalorder %s83, 1
      %p483 = por %p481, %p482
      %p485 = scmp.ne.s32.totalorder %s470, %s484
      %p486 = scmp.eq.s32.totalorder %s83, 0
      %p487 = por %p485, %p486
      %s489 = sadd.s32 %s488, 1
      %p492 = scmp.eq.s32.totalorder %s77, 1
      %p493 = scmp.ne.s32.totalorder %s488, %s490
      %p494 = scmp.eq.s32.totalorder %s77, 0
      %p495 = por %p493, %p494
      %p496 = scmp.ne.s32.totalorder %s488, %s490
      %p497 = scmp.eq.s32.totalorder %s82, 1
      %p498 = por %p496, %p497
      %p499 = scmp.ne.s32.totalorder %s490, %s491
      %p500 = scmp.eq.s32.totalorder %s82, 0
      %p501 = por %p499, %p500
      %p502 = scmp.ne.s32.totalorder %s490, %s491
      %p503 = scmp.eq.s32.totalorder %s83, 1
      %p504 = por %p502, %p503
      %p506 = scmp.ne.s32.totalorder %s491, %s505
      %p507 = scmp.eq.s32.totalorder %s83, 0
      %p508 = por %p506, %p507
      %s510 = sadd.s32 %s509, 1
      %p513 = scmp.eq.s32.totalorder %s77, 1
      %p514 = scmp.ne.s32.totalorder %s509, %s511
      %p515 = scmp.eq.s32.totalorder %s77, 0
      %p516 = por %p514, %p515
      %p517 = scmp.ne.s32.totalorder %s509, %s511
      %p518 = scmp.eq.s32.totalorder %s82, 1
      %p519 = por %p517, %p518
      %p520 = scmp.ne.s32.totalorder %s511, %s512
      %p521 = scmp.eq.s32.totalorder %s82, 0
      %p522 = por %p520, %p521
      %p523 = scmp.ne.s32.totalorder %s511, %s512
      %p524 = scmp.eq.s32.totalorder %s83, 1
      %p525 = por %p523, %p524
      %p527 = scmp.ne.s32.totalorder %s512, %s526
      %p528 = scmp.eq.s32.totalorder %s83, 0
      %p529 = por %p527, %p528
      %s531 = sadd.s32 %s530, 1
      %p534 = scmp.eq.s32.totalorder %s77, 1
      %p535 = scmp.ne.s32.totalorder %s530, %s532
      %p536 = scmp.eq.s32.totalorder %s77, 0
      %p537 = por %p535, %p536
      %p538 = scmp.ne.s32.totalorder %s530, %s532
      %p539 = scmp.eq.s32.totalorder %s82, 1
      %p540 = por %p538, %p539
      %p541 = scmp.ne.s32.totalorder %s532, %s533
      %p542 = scmp.eq.s32.totalorder %s82, 0
      %p543 = por %p541, %p542
      %p544 = scmp.ne.s32.totalorder %s532, %s533
      %p545 = scmp.eq.s32.totalorder %s83, 1
      %p546 = por %p544, %p545
      %p548 = scmp.ne.s32.totalorder %s533, %s547
      %p549 = scmp.eq.s32.totalorder %s83, 0
      %p550 = por %p548, %p549
      %s552 = sadd.s32 %s551, 1
      %p555 = scmp.eq.s32.totalorder %s77, 1
      %p556 = scmp.ne.s32.totalorder %s551, %s553
      %p557 = scmp.eq.s32.totalorder %s77, 0
      %p558 = por %p556, %p557
      %p559 = scmp.ne.s32.totalorder %s551, %s553
      %p560 = scmp.eq.s32.totalorder %s82, 1
      %p561 = por %p559, %p560
      %p562 = scmp.ne.s32.totalorder %s553, %s554
      %p563 = scmp.eq.s32.totalorder %s82, 0
      %p564 = por %p562, %p563
      %p565 = scmp.ne.s32.totalorder %s553, %s554
      %p566 = scmp.eq.s32.totalorder %s83, 1
      %p567 = por %p565, %p566
      %p569 = scmp.ne.s32.totalorder %s554, %s568
      %p570 = scmp.eq.s32.totalorder %s83, 0
      %p571 = por %p569, %p570
      %s573 = sadd.s32 %s572, 1
      %p576 = scmp.eq.s32.totalorder %s77, 1
      %p577 = scmp.ne.s32.totalorder %s572, %s574
      %p578 = scmp.eq.s32.totalorder %s77, 0
      %p579 = por %p577, %p578
      %p580 = scmp.ne.s32.totalorder %s572, %s574
      %p581 = scmp.eq.s32.totalorder %s82, 1
      %p582 = por %p580, %p581
      %p583 = scmp.ne.s32.totalorder %s574, %s575
      %p584 = scmp.eq.s32.totalorder %s82, 0
      %p585 = por %p583, %p584
      %p586 = scmp.ne.s32.totalorder %s574, %s575
      %p587 = scmp.eq.s32.totalorder %s83, 1
      %p588 = por %p586, %p587
      %p590 = scmp.ne.s32.totalorder %s575, %s589
      %p591 = scmp.eq.s32.totalorder %s83, 0
      %p592 = por %p590, %p591
      %s594 = sadd.s32 %s593, 1
      %p597 = scmp.eq.s32.totalorder %s77, 1
      %p598 = scmp.ne.s32.totalorder %s593, %s595
      %p599 = scmp.eq.s32.totalorder %s77, 0
      %p600 = por %p598, %p599
      %p601 = scmp.ne.s32.totalorder %s593, %s595
      %p602 = scmp.eq.s32.totalorder %s82, 1
      %p603 = por %p601, %p602
      %p604 = scmp.ne.s32.totalorder %s595, %s596
      %p605 = scmp.eq.s32.totalorder %s82, 0
      %p606 = por %p604, %p605
      %p607 = scmp.ne.s32.totalorder %s595, %s596
      %p608 = scmp.eq.s32.totalorder %s83, 1
      %p609 = por %p607, %p608
      %p611 = scmp.ne.s32.totalorder %s596, %s610
      %p612 = scmp.eq.s32.totalorder %s83, 0
      %p613 = por %p611, %p612
      %s615 = sadd.s32 %s614, 1
      %p618 = scmp.eq.s32.totalorder %s77, 1
      %p619 = scmp.ne.s32.totalorder %s614, %s616
      %p620 = scmp.eq.s32.totalorder %s77, 0
      %p621 = por %p619, %p620
      %p622 = scmp.ne.s32.totalorder %s614, %s616
      %p623 = scmp.eq.s32.totalorder %s82, 1
      %p624 = por %p622, %p623
      %p625 = scmp.ne.s32.totalorder %s616, %s617
      %p626 = scmp.eq.s32.totalorder %s82, 0
      %p627 = por %p625, %p626
      %p628 = scmp.ne.s32.totalorder %s616, %s617
      %p629 = scmp.eq.s32.totalorder %s83, 1
      %p630 = por %p628, %p629
      %p632 = scmp.ne.s32.totalorder %s617, %s631
      %p633 = scmp.eq.s32.totalorder %s83, 0
      %p634 = por %p632, %p633
      %s636 = sadd.s32 %s635, 1
      %p639 = scmp.eq.s32.totalorder %s77, 1
      %p640 = scmp.ne.s32.totalorder %s635, %s637
      %p641 = scmp.eq.s32.totalorder %s77, 0
      %p642 = por %p640, %p641
      %p643 = scmp.ne.s32.totalorder %s635, %s637
      %p644 = scmp.eq.s32.totalorder %s82, 1
      %p645 = por %p643, %p644
      %p646 = scmp.ne.s32.totalorder %s637, %s638
      %p647 = scmp.eq.s32.totalorder %s82, 0
      %p648 = por %p646, %p647
      %p649 = scmp.ne.s32.totalorder %s637, %s638
      %p650 = scmp.eq.s32.totalorder %s83, 1
      %p651 = por %p649, %p650
      %p653 = scmp.ne.s32.totalorder %s638, %s652
      %p654 = scmp.eq.s32.totalorder %s83, 0
      %p655 = por %p653, %p654
      %s657 = sadd.s32 %s656, 1
      %p660 = scmp.eq.s32.totalorder %s77, 1
      %p661 = scmp.ne.s32.totalorder %s656, %s658
      %p662 = scmp.eq.s32.totalorder %s77, 0
      %p663 = por %p661, %p662
      %p664 = scmp.ne.s32.totalorder %s656, %s658
      %p665 = scmp.eq.s32.totalorder %s82, 1
      %p666 = por %p664, %p665
      %p667 = scmp.ne.s32.totalorder %s658, %s659
      %p668 = scmp.eq.s32.totalorder %s82, 0
      %p669 = por %p667, %p668
      %p670 = scmp.ne.s32.totalorder %s658, %s659
      %p671 = scmp.eq.s32.totalorder %s83, 1
      %p672 = por %p670, %p671
      %p674 = scmp.ne.s32.totalorder %s659, %s673
      %p675 = scmp.eq.s32.totalorder %s83, 0
      %p676 = por %p674, %p675
      %s678 = sadd.s32 %s677, 1
      %p681 = scmp.eq.s32.totalorder %s77, 1
      %p682 = scmp.ne.s32.totalorder %s677, %s679
      %p683 = scmp.eq.s32.totalorder %s77, 0
      %p684 = por %p682, %p683
      %p685 = scmp.ne.s32.totalorder %s677, %s679
      %p686 = scmp.eq.s32.totalorder %s82, 1
      %p687 = por %p685, %p686
      %p688 = scmp.ne.s32.totalorder %s679, %s680
      %p689 = scmp.eq.s32.totalorder %s82, 0
      %p690 = por %p688, %p689
      %p691 = scmp.ne.s32.totalorder %s679, %s680
      %p692 = scmp.eq.s32.totalorder %s83, 1
      %p693 = por %p691, %p692
      %p695 = scmp.ne.s32.totalorder %s680, %s694
      %p696 = scmp.eq.s32.totalorder %s83, 0
      %p697 = por %p695, %p696
      %s699 = sadd.s32 %s698, 1
      %p702 = scmp.eq.s32.totalorder %s77, 1
      %p703 = scmp.ne.s32.totalorder %s698, %s700
      %p704 = scmp.eq.s32.totalorder %s77, 0
      %p705 = por %p703, %p704
      %p706 = scmp.ne.s32.totalorder %s698, %s700
      %p707 = scmp.eq.s32.totalorder %s82, 1
      %p708 = por %p706, %p707
      %p709 = scmp.ne.s32.totalorder %s700, %s701
      %p710 = scmp.eq.s32.totalorder %s82, 0
      %p711 = por %p709, %p710
      %p712 = scmp.ne.s32.totalorder %s700, %s701
      %p713 = scmp.eq.s32.totalorder %s83, 1
      %p714 = por %p712, %p713
      %p716 = scmp.ne.s32.totalorder %s701, %s715
      %p717 = scmp.eq.s32.totalorder %s83, 0
      %p718 = por %p716, %p717
      %s720 = sadd.s32 %s719, 1
      %p723 = scmp.eq.s32.totalorder %s77, 1
      %p724 = scmp.ne.s32.totalorder %s719, %s721
      %p725 = scmp.eq.s32.totalorder %s77, 0
      %p726 = por %p724, %p725
      %p727 = scmp.ne.s32.totalorder %s719, %s721
      %p728 = scmp.eq.s32.totalorder %s82, 1
      %p729 = por %p727, %p728
      %p730 = scmp.ne.s32.totalorder %s721, %s722
      %p731 = scmp.eq.s32.totalorder %s82, 0
      %p732 = por %p730, %p731
      %p733 = scmp.ne.s32.totalorder %s721, %s722
      %p734 = scmp.eq.s32.totalorder %s83, 1
      %p735 = por %p733, %p734
      %p737 = scmp.ne.s32.totalorder %s722, %s736
      %p738 = scmp.eq.s32.totalorder %s83, 0
      %p739 = por %p737, %p738
      %s741 = sadd.s32 %s740, 1
      %p744 = scmp.eq.s32.totalorder %s77, 1
      %p745 = scmp.ne.s32.totalorder %s740, %s742
      %p746 = scmp.eq.s32.totalorder %s77, 0
      %p747 = por %p745, %p746
      %p748 = scmp.ne.s32.totalorder %s740, %s742
      %p749 = scmp.eq.s32.totalorder %s82, 1
      %p750 = por %p748, %p749
      %p751 = scmp.ne.s32.totalorder %s742, %s743
      %p752 = scmp.eq.s32.totalorder %s82, 0
      %p753 = por %p751, %p752
      %p754 = scmp.ne.s32.totalorder %s742, %s743
      %p755 = scmp.eq.s32.totalorder %s83, 1
      %p756 = por %p754, %p755
      %p758 = scmp.ne.s32.totalorder %s743, %s757
      %p759 = scmp.eq.s32.totalorder %s83, 0
      %p760 = por %p758, %p759
      %s762 = sadd.s32 %s761, 1
      %p765 = scmp.eq.s32.totalorder %s77, 1
      %p766 = scmp.ne.s32.totalorder %s761, %s763
      %p767 = scmp.eq.s32.totalorder %s77, 0
      %p768 = por %p766, %p767
      %p769 = scmp.ne.s32.totalorder %s761, %s763
      %p770 = scmp.eq.s32.totalorder %s82, 1
      %p771 = por %p769, %p770
      %p772 = scmp.ne.s32.totalorder %s763, %s764
      %p773 = scmp.eq.s32.totalorder %s82, 0
      %p774 = por %p772, %p773
      %p775 = scmp.ne.s32.totalorder %s763, %s764
      %p776 = scmp.eq.s32.totalorder %s83, 1
      %p777 = por %p775, %p776
      %p779 = scmp.ne.s32.totalorder %s764, %s778
      %p780 = scmp.eq.s32.totalorder %s83, 0
      %p781 = por %p779, %p780
      %s783 = sadd.s32 %s782, 1
      %p786 = scmp.eq.s32.totalorder %s77, 1
      %p787 = scmp.ne.s32.totalorder %s782, %s784
      %p788 = scmp.eq.s32.totalorder %s77, 0
      %p789 = por %p787, %p788
      %p790 = scmp.ne.s32.totalorder %s782, %s784
      %p791 = scmp.eq.s32.totalorder %s82, 1
      %p792 = por %p790, %p791
      %p793 = scmp.ne.s32.totalorder %s784, %s785
      %p794 = scmp.eq.s32.totalorder %s82, 0
      %p795 = por %p793, %p794
      %p796 = scmp.ne.s32.totalorder %s784, %s785
      %p797 = scmp.eq.s32.totalorder %s83, 1
      %p798 = por %p796, %p797
      %p800 = scmp.ne.s32.totalorder %s785, %s799
      %p801 = scmp.eq.s32.totalorder %s83, 0
      %p802 = por %p800, %p801
      %s803 = ssub.s32 %s77, %s84
      %p804 = scmp.eq.s32.totalorder %s803, 0
      %s806 = sadd.s32 %s805, 1
      %s807 = scalar_select %p804, %s805, %s806
      %p810 = pneg %p804
      %p811 = scmp.eq.s32.totalorder %s77, 1
      %p812 = por %p810, %p811
      %p813 = scmp.ne.s32.totalorder %s805, %s808
      %p814 = scmp.eq.s32.totalorder %s77, 0
      %p815 = por %p813, %p814
      %p816 = scmp.ne.s32.totalorder %s805, %s808
      %p817 = scmp.eq.s32.totalorder %s82, 1
      %p818 = por %p816, %p817
      %p819 = scmp.ne.s32.totalorder %s808, %s809
      %p820 = scmp.eq.s32.totalorder %s82, 0
      %p821 = por %p819, %p820
      %p822 = scmp.ne.s32.totalorder %s808, %s809
      %p823 = scmp.eq.s32.totalorder %s83, 1
      %p824 = por %p822, %p823
      %p826 = scmp.ne.s32.totalorder %s809, %s825
      %p827 = scmp.eq.s32.totalorder %s83, 0
      %p828 = por %p826, %p827
      %p829 = scmp.le.s32.totalorder 1, %s77
      %p830 = scmp.lt.s32.totalorder %s77, 3
      %p831 = pnand %p829, %p830
      %p832 = pneg %p831
      // Predicated region
      $region9: #{decoder_layer_forward.1} parent=5 // pred_check
        _
      $region10: #{decoder_layer_forward.1} parent=5 // pred_check_branch
        %834 = sbr.rel (%p831) target = $region12
      $region11: #{decoder_layer_forward.1} parent=5 // pred_region
        %s835 = ssub.s32 %s77, 1
        // Predicated region
        $region13: #{decoder_layer_forward.1} parent=11 // pred_check
          %p836 = pneg %p228
        $region14: #{decoder_layer_forward.1} parent=11 // pred_check_branch
          %838 = sbr.rel (%p836) target = $region16
        $region15: #{decoder_layer_forward.1} parent=11 // pred_region
          _
        $region16: #{decoder_layer_forward.1} parent=11 // pred_fallthru
          _
        // Predicated region
        $region17: #{decoder_layer_forward.1} parent=11 // pred_check
          %p839 = pneg %p249
        $region18: #{decoder_layer_forward.1} parent=11 // pred_check_branch
          %841 = sbr.rel (%p839) target = $region20
        $region19: #{decoder_layer_forward.1} parent=11 // pred_region
          %843 = vsyncadd [#allocation3], 0
          %s845 = sshll.u32 %s13, 4
          %s846 = int_to_ptr.hbm [resolvable:$true] %s845
          %s847 = sshll.u32 [#allocation2], 4
          %s848 = int_to_ptr.vmem [resolvable:$true] %s847
          %850 = dma.hbm_to_vmem [thread:$0]  %s846, 16, %s848, [#allocation3]
        $region20: #{decoder_layer_forward.1} parent=11 // pred_fallthru
          _
        // Predicated region
        $region21: #{decoder_layer_forward.1} parent=11 // pred_check
          %p851 = pneg %p270
        $region22: #{decoder_layer_forward.1} parent=11 // pred_check_branch
          %853 = sbr.rel (%p851) target = $region24
        $region23: #{decoder_layer_forward.1} parent=11 // pred_region
          _
        $region24: #{decoder_layer_forward.1} parent=11 // pred_fallthru
          _
        // Predicated region
        $region25: #{decoder_layer_forward.1} parent=11 // pred_check
          %p854 = pneg %p291
        $region26: #{decoder_layer_forward.1} parent=11 // pred_check_branch
          %856 = sbr.rel (%p854) target = $region28
        $region27: #{decoder_layer_forward.1} parent=11 // pred_region
          _
        $region28: #{decoder_layer_forward.1} parent=11 // pred_fallthru
          _
        // Predicated region
        $region29: #{decoder_layer_forward.1} parent=11 // pred_check
          %p857 = pneg %p312
        $region30: #{decoder_layer_forward.1} parent=11 // pred_check_branch
          %859 = sbr.rel (%p857) target = $region32
        $region31: #{decoder_layer_forward.1} parent=11 // pred_region
          _
        $region32: #{decoder_layer_forward.1} parent=11 // pred_fallthru
          _
        // Predicated region
        $region33: #{decoder_layer_forward.1} parent=11 // pred_check
          %p860 = pneg %p333
        $region34: #{decoder_layer_forward.1} parent=11 // pred_check_branch
          %862 = sbr.rel (%p860) target = $region36
        $region35: #{decoder_layer_forward.1} parent=11 // pred_region
          _
        $region36: #{decoder_layer_forward.1} parent=11 // pred_fallthru
          _
        // Predicated region
        $region37: #{decoder_layer_forward.1} parent=11 // pred_check
          %p863 = pneg %p354
        $region38: #{decoder_layer_forward.1} parent=11 // pred_check_branch
          %865 = sbr.rel (%p863) target = $region40
        $region39: #{decoder_layer_forward.1} parent=11 // pred_region
          _
        $region40: #{decoder_layer_forward.1} parent=11 // pred_fallthru
          _
        // Predicated region
        $region41: #{decoder_layer_forward.1} parent=11 // pred_check
          %p866 = pneg %p375
        $region42: #{decoder_layer_forward.1} parent=11 // pred_check_branch
          %868 = sbr.rel (%p866) target = $region44
        $region43: #{decoder_layer_forward.1} parent=11 // pred_region
          _
        $region44: #{decoder_layer_forward.1} parent=11 // pred_fallthru
          _
        // Predicated region
        $region45: #{decoder_layer_forward.1} parent=11 // pred_check
          %p869 = pneg %p396
        $region46: #{decoder_layer_forward.1} parent=11 // pred_check_branch
          %871 = sbr.rel (%p869) target = $region48
        $region47: #{decoder_layer_forward.1} parent=11 // pred_region
          _
        $region48: #{decoder_layer_forward.1} parent=11 // pred_fallthru
          _
        // Predicated region
        $region49: #{decoder_layer_forward.1} parent=11 // pred_check
          %p872 = pneg %p417
        $region50: #{decoder_layer_forward.1} parent=11 // pred_check_branch
          %874 = sbr.rel (%p872) target = $region52
        $region51: #{decoder_layer_forward.1} parent=11 // pred_region
          _
        $region52: #{decoder_layer_forward.1} parent=11 // pred_fallthru
          _
        // Predicated region
        $region53: #{decoder_layer_forward.1} parent=11 // pred_check
          %p875 = pneg %p438
        $region54: #{decoder_layer_forward.1} parent=11 // pred_check_branch
          %877 = sbr.rel (%p875) target = $region56
        $region55: #{decoder_layer_forward.1} parent=11 // pred_region
          _
        $region56: #{decoder_layer_forward.1} parent=11 // pred_fallthru
          _
        // Predicated region
        $region57: #{decoder_layer_forward.1} parent=11 // pred_check
          %p878 = pneg %p459
        $region58: #{decoder_layer_forward.1} parent=11 // pred_check_branch
          %880 = sbr.rel (%p878) target = $region60
        $region59: #{decoder_layer_forward.1} parent=11 // pred_region
          _
        $region60: #{decoder_layer_forward.1} parent=11 // pred_fallthru
          _
        // Predicated region
        $region61: #{decoder_layer_forward.1} parent=11 // pred_check
          %p881 = pneg %p480
        $region62: #{decoder_layer_forward.1} parent=11 // pred_check_branch
          %883 = sbr.rel (%p881) target = $region64
        $region63: #{decoder_layer_forward.1} parent=11 // pred_region
          _
        $region64: #{decoder_layer_forward.1} parent=11 // pred_fallthru
          _
        // Predicated region
        $region65: #{decoder_layer_forward.1} parent=11 // pred_check
          %p884 = pneg %p501
        $region66: #{decoder_layer_forward.1} parent=11 // pred_check_branch
          %886 = sbr.rel (%p884) target = $region68
        $region67: #{decoder_layer_forward.1} parent=11 // pred_region
          _
        $region68: #{decoder_layer_forward.1} parent=11 // pred_fallthru
          _
        // Predicated region
        $region69: #{decoder_layer_forward.1} parent=11 // pred_check
          %p887 = pneg %p522
        $region70: #{decoder_layer_forward.1} parent=11 // pred_check_branch
          %889 = sbr.rel (%p887) target = $region72
        $region71: #{decoder_layer_forward.1} parent=11 // pred_region
          _
        $region72: #{decoder_layer_forward.1} parent=11 // pred_fallthru
          _
        // Predicated region
        $region73: #{decoder_layer_forward.1} parent=11 // pred_check
          %p890 = pneg %p543
        $region74: #{decoder_layer_forward.1} parent=11 // pred_check_branch
          %892 = sbr.rel (%p890) target = $region76
        $region75: #{decoder_layer_forward.1} parent=11 // pred_region
          _
        $region76: #{decoder_layer_forward.1} parent=11 // pred_fallthru
          _
        // Predicated region
        $region77: #{decoder_layer_forward.1} parent=11 // pred_check
          %p893 = pneg %p564
        $region78: #{decoder_layer_forward.1} parent=11 // pred_check_branch
          %895 = sbr.rel (%p893) target = $region80
        $region79: #{decoder_layer_forward.1} parent=11 // pred_region
          _
        $region80: #{decoder_layer_forward.1} parent=11 // pred_fallthru
          _
        // Predicated region
        $region81: #{decoder_layer_forward.1} parent=11 // pred_check
          %p896 = pneg %p585
        $region82: #{decoder_layer_forward.1} parent=11 // pred_check_branch
          %898 = sbr.rel (%p896) target = $region84
        $region83: #{decoder_layer_forward.1} parent=11 // pred_region
          _
        $region84: #{decoder_layer_forward.1} parent=11 // pred_fallthru
          _
        // Predicated region
        $region85: #{decoder_layer_forward.1} parent=11 // pred_check
          %p899 = pneg %p606
        $region86: #{decoder_layer_forward.1} parent=11 // pred_check_branch
          %901 = sbr.rel (%p899) target = $region88
        $region87: #{decoder_layer_forward.1} parent=11 // pred_region
          _
        $region88: #{decoder_layer_forward.1} parent=11 // pred_fallthru
          _
        // Predicated region
        $region89: #{decoder_layer_forward.1} parent=11 // pred_check
          %p902 = pneg %p627
        $region90: #{decoder_layer_forward.1} parent=11 // pred_check_branch
          %904 = sbr.rel (%p902) target = $region92
        $region91: #{decoder_layer_forward.1} parent=11 // pred_region
          _
        $region92: #{decoder_layer_forward.1} parent=11 // pred_fallthru
          _
        // Predicated region
        $region93: #{decoder_layer_forward.1} parent=11 // pred_check
          %p905 = pneg %p648
        $region94: #{decoder_layer_forward.1} parent=11 // pred_check_branch
          %907 = sbr.rel (%p905) target = $region96
        $region95: #{decoder_layer_forward.1} parent=11 // pred_region
          %909 = vsyncadd [#allocation5], 0
          %s911 = sshll.u32 %s51, 4
          %s912 = int_to_ptr.hbm [resolvable:$true] %s911
          %s913 = sshll.u32 [#allocation4], 4
          %s914 = int_to_ptr.vmem [resolvable:$true] %s913
          %916 = dma.hbm_to_vmem [thread:$0]  %s912, 16, %s914, [#allocation5]
        $region96: #{decoder_layer_forward.1} parent=11 // pred_fallthru
          _
        // Predicated region
        $region97: #{decoder_layer_forward.1} parent=11 // pred_check
          %p917 = pneg %p669
        $region98: #{decoder_layer_forward.1} parent=11 // pred_check_branch
          %919 = sbr.rel (%p917) target = $region100
        $region99: #{decoder_layer_forward.1} parent=11 // pred_region
          %921 = vsyncadd [#allocation5], 0
          %s923 = sshll.u32 %s53, 4
          %s924 = int_to_ptr.hbm [resolvable:$true] %s923
          %s925 = sshll.u32 [#allocation6], 4
          %s926 = int_to_ptr.vmem [resolvable:$true] %s925
          %928 = dma.hbm_to_vmem [thread:$0]  %s924, 16, %s926, [#allocation5]
        $region100: #{decoder_layer_forward.1} parent=11 // pred_fallthru
          _
        // Predicated region
        $region101: #{decoder_layer_forward.1} parent=11 // pred_check
          %p929 = pneg %p690
        $region102: #{decoder_layer_forward.1} parent=11 // pred_check_branch
          %931 = sbr.rel (%p929) target = $region104
        $region103: #{decoder_layer_forward.1} parent=11 // pred_region
          _
        $region104: #{decoder_layer_forward.1} parent=11 // pred_fallthru
          _
        // Predicated region
        $region105: #{decoder_layer_forward.1} parent=11 // pred_check
          %p932 = pneg %p711
        $region106: #{decoder_layer_forward.1} parent=11 // pred_check_branch
          %934 = sbr.rel (%p932) target = $region108
        $region107: #{decoder_layer_forward.1} parent=11 // pred_region
          %936 = vsyncadd [#allocation8], 0
          %s938 = sshll.u32 %s57, 4
          %s939 = int_to_ptr.hbm [resolvable:$true] %s938
          %s940 = sshll.u32 [#allocation7], 4
          %s941 = int_to_ptr.vmem [resolvable:$true] %s940
          %943 = dma.hbm_to_vmem [thread:$0]  %s939, 16, %s941, [#allocation8]
        $region108: #{decoder_layer_forward.1} parent=11 // pred_fallthru
          _
        // Predicated region
        $region109: #{decoder_layer_forward.1} parent=11 // pred_check
          %p944 = pneg %p732
        $region110: #{decoder_layer_forward.1} parent=11 // pred_check_branch
          %946 = sbr.rel (%p944) target = $region112
        $region111: #{decoder_layer_forward.1} parent=11 // pred_region
          _
        $region112: #{decoder_layer_forward.1} parent=11 // pred_fallthru
          _
        // Predicated region
        $region113: #{decoder_layer_forward.1} parent=11 // pred_check
          %p947 = pneg %p753
        $region114: #{decoder_layer_forward.1} parent=11 // pred_check_branch
          %949 = sbr.rel (%p947) target = $region116
        $region115: #{decoder_layer_forward.1} parent=11 // pred_region
          %951 = vsyncadd [#allocation8], 0
          %s953 = sshll.u32 %s61, 4
          %s954 = int_to_ptr.hbm [resolvable:$true] %s953
          %s955 = sshll.u32 [#allocation9], 4
          %s956 = int_to_ptr.vmem [resolvable:$true] %s955
          %958 = dma.hbm_to_vmem [thread:$0]  %s954, 16, %s956, [#allocation8]
        $region116: #{decoder_layer_forward.1} parent=11 // pred_fallthru
          _
        // Predicated region
        $region117: #{decoder_layer_forward.1} parent=11 // pred_check
          %p959 = pneg %p774
        $region118: #{decoder_layer_forward.1} parent=11 // pred_check_branch
          %961 = sbr.rel (%p959) target = $region120
        $region119: #{decoder_layer_forward.1} parent=11 // pred_region
          %963 = vsyncadd [#allocation11], 0
          %s965 = sshll.u32 %s63, 4
          %s966 = int_to_ptr.hbm [resolvable:$true] %s965
          %s967 = sshll.u32 [#allocation10], 4
          %s968 = int_to_ptr.vmem [resolvable:$true] %s967
          %970 = dma.hbm_to_vmem [thread:$0]  %s966, 16, %s968, [#allocation11]
        $region120: #{decoder_layer_forward.1} parent=11 // pred_fallthru
          _
        // Predicated region
        $region121: #{decoder_layer_forward.1} parent=11 // pred_check
          %p971 = pneg %p795
        $region122: #{decoder_layer_forward.1} parent=11 // pred_check_branch
          %973 = sbr.rel (%p971) target = $region124
        $region123: #{decoder_layer_forward.1} parent=11 // pred_region
          %975 = vsyncadd [#allocation11], 0
          %s977 = sshll.u32 %s65, 4
          %s978 = int_to_ptr.hbm [resolvable:$true] %s977
          %s979 = sshll.u32 [#allocation12], 4
          %s980 = int_to_ptr.vmem [resolvable:$true] %s979
          %982 = dma.hbm_to_vmem [thread:$0]  %s978, 16, %s980, [#allocation11]
        $region124: #{decoder_layer_forward.1} parent=11 // pred_fallthru
          _
      $region12: #{decoder_layer_forward.1} parent=5 // pred_fallthru
        _
      %p983 = scmp.lt.s32.totalorder %s77, 2
      // Predicated region
      $region125: #{decoder_layer_forward.1} parent=5 // pred_check
        %p984 = pneg %p983
      $region126: #{decoder_layer_forward.1} parent=5 // pred_check_branch
        %986 = sbr.rel (%p984) target = $region128
      $region127: #{decoder_layer_forward.1} parent=5 // pred_region
        // Predicated region
        $region129: #{decoder_layer_forward.1} parent=127 // pred_check
          %p987 = pneg %p97
        $region130: #{decoder_layer_forward.1} parent=127 // pred_check_branch
          %989 = sbr.rel (%p987) target = $region132
        $region131: #{decoder_layer_forward.1} parent=127 // pred_region
          %p990 = scmp.lt.s32.totalorder %s77, 1
          %s991 = scalar_select %p990, %s77, 1
          %s992 = smul.addr %s991, 8
          %s993 = scalar_lea.vmem %s1, %s992
        $region132: #{decoder_layer_forward.1} parent=127 // pred_fallthru
          _
        // Predicated region
        $region133: #{decoder_layer_forward.1} parent=127 // pred_check
          %p994 = pneg %p123
        $region134: #{decoder_layer_forward.1} parent=127 // pred_check_branch
          %996 = sbr.rel (%p994) target = $region136
        $region135: #{decoder_layer_forward.1} parent=127 // pred_region
          %p997 = scmp.lt.s32.totalorder %s77, 1
          %s998 = scalar_select %p997, %s77, 1
          %s999 = smul.addr %s998, 2
          %s1000 = smul.addr %s999, 8
          %s1001 = scalar_lea.vmem %s3, %s1000
        $region136: #{decoder_layer_forward.1} parent=127 // pred_fallthru
          _
        // Predicated region
        $region137: #{decoder_layer_forward.1} parent=127 // pred_check
          %p1002 = pneg %p149
        $region138: #{decoder_layer_forward.1} parent=127 // pred_check_branch
          %1004 = sbr.rel (%p1002) target = $region140
        $region139: #{decoder_layer_forward.1} parent=127 // pred_region
          %p1005 = scmp.lt.s32.totalorder %s77, 1
          %s1006 = scalar_select %p1005, %s77, 1
          %s1007 = smul.addr %s1006, 2
          %s1008 = smul.addr %s1007, 8
          %s1009 = scalar_lea.vmem %s5, %s1008
        $region140: #{decoder_layer_forward.1} parent=127 // pred_fallthru
          _
        // Predicated region
        $region141: #{decoder_layer_forward.1} parent=127 // pred_check
          %p1010 = pneg %p175
        $region142: #{decoder_layer_forward.1} parent=127 // pred_check_branch
          %1012 = sbr.rel (%p1010) target = $region144
        $region143: #{decoder_layer_forward.1} parent=127 // pred_region
          %p1013 = scmp.lt.s32.totalorder %s77, 1
          %s1014 = scalar_select %p1013, %s77, 1
          %s1015 = smul.addr %s1014, 8
          %s1016 = scalar_lea.vmem %s7, %s1015
        $region144: #{decoder_layer_forward.1} parent=127 // pred_fallthru
          _
        // Predicated region
        $region145: #{decoder_layer_forward.1} parent=127 // pred_check
          %p1017 = pneg %p201
        $region146: #{decoder_layer_forward.1} parent=127 // pred_check_branch
          %1019 = sbr.rel (%p1017) target = $region148
        $region147: #{decoder_layer_forward.1} parent=127 // pred_region
          %p1020 = scmp.lt.s32.totalorder %s77, 1
          %s1021 = scalar_select %p1020, %s77, 1
          %s1022 = smul.addr %s1021, 8
          %s1023 = scalar_lea.vmem %s9, %s1022
        $region148: #{decoder_layer_forward.1} parent=127 // pred_fallthru
          _
      $region128: #{decoder_layer_forward.1} parent=5 // pred_fallthru
        _
      %p1024 = scmp.le.s32.totalorder 1, %s77
      %p1025 = scmp.lt.s32.totalorder %s77, 3
      %p1026 = pnand %p1024, %p1025
      %p1027 = pneg %p1026
      // Predicated region
      $region149: #{decoder_layer_forward.1} parent=5 // pred_check
        _
      $region150: #{decoder_layer_forward.1} parent=5 // pred_check_branch
        %1029 = sbr.rel (%p1026) target = $region152
      $region151: #{decoder_layer_forward.1} parent=5 // pred_region
        %s1030 = ssub.s32 %s77, 1
        // Predicated region
        $region153: #{decoder_layer_forward.1} parent=151 // pred_check
          %p1031 = pneg %p249
        $region154: #{decoder_layer_forward.1} parent=151 // pred_check_branch
          %1033 = sbr.rel (%p1031) target = $region156
        $region155: #{decoder_layer_forward.1} parent=151 // pred_region
          %1035 = dma.done [#allocation3], 16
        $region156: #{decoder_layer_forward.1} parent=151 // pred_fallthru
          _
        // Predicated region
        $region157: #{decoder_layer_forward.1} parent=151 // pred_check
          %p1036 = pneg %p648
        $region158: #{decoder_layer_forward.1} parent=151 // pred_check_branch
          %1038 = sbr.rel (%p1036) target = $region160
        $region159: #{decoder_layer_forward.1} parent=151 // pred_region
          %1040 = dma.done [#allocation5], 16
        $region160: #{decoder_layer_forward.1} parent=151 // pred_fallthru
          _
        // Predicated region
        $region161: #{decoder_layer_forward.1} parent=151 // pred_check
          %p1041 = pneg %p669
        $region162: #{decoder_layer_forward.1} parent=151 // pred_check_branch
          %1043 = sbr.rel (%p1041) target = $region164
        $region163: #{decoder_layer_forward.1} parent=151 // pred_region
          %1045 = dma.done [#allocation5], 16
        $region164: #{decoder_layer_forward.1} parent=151 // pred_fallthru
          _
        // Predicated region
        $region165: #{decoder_layer_forward.1} parent=151 // pred_check
          %p1046 = pneg %p711
        $region166: #{decoder_layer_forward.1} parent=151 // pred_check_branch
          %1048 = sbr.rel (%p1046) target = $region168
        $region167: #{decoder_layer_forward.1} parent=151 // pred_region
          %1050 = dma.done [#allocation8], 16
        $region168: #{decoder_layer_forward.1} parent=151 // pred_fallthru
          _
        // Predicated region
        $region169: #{decoder_layer_forward.1} parent=151 // pred_check
          %p1051 = pneg %p753
        $region170: #{decoder_layer_forward.1} parent=151 // pred_check_branch
          %1053 = sbr.rel (%p1051) target = $region172
        $region171: #{decoder_layer_forward.1} parent=151 // pred_region
          %1055 = dma.done [#allocation8], 16
        $region172: #{decoder_layer_forward.1} parent=151 // pred_fallthru
          _
        // Predicated region
        $region173: #{decoder_layer_forward.1} parent=151 // pred_check
          %p1056 = pneg %p774
        $region174: #{decoder_layer_forward.1} parent=151 // pred_check_branch
          %1058 = sbr.rel (%p1056) target = $region176
        $region175: #{decoder_layer_forward.1} parent=151 // pred_region
          %1060 = dma.done [#allocation11], 16
        $region176: #{decoder_layer_forward.1} parent=151 // pred_fallthru
          _
        // Predicated region
        $region177: #{decoder_layer_forward.1} parent=151 // pred_check
          %p1061 = pneg %p795
        $region178: #{decoder_layer_forward.1} parent=151 // pred_check_branch
          %1063 = sbr.rel (%p1061) target = $region180
        $region179: #{decoder_layer_forward.1} parent=151 // pred_region
          %1065 = dma.done [#allocation11], 16
        $region180: #{decoder_layer_forward.1} parent=151 // pred_fallthru
          _
        %p1066 = scmp.lt.s32.totalorder %s82, 1
        %s1067 = scalar_select %p1066, %s82, 1
        %s1068 = smul.addr %s1067, 8
        %s1069 = scalar_lea.vmem %s1, %s1068
        %p1070 = pneg %p103
        %p1071 = pneg %p100
        %p1072 = scmp.lt.s32.totalorder %s82, 1
        %s1073 = scalar_select %p1072, %s82, 1
        %s1074 = smul.addr %s1073, 2
        %s1075 = smul.addr %s1074, 8
        %s1076 = scalar_lea.vmem %s3, %s1075
        %p1077 = pneg %p129
        %p1078 = pneg %p126
        %p1079 = scmp.lt.s32.totalorder %s82, 1
        %s1080 = scalar_select %p1079, %s82, 1
        %s1081 = smul.addr %s1080, 2
        %s1082 = smul.addr %s1081, 8
        %s1083 = scalar_lea.vmem %s5, %s1082
        %p1084 = pneg %p155
        %p1085 = pneg %p152
        %p1086 = scmp.lt.s32.totalorder %s82, 1
        %s1087 = scalar_select %p1086, %s82, 1
        %s1088 = smul.addr %s1087, 8
        %s1089 = scalar_lea.vmem %s7, %s1088
        %p1090 = pneg %p181
        %p1091 = pneg %p178
        %p1092 = scmp.lt.s32.totalorder %s82, 1
        %s1093 = scalar_select %p1092, %s82, 1
        %s1094 = smul.addr %s1093, 8
        %s1095 = scalar_lea.vmem %s9, %s1094
        %p1096 = pneg %p207
        %p1097 = pneg %p204
        %p1098 = pneg %p228
        %p1099 = pneg %p225
        %p1100 = pneg %p249
        %p1101 = pneg %p246
        %p1102 = pneg %p270
        %p1103 = pneg %p267
        %p1104 = pneg %p291
        %p1105 = pneg %p288
        %p1106 = pneg %p312
        %p1107 = pneg %p309
        %p1108 = pneg %p333
        %p1109 = pneg %p330
        %p1110 = pneg %p354
        %p1111 = pneg %p351
        %p1112 = pneg %p375
        %p1113 = pneg %p372
        %p1114 = pneg %p396
        %p1115 = pneg %p393
        %p1116 = pneg %p417
        %p1117 = pneg %p414
        %p1118 = pneg %p438
        %p1119 = pneg %p435
        %p1120 = pneg %p459
        %p1121 = pneg %p456
        %p1122 = pneg %p480
        %p1123 = pneg %p477
        %p1124 = pneg %p501
        %p1125 = pneg %p498
        %p1126 = pneg %p522
        %p1127 = pneg %p519
        %p1128 = pneg %p543
        %p1129 = pneg %p540
        %p1130 = pneg %p564
        %p1131 = pneg %p561
        %p1132 = pneg %p585
        %p1133 = pneg %p582
        %p1134 = pneg %p606
        %p1135 = pneg %p603
        %p1136 = pneg %p627
        %p1137 = pneg %p624
        %p1138 = pneg %p648
        %p1139 = pneg %p645
        %p1140 = pneg %p669
        %p1141 = pneg %p666
        %p1142 = pneg %p690
        %p1143 = pneg %p687
        %p1144 = pneg %p711
        %p1145 = pneg %p708
        %p1146 = pneg %p732
        %p1147 = pneg %p729
        %p1148 = pneg %p753
        %p1149 = pneg %p750
        %p1150 = pneg %p774
        %p1151 = pneg %p771
        %p1152 = pneg %p795
        %p1153 = pneg %p792
        %p1154 = pneg %p821
        %p1155 = pneg %p818
        %p1156 = scmp.lt.s32.totalorder %s82, 1
        %s1157 = scalar_select %p1156, %s82, 1
        %s1158 = smul.addr %s1157, 8
        %s1159 = scalar_lea.vmem %s67, %s1158
        %p1160 = scmp.lt.s32.totalorder %s82, 1
        %s1161 = scalar_select %p1160, %s82, 1
        %s1162 = smul.addr %s1161, 8
        %s1163 = scalar_lea.vmem %s1, %s1162
        %p1164 = scmp.lt.s32.totalorder %s82, 1
        %s1165 = scalar_select %p1164, %s82, 1
        %s1166 = smul.addr %s1165, 2
        %s1167 = smul.addr %s1166, 8
        %s1168 = scalar_lea.vmem %s3, %s1167
        %p1169 = scmp.lt.s32.totalorder %s82, 1
        %s1170 = scalar_select %p1169, %s82, 1
        %s1171 = smul.addr %s1170, 2
        %s1172 = smul.addr %s1171, 8
        %s1173 = scalar_lea.vmem %s5, %s1172
        %p1174 = scmp.lt.s32.totalorder %s82, 1
        %s1175 = scalar_select %p1174, %s82, 1
        %s1176 = smul.addr %s1175, 8
        %s1177 = scalar_lea.vmem %s7, %s1176
        %p1178 = scmp.lt.s32.totalorder %s82, 1
        %s1179 = scalar_select %p1178, %s82, 1
        %s1180 = smul.addr %s1179, 8
        %s1181 = scalar_lea.vmem %s9, %s1180
        %p1182 = scmp.lt.s32.totalorder %s82, 1
        %s1183 = scalar_select %p1182, %s82, 1
        %s1184 = smul.addr %s1183, 8
        %s1185 = scalar_lea.vmem %s67, %s1184
        %v1187 = vld [vmem:[%s1163] sm:$0xff]
        %v1188 = vld [vmem:[%s1177] sm:$0xff]
        %v1189 = vpack.c.bf16 %v1187, %v1187
        %v1190 = vld [vmem:[%s11] sm:$0xf]
        %v1191 = vld [vmem:[%s11 + $0x4] sm:$0xf]
        %v1192 = vld [vmem:[%s11 + $0x8] sm:$0xf]
        %v1193 = vld [vmem:[%s11 + $0xc] sm:$0xf]
        %v1194 = vld [vmem:[#allocation2] sm:$0x1]
        %v1196 = vperm.slane %v1194, 0
        %v1202 = vunpack.c.l.b16 %v1190
        %v1203 = vunpack.c.l.b16 %v1191
        %v1204 = vunpack.c.l.b16 %v1192
        %v1205 = vunpack.c.l.b16 %v1193
        %v1206 = vpack.c.b16 %v1203, %v1202
        %v1207 = vpack.c.b16 %v1205, %v1204
        %vm1210 = vcmask 261120
        %v1212 = vsel %vm1210, %v1189, 0
        %1214 = vmatpush.bf16.msra.mxu0 0
        %1215 = vmatpush.bf16.msra.mxu0 0
        %1216 = vmatpush.bf16.msra.mxu0 0
        %1217 = vmatpush.bf16.msra.mxu0 0
        %1218 = vmatpush.bf16.msra.mxu0 0
        %1219 = vmatpush.bf16.msra.mxu0 0
        %1220 = vmatpush.bf16.msra.mxu0 %v1207
        %1221 = vmatpush.bf16.msra.mxu0 %v1206
        %1222 = vmatmul.bf16.gmra.mxu0 %v1212
        %v1223 = vpop.f32.mrf.mxu0
        %v1224 = vadd.f32 %v1196, %v1223
        %v1225 = vpop.f32.mrf.mxu0
        %1226 = vdwg.mxu0
        %v1227 = vpack.c.bf16 %v1188, %v1188
        %v1228 = vld [vmem:[%s15] sm:$0xf]
        %v1229 = vld [vmem:[%s15 + $0x4] sm:$0xf]
        %v1230 = vld [vmem:[%s15 + $0x8] sm:$0xf]
        %v1231 = vld [vmem:[%s15 + $0xc] sm:$0xf]
        %v1232 = vld [vmem:[%s17] sm:$0x1]
        %v1234 = vperm.slane %v1232, 0
        %v1240 = vunpack.c.l.b16 %v1228
        %v1241 = vunpack.c.l.b16 %v1229
        %v1242 = vunpack.c.l.b16 %v1230
        %v1243 = vunpack.c.l.b16 %v1231
        %v1244 = vpack.c.b16 %v1241, %v1240
        %v1245 = vpack.c.b16 %v1243, %v1242
        %v1249 = vsel %vm1210, %v1227, 0
        %1251 = vmatpush.bf16.msra.mxu0 0
        %1252 = vmatpush.bf16.msra.mxu0 0
        %1253 = vmatpush.bf16.msra.mxu0 0
        %1254 = vmatpush.bf16.msra.mxu0 0
        %1255 = vmatpush.bf16.msra.mxu0 0
        %1256 = vmatpush.bf16.msra.mxu0 0
        %1257 = vmatpush.bf16.msra.mxu0 %v1245
        %1258 = vmatpush.bf16.msra.mxu0 %v1244
        %1259 = vmatmul.bf16.gmra.mxu0 %v1249
        %v1260 = vpop.f32.mrf.mxu0
        %v1261 = vadd.f32 %v1234, %v1260
        %v1262 = vpop.f32.mrf.mxu0
        %1263 = vdwg.mxu0
        %v1264 = vadd.f32 %v1224, %v1261
        %1266 = vrot.lane.b32.xlu0 %v1264, 120
        %v1267 = vpop.permute.xlu0 %1266
        %1269 = vrot.lane.b32.xlu0 %v1264, 112
        %v1270 = vpop.permute.xlu0 %1269
        %1272 = vrot.lane.b32.xlu0 %v1264, 104
        %v1273 = vpop.permute.xlu0 %1272
        %v1275 = vrot.slane %v1270, 4
        %vm1276 = vcmask 1047556
        %v1277 = vsel %vm1276, %v1275, %v1264
        %v1278 = vrot.slane %v1264, 4
        %v1279 = vsel %vm1276, %v1270, %v1278
        %v1281 = vunpack.c.l.s4 1983009808
        %v1282 = vunpack.c.0.s8 %v1281
        %v1283 = vperm.slane %v1277, %v1282
        %v1285 = vunpack.c.l.s4 1983009808
        %v1286 = vunpack.c.0.s8 %v1285
        %v1287 = vperm.slane %v1279, %v1286
        %v1288 = vrot.slane %v1273, 4
        %v1289 = vsel %vm1276, %v1288, %v1267
        %v1290 = vrot.slane %v1267, 4
        %v1291 = vsel %vm1276, %v1273, %v1290
        %v1293 = vunpack.c.l.s4 1983009808
        %v1294 = vunpack.c.0.s8 %v1293
        %v1295 = vperm.slane %v1289, %v1294
        %v1297 = vunpack.c.l.s4 1983009808
        %v1298 = vunpack.c.0.s8 %v1297
        %v1299 = vperm.slane %v1291, %v1298
        %v1300 = vrot.slane %v1295, 4
        %v1301 = vsel %vm1276, %v1300, %v1283
        %v1302 = vrot.slane %v1283, 4
        %v1303 = vsel %vm1276, %v1295, %v1302
        %v1305 = vunpack.c.l.s4 1934713408
        %v1306 = vunpack.c.0.s8 %v1305
        %v1307 = vperm.slane %v1301, %v1306
        %v1309 = vunpack.c.l.s4 1934713408
        %v1310 = vunpack.c.0.s8 %v1309
        %v1311 = vperm.slane %v1303, %v1310
        %v1312 = vrot.slane %v1299, 4
        %v1313 = vsel %vm1276, %v1312, %v1287
        %v1314 = vrot.slane %v1287, 4
        %v1315 = vsel %vm1276, %v1299, %v1314
        %v1317 = vunpack.c.l.s4 1934713408
        %v1318 = vunpack.c.0.s8 %v1317
        %v1319 = vperm.slane %v1313, %v1318
        %v1321 = vunpack.c.l.s4 1934713408
        %v1322 = vunpack.c.0.s8 %v1321
        %v1323 = vperm.slane %v1315, %v1322
        %v1324 = vrot.slane %v1307, 4
        %v1325 = vsel %vm1276, 0.0, %v1324
        %v1326 = vrot.slane %v1311, 4
        %v1327 = vsel %vm1276, 0.0, %v1326
        %v1328 = vrot.slane %v1319, 4
        %v1329 = vsel %vm1276, 0.0, %v1328
        %v1330 = vrot.slane %v1323, 4
        %v1331 = vsel %vm1276, 0.0, %v1330
        %v1332 = vsel %vm1276, %v1326, %v1307
        %v1334 = vunpack.c.l.s4 1983009808
        %v1335 = vunpack.c.0.s8 %v1334
        %v1336 = vperm.slane %v1332, %v1335
        %v1337 = vrot.slane %v1327, 4
        %v1338 = vsel %vm1276, %v1337, %v1325
        %v1340 = vunpack.c.l.s4 1983009808
        %v1341 = vunpack.c.0.s8 %v1340
        %v1342 = vperm.slane %v1338, %v1341
        %v1343 = vsel %vm1276, %v1330, %v1319
        %v1345 = vunpack.c.l.s4 1983009808
        %v1346 = vunpack.c.0.s8 %v1345
        %v1347 = vperm.slane %v1343, %v1346
        %v1348 = vrot.slane %v1331, 4
        %v1349 = vsel %vm1276, %v1348, %v1329
        %v1351 = vunpack.c.l.s4 1983009808
        %v1352 = vunpack.c.0.s8 %v1351
        %v1353 = vperm.slane %v1349, %v1352
        %v1354 = vrot.slane %v1342, 4
        %v1355 = vsel %vm1276, %v1354, %v1336
        %v1356 = vrot.slane %v1336, 4
        %v1357 = vsel %vm1276, %v1342, %v1356
        %v1359 = vunpack.c.l.s4 1934713408
        %v1360 = vunpack.c.0.s8 %v1359
        %v1361 = vperm.slane %v1355, %v1360
        %v1363 = vunpack.c.l.s4 1934713408
        %v1364 = vunpack.c.0.s8 %v1363
        %v1365 = vperm.slane %v1357, %v1364
        %v1366 = vrot.slane %v1353, 4
        %v1367 = vsel %vm1276, %v1366, %v1347
        %v1368 = vrot.slane %v1347, 4
        %v1369 = vsel %vm1276, %v1353, %v1368
        %v1371 = vunpack.c.l.s4 1934713408
        %v1372 = vunpack.c.0.s8 %v1371
        %v1373 = vperm.slane %v1367, %v1372
        %v1375 = vunpack.c.l.s4 1934713408
        %v1376 = vunpack.c.0.s8 %v1375
        %v1377 = vperm.slane %v1369, %v1376
        %v1378 = vrot.slane %v1373, 4
        %v1379 = vsel %vm1276, %v1378, %v1361
        %v1380 = vrot.slane %v1361, 4
        %v1381 = vsel %vm1276, %v1373, %v1380
        %v1382 = vrot.slane %v1377, 4
        %v1383 = vsel %vm1276, %v1382, %v1365
        %v1384 = vrot.slane %v1365, 4
        %v1385 = vsel %vm1276, %v1377, %v1384
        %1386 = vrot.lane.b32.xlu0 %v1264, 96
        %v1387 = vpop.permute.xlu0 %1386
        %1388 = vrot.lane.b32.xlu0 %v1267, 96
        %v1389 = vpop.permute.xlu0 %1388
        %1390 = vrot.lane.b32.xlu0 %v1270, 96
        %v1391 = vpop.permute.xlu0 %1390
        %1392 = vrot.lane.b32.xlu0 %v1273, 96
        %v1393 = vpop.permute.xlu0 %1392
        %v1398 = vrot.slane %v1391, 4
        %v1399 = vsel %vm1276, %v1398, %v1387
        %v1400 = vrot.slane %v1387, 4
        %v1401 = vsel %vm1276, %v1391, %v1400
        %v1403 = vunpack.c.l.s4 1983009808
        %v1404 = vunpack.c.0.s8 %v1403
        %v1405 = vperm.slane %v1399, %v1404
        %v1407 = vunpack.c.l.s4 1983009808
        %v1408 = vunpack.c.0.s8 %v1407
        %v1409 = vperm.slane %v1401, %v1408
        %v1410 = vrot.slane %v1393, 4
        %v1411 = vsel %vm1276, %v1410, %v1389
        %v1412 = vrot.slane %v1389, 4
        %v1413 = vsel %vm1276, %v1393, %v1412
        %v1415 = vunpack.c.l.s4 1983009808
        %v1416 = vunpack.c.0.s8 %v1415
        %v1417 = vperm.slane %v1411, %v1416
        %v1419 = vunpack.c.l.s4 1983009808
        %v1420 = vunpack.c.0.s8 %v1419
        %v1421 = vperm.slane %v1413, %v1420
        %v1422 = vrot.slane %v1417, 4
        %v1423 = vsel %vm1276, %v1422, %v1405
        %v1424 = vrot.slane %v1405, 4
        %v1425 = vsel %vm1276, %v1417, %v1424
        %v1427 = vunpack.c.l.s4 1934713408
        %v1428 = vunpack.c.0.s8 %v1427
        %v1429 = vperm.slane %v1423, %v1428
        %v1431 = vunpack.c.l.s4 1934713408
        %v1432 = vunpack.c.0.s8 %v1431
        %v1433 = vperm.slane %v1425, %v1432
        %v1434 = vrot.slane %v1421, 4
        %v1435 = vsel %vm1276, %v1434, %v1409
        %v1436 = vrot.slane %v1409, 4
        %v1437 = vsel %vm1276, %v1421, %v1436
        %v1439 = vunpack.c.l.s4 1934713408
        %v1440 = vunpack.c.0.s8 %v1439
        %v1441 = vperm.slane %v1435, %v1440
        %v1443 = vunpack.c.l.s4 1934713408
        %v1444 = vunpack.c.0.s8 %v1443
        %v1445 = vperm.slane %v1437, %v1444
        %v1446 = vrot.slane %v1429, 4
        %v1447 = vsel %vm1276, 0.0, %v1446
        %v1448 = vrot.slane %v1433, 4
        %v1449 = vsel %vm1276, 0.0, %v1448
        %v1450 = vrot.slane %v1441, 4
        %v1451 = vsel %vm1276, 0.0, %v1450
        %v1452 = vrot.slane %v1445, 4
        %v1453 = vsel %vm1276, 0.0, %v1452
        %v1454 = vsel %vm1276, %v1448, %v1429
        %v1456 = vunpack.c.l.s4 1983009808
        %v1457 = vunpack.c.0.s8 %v1456
        %v1458 = vperm.slane %v1454, %v1457
        %v1459 = vrot.slane %v1449, 4
        %v1460 = vsel %vm1276, %v1459, %v1447
        %v1462 = vunpack.c.l.s4 1983009808
        %v1463 = vunpack.c.0.s8 %v1462
        %v1464 = vperm.slane %v1460, %v1463
        %v1465 = vsel %vm1276, %v1452, %v1441
        %v1467 = vunpack.c.l.s4 1983009808
        %v1468 = vunpack.c.0.s8 %v1467
        %v1469 = vperm.slane %v1465, %v1468
        %v1470 = vrot.slane %v1453, 4
        %v1471 = vsel %vm1276, %v1470, %v1451
        %v1473 = vunpack.c.l.s4 1983009808
        %v1474 = vunpack.c.0.s8 %v1473
        %v1475 = vperm.slane %v1471, %v1474
        %v1476 = vrot.slane %v1464, 4
        %v1477 = vsel %vm1276, %v1476, %v1458
        %v1478 = vrot.slane %v1458, 4
        %v1479 = vsel %vm1276, %v1464, %v1478
        %v1481 = vunpack.c.l.s4 1934713408
        %v1482 = vunpack.c.0.s8 %v1481
        %v1483 = vperm.slane %v1477, %v1482
        %v1485 = vunpack.c.l.s4 1934713408
        %v1486 = vunpack.c.0.s8 %v1485
        %v1487 = vperm.slane %v1479, %v1486
        %v1488 = vrot.slane %v1475, 4
        %v1489 = vsel %vm1276, %v1488, %v1469
        %v1490 = vrot.slane %v1469, 4
        %v1491 = vsel %vm1276, %v1475, %v1490
        %v1493 = vunpack.c.l.s4 1934713408
        %v1494 = vunpack.c.0.s8 %v1493
        %v1495 = vperm.slane %v1489, %v1494
        %v1497 = vunpack.c.l.s4 1934713408
        %v1498 = vunpack.c.0.s8 %v1497
        %v1499 = vperm.slane %v1491, %v1498
        %v1500 = vrot.slane %v1495, 4
        %v1501 = vsel %vm1276, %v1500, %v1483
        %v1502 = vrot.slane %v1483, 4
        %v1503 = vsel %vm1276, %v1495, %v1502
        %v1504 = vrot.slane %v1499, 4
        %v1505 = vsel %vm1276, %v1504, %v1487
        %v1506 = vrot.slane %v1487, 4
        %v1507 = vsel %vm1276, %v1499, %v1506
        %1509 = vrot.lane.b32.xlu0 %v1224, 120
        %v1510 = vpop.permute.xlu0 %1509
        %1511 = vrot.lane.b32.xlu0 %v1224, 112
        %v1512 = vpop.permute.xlu0 %1511
        %1513 = vrot.lane.b32.xlu0 %v1224, 104
        %v1514 = vpop.permute.xlu0 %1513
        %1515 = vrot.lane.b32.xlu0 %v1224, 64
        %v1516 = vpop.permute.xlu0 %1515
        %1517 = vrot.lane.b32.xlu0 %v1510, 64
        %v1518 = vpop.permute.xlu0 %1517
        %1519 = vrot.lane.b32.xlu0 %v1512, 64
        %v1520 = vpop.permute.xlu0 %1519
        %1521 = vrot.lane.b32.xlu0 %v1514, 64
        %v1522 = vpop.permute.xlu0 %1521
        %v1527 = vrot.slane %v1520, 4
        %v1528 = vsel %vm1276, %v1527, %v1516
        %v1529 = vrot.slane %v1516, 4
        %v1530 = vsel %vm1276, %v1520, %v1529
        %v1532 = vunpack.c.l.s4 1983009808
        %v1533 = vunpack.c.0.s8 %v1532
        %v1534 = vperm.slane %v1528, %v1533
        %v1536 = vunpack.c.l.s4 1983009808
        %v1537 = vunpack.c.0.s8 %v1536
        %v1538 = vperm.slane %v1530, %v1537
        %v1539 = vrot.slane %v1522, 4
        %v1540 = vsel %vm1276, %v1539, %v1518
        %v1541 = vrot.slane %v1518, 4
        %v1542 = vsel %vm1276, %v1522, %v1541
        %v1544 = vunpack.c.l.s4 1983009808
        %v1545 = vunpack.c.0.s8 %v1544
        %v1546 = vperm.slane %v1540, %v1545
        %v1548 = vunpack.c.l.s4 1983009808
        %v1549 = vunpack.c.0.s8 %v1548
        %v1550 = vperm.slane %v1542, %v1549
        %v1551 = vrot.slane %v1546, 4
        %v1552 = vsel %vm1276, %v1551, %v1534
        %v1553 = vrot.slane %v1534, 4
        %v1554 = vsel %vm1276, %v1546, %v1553
        %v1556 = vunpack.c.l.s4 1934713408
        %v1557 = vunpack.c.0.s8 %v1556
        %v1558 = vperm.slane %v1552, %v1557
        %v1560 = vunpack.c.l.s4 1934713408
        %v1561 = vunpack.c.0.s8 %v1560
        %v1562 = vperm.slane %v1554, %v1561
        %v1563 = vrot.slane %v1550, 4
        %v1564 = vsel %vm1276, %v1563, %v1538
        %v1565 = vrot.slane %v1538, 4
        %v1566 = vsel %vm1276, %v1550, %v1565
        %v1568 = vunpack.c.l.s4 1934713408
        %v1569 = vunpack.c.0.s8 %v1568
        %v1570 = vperm.slane %v1564, %v1569
        %v1572 = vunpack.c.l.s4 1934713408
        %v1573 = vunpack.c.0.s8 %v1572
        %v1574 = vperm.slane %v1566, %v1573
        %v1575 = vrot.slane %v1558, 4
        %v1576 = vsel %vm1276, 0.0, %v1575
        %v1577 = vrot.slane %v1562, 4
        %v1578 = vsel %vm1276, 0.0, %v1577
        %v1579 = vrot.slane %v1570, 4
        %v1580 = vsel %vm1276, 0.0, %v1579
        %v1581 = vrot.slane %v1574, 4
        %v1582 = vsel %vm1276, 0.0, %v1581
        %v1583 = vsel %vm1276, %v1577, %v1558
        %v1585 = vunpack.c.l.s4 1983009808
        %v1586 = vunpack.c.0.s8 %v1585
        %v1587 = vperm.slane %v1583, %v1586
        %v1588 = vrot.slane %v1578, 4
        %v1589 = vsel %vm1276, %v1588, %v1576
        %v1591 = vunpack.c.l.s4 1983009808
        %v1592 = vunpack.c.0.s8 %v1591
        %v1593 = vperm.slane %v1589, %v1592
        %v1594 = vsel %vm1276, %v1581, %v1570
        %v1596 = vunpack.c.l.s4 1983009808
        %v1597 = vunpack.c.0.s8 %v1596
        %v1598 = vperm.slane %v1594, %v1597
        %v1599 = vrot.slane %v1582, 4
        %v1600 = vsel %vm1276, %v1599, %v1580
        %v1602 = vunpack.c.l.s4 1983009808
        %v1603 = vunpack.c.0.s8 %v1602
        %v1604 = vperm.slane %v1600, %v1603
        %v1605 = vrot.slane %v1593, 4
        %v1606 = vsel %vm1276, %v1605, %v1587
        %v1607 = vrot.slane %v1587, 4
        %v1608 = vsel %vm1276, %v1593, %v1607
        %v1610 = vunpack.c.l.s4 1934713408
        %v1611 = vunpack.c.0.s8 %v1610
        %v1612 = vperm.slane %v1606, %v1611
        %v1614 = vunpack.c.l.s4 1934713408
        %v1615 = vunpack.c.0.s8 %v1614
        %v1616 = vperm.slane %v1608, %v1615
        %v1617 = vrot.slane %v1604, 4
        %v1618 = vsel %vm1276, %v1617, %v1598
        %v1619 = vrot.slane %v1598, 4
        %v1620 = vsel %vm1276, %v1604, %v1619
        %v1622 = vunpack.c.l.s4 1934713408
        %v1623 = vunpack.c.0.s8 %v1622
        %v1624 = vperm.slane %v1618, %v1623
        %v1626 = vunpack.c.l.s4 1934713408
        %v1627 = vunpack.c.0.s8 %v1626
        %v1628 = vperm.slane %v1620, %v1627
        %v1629 = vrot.slane %v1624, 4
        %v1630 = vsel %vm1276, %v1629, %v1612
        %v1631 = vrot.slane %v1612, 4
        %v1632 = vsel %vm1276, %v1624, %v1631
        %v1633 = vrot.slane %v1628, 4
        %v1634 = vsel %vm1276, %v1633, %v1616
        %v1635 = vrot.slane %v1616, 4
        %v1636 = vsel %vm1276, %v1628, %v1635
        %v1637 = vpack.c.bf16 %v1379, %v1379
        %v1638 = vpack.c.bf16 %v1381, %v1381
        %v1639 = vpack.c.bf16 %v1383, %v1383
        %v1640 = vpack.c.bf16 %v1385, %v1385
        %v1641 = vpack.c.bf16 %v1501, %v1501
        %v1642 = vpack.c.bf16 %v1503, %v1503
        %v1643 = vpack.c.bf16 %v1505, %v1505
        %v1644 = vpack.c.bf16 %v1507, %v1507
        %vm1645 = vcmask 64512
        %v1647 = vsel %vm1645, %v1637, 0
        %v1650 = vsel %vm1645, %v1641, 0
        %1652 = vmatpush.bf16.xpose.msra.mxu0 0
        %1653 = vmatpush.bf16.xpose.msra.mxu0 0
        %1654 = vmatpush.bf16.xpose.msra.mxu0 0
        %1655 = vmatpush.bf16.xpose.msra.mxu0 0
        %1656 = vmatpush.bf16.xpose.msra.mxu0 0
        %1657 = vmatpush.bf16.xpose.msra.mxu0 0
        %1658 = vmatpush.bf16.xpose.msra.mxu0 0
        %1659 = vmatpush.bf16.xpose.msra.mxu0 %v1650
        %1660 = vmatmul.bf16.gmra.mxu0 %v1647
        %v1661 = vpop.f32.mrf.mxu0
        %v1662 = vadd.f32 0.0, %v1661
        %v1663 = vpop.f32.mrf.mxu0
        %1664 = vdwg.mxu0
        %v1666 = vsel %vm1645, %v1638, 0
        %v1669 = vsel %vm1645, %v1642, 0
        %1671 = vmatpush.bf16.xpose.msra.mxu0 0
        %1672 = vmatpush.bf16.xpose.msra.mxu0 0
        %1673 = vmatpush.bf16.xpose.msra.mxu0 0
        %1674 = vmatpush.bf16.xpose.msra.mxu0 0
        %1675 = vmatpush.bf16.xpose.msra.mxu0 0
        %1676 = vmatpush.bf16.xpose.msra.mxu0 0
        %1677 = vmatpush.bf16.xpose.msra.mxu0 0
        %1678 = vmatpush.bf16.xpose.msra.mxu0 %v1669
        %1679 = vmatmul.bf16.gmra.mxu0 %v1666
        %v1680 = vpop.f32.mrf.mxu0
        %v1681 = vadd.f32 0.0, %v1680
        %v1682 = vpop.f32.mrf.mxu0
        %1683 = vdwg.mxu0
        %v1685 = vsel %vm1645, %v1639, 0
        %v1688 = vsel %vm1645, %v1643, 0
        %1690 = vmatpush.bf16.xpose.msra.mxu0 0
        %1691 = vmatpush.bf16.xpose.msra.mxu0 0
        %1692 = vmatpush.bf16.xpose.msra.mxu0 0
        %1693 = vmatpush.bf16.xpose.msra.mxu0 0
        %1694 = vmatpush.bf16.xpose.msra.mxu0 0
        %1695 = vmatpush.bf16.xpose.msra.mxu0 0
        %1696 = vmatpush.bf16.xpose.msra.mxu0 0
        %1697 = vmatpush.bf16.xpose.msra.mxu0 %v1688
        %1698 = vmatmul.bf16.gmra.mxu0 %v1685
        %v1699 = vpop.f32.mrf.mxu0
        %v1700 = vadd.f32 0.0, %v1699
        %v1701 = vpop.f32.mrf.mxu0
        %1702 = vdwg.mxu0
        %v1704 = vsel %vm1645, %v1640, 0
        %v1707 = vsel %vm1645, %v1644, 0
        %1709 = vmatpush.bf16.xpose.msra.mxu0 0
        %1710 = vmatpush.bf16.xpose.msra.mxu0 0
        %1711 = vmatpush.bf16.xpose.msra.mxu0 0
        %1712 = vmatpush.bf16.xpose.msra.mxu0 0
        %1713 = vmatpush.bf16.xpose.msra.mxu0 0
        %1714 = vmatpush.bf16.xpose.msra.mxu0 0
        %1715 = vmatpush.bf16.xpose.msra.mxu0 0
        %1716 = vmatpush.bf16.xpose.msra.mxu0 %v1707
        %1717 = vmatmul.bf16.gmra.mxu0 %v1704
        %v1718 = vpop.f32.mrf.mxu0
        %v1719 = vadd.f32 0.0, %v1718
        %v1720 = vpop.f32.mrf.mxu0
        %1721 = vdwg.mxu0
        %v1722 = vsel %vm1645, %v1662, -inf
        %1723 = vmax.xlane.f32.xlu0 %v1722
        %v1724 = vpop.xlane.xlu0 %1723
        %v1725 = vsel %vm1645, %v1681, -inf
        %1726 = vmax.xlane.f32.xlu0 %v1725
        %v1727 = vpop.xlane.xlu0 %1726
        %v1728 = vsel %vm1645, %v1700, -inf
        %1729 = vmax.xlane.f32.xlu0 %v1728
        %v1730 = vpop.xlane.xlu0 %1729
        %v1731 = vsel %vm1645, %v1719, -inf
        %1732 = vmax.xlane.f32.xlu0 %v1731
        %v1733 = vpop.xlane.xlu0 %1732
        %v1734 = vsub.f32 %v1662, %v1724
        %v1735 = vsub.f32 %v1681, %v1727
        %v1736 = vsub.f32 %v1700, %v1730
        %v1737 = vsub.f32 %v1719, %v1733
        %v1738 = vmul.f32 %v1734, 1.442695
        %v1739 = vpow.pop %v1738
        %v1740 = vmul.f32 %v1735, 1.442695
        %v1741 = vpow.pop %v1740
        %v1742 = vmul.f32 %v1736, 1.442695
        %v1743 = vpow.pop %v1742
        %v1744 = vmul.f32 %v1737, 1.442695
        %v1745 = vpow.pop %v1744
        %v1746 = vsel %vm1645, %v1739, 0.0
        %1747 = vadd.xlane.f32.xlu0 %v1746
        %v1748 = vpop.xlane.xlu0 %1747
        %v1749 = vsel %vm1645, %v1741, 0.0
        %1750 = vadd.xlane.f32.xlu0 %v1749
        %v1751 = vpop.xlane.xlu0 %1750
        %v1752 = vsel %vm1645, %v1743, 0.0
        %1753 = vadd.xlane.f32.xlu0 %v1752
        %v1754 = vpop.xlane.xlu0 %1753
        %v1755 = vsel %vm1645, %v1745, 0.0
        %1756 = vadd.xlane.f32.xlu0 %v1755
        %v1757 = vpop.xlane.xlu0 %1756
        %v1758 = vrcp.pop %v1748
        %v1759 = vrcp.pop %v1751
        %v1760 = vrcp.pop %v1754
        %v1761 = vrcp.pop %v1757
        %v1762 = vmul.f32 %v1739, %v1758
        %v1763 = vmul.f32 %v1741, %v1759
        %v1764 = vmul.f32 %v1743, %v1760
        %v1765 = vmul.f32 %v1745, %v1761
        %v1766 = vpack.c.bf16 %v1762, %v1762
        %v1767 = vpack.c.bf16 %v1763, %v1763
        %v1768 = vpack.c.bf16 %v1764, %v1764
        %v1769 = vpack.c.bf16 %v1765, %v1765
        %v1770 = vpack.c.bf16 %v1630, %v1630
        %v1771 = vpack.c.bf16 %v1632, %v1632
        %v1772 = vpack.c.bf16 %v1634, %v1634
        %v1773 = vpack.c.bf16 %v1636, %v1636
        %v1775 = vsel %vm1645, %v1766, 0
        %vm1777 = vcmask 1043456
        %v1779 = vsel %vm1777, %v1770, 0
        %1781 = vmatpush.bf16.msra.mxu0 0
        %1782 = vmatpush.bf16.msra.mxu0 0
        %1783 = vmatpush.bf16.msra.mxu0 0
        %1784 = vmatpush.bf16.msra.mxu0 0
        %1785 = vmatpush.bf16.msra.mxu0 0
        %1786 = vmatpush.bf16.msra.mxu0 0
        %1787 = vmatpush.bf16.msra.mxu0 0
        %1788 = vmatpush.bf16.msra.mxu0 %v1779
        %1789 = vmatmul.bf16.gmra.mxu0 %v1775
        %v1790 = vpop.f32.mrf.mxu0
        %v1791 = vadd.f32 0.0, %v1790
        %v1792 = vpop.f32.mrf.mxu0
        %1793 = vdwg.mxu0
        %v1795 = vsel %vm1645, %v1767, 0
        %v1798 = vsel %vm1777, %v1771, 0
        %1800 = vmatpush.bf16.msra.mxu0 0
        %1801 = vmatpush.bf16.msra.mxu0 0
        %1802 = vmatpush.bf16.msra.mxu0 0
        %1803 = vmatpush.bf16.msra.mxu0 0
        %1804 = vmatpush.bf16.msra.mxu0 0
        %1805 = vmatpush.bf16.msra.mxu0 0
        %1806 = vmatpush.bf16.msra.mxu0 0
        %1807 = vmatpush.bf16.msra.mxu0 %v1798
        %1808 = vmatmul.bf16.gmra.mxu0 %v1795
        %v1809 = vpop.f32.mrf.mxu0
        %v1810 = vadd.f32 0.0, %v1809
        %v1811 = vpop.f32.mrf.mxu0
        %1812 = vdwg.mxu0
        %v1814 = vsel %vm1645, %v1768, 0
        %v1817 = vsel %vm1777, %v1772, 0
        %1819 = vmatpush.bf16.msra.mxu0 0
        %1820 = vmatpush.bf16.msra.mxu0 0
        %1821 = vmatpush.bf16.msra.mxu0 0
        %1822 = vmatpush.bf16.msra.mxu0 0
        %1823 = vmatpush.bf16.msra.mxu0 0
        %1824 = vmatpush.bf16.msra.mxu0 0
        %1825 = vmatpush.bf16.msra.mxu0 0
        %1826 = vmatpush.bf16.msra.mxu0 %v1817
        %1827 = vmatmul.bf16.gmra.mxu0 %v1814
        %v1828 = vpop.f32.mrf.mxu0
        %v1829 = vadd.f32 0.0, %v1828
        %v1830 = vpop.f32.mrf.mxu0
        %1831 = vdwg.mxu0
        %v1833 = vsel %vm1645, %v1769, 0
        %v1836 = vsel %vm1777, %v1773, 0
        %1838 = vmatpush.bf16.msra.mxu0 0
        %1839 = vmatpush.bf16.msra.mxu0 0
        %1840 = vmatpush.bf16.msra.mxu0 0
        %1841 = vmatpush.bf16.msra.mxu0 0
        %1842 = vmatpush.bf16.msra.mxu0 0
        %1843 = vmatpush.bf16.msra.mxu0 0
        %1844 = vmatpush.bf16.msra.mxu0 0
        %1845 = vmatpush.bf16.msra.mxu0 %v1836
        %1846 = vmatmul.bf16.gmra.mxu0 %v1833
        %v1847 = vpop.f32.mrf.mxu0
        %v1848 = vadd.f32 0.0, %v1847
        %v1849 = vpop.f32.mrf.mxu0
        %1850 = vdwg.mxu0
        %v1851 = vrot.slane %v1829, 4
        %v1852 = vsel %vm1276, %v1851, %v1791
        %v1853 = vrot.slane %v1791, 4
        %v1854 = vsel %vm1276, %v1829, %v1853
        %v1856 = vunpack.c.l.s4 1983009808
        %v1857 = vunpack.c.0.s8 %v1856
        %v1858 = vperm.slane %v1852, %v1857
        %v1860 = vunpack.c.l.s4 1983009808
        %v1861 = vunpack.c.0.s8 %v1860
        %v1862 = vperm.slane %v1854, %v1861
        %v1863 = vrot.slane %v1848, 4
        %v1864 = vsel %vm1276, %v1863, %v1810
        %v1865 = vrot.slane %v1810, 4
        %v1866 = vsel %vm1276, %v1848, %v1865
        %v1868 = vunpack.c.l.s4 1983009808
        %v1869 = vunpack.c.0.s8 %v1868
        %v1870 = vperm.slane %v1864, %v1869
        %v1872 = vunpack.c.l.s4 1983009808
        %v1873 = vunpack.c.0.s8 %v1872
        %v1874 = vperm.slane %v1866, %v1873
        %v1875 = vrot.slane %v1870, 4
        %v1876 = vsel %vm1276, %v1875, %v1858
        %v1877 = vrot.slane %v1858, 4
        %v1878 = vsel %vm1276, %v1870, %v1877
        %v1880 = vunpack.c.l.s4 1934713408
        %v1881 = vunpack.c.0.s8 %v1880
        %v1882 = vperm.slane %v1876, %v1881
        %v1884 = vunpack.c.l.s4 1934713408
        %v1885 = vunpack.c.0.s8 %v1884
        %v1886 = vperm.slane %v1878, %v1885
        %v1887 = vrot.slane %v1874, 4
        %v1888 = vsel %vm1276, %v1887, %v1862
        %v1889 = vrot.slane %v1862, 4
        %v1890 = vsel %vm1276, %v1874, %v1889
        %v1892 = vunpack.c.l.s4 1934713408
        %v1893 = vunpack.c.0.s8 %v1892
        %v1894 = vperm.slane %v1888, %v1893
        %v1896 = vunpack.c.l.s4 1934713408
        %v1897 = vunpack.c.0.s8 %v1896
        %v1898 = vperm.slane %v1890, %v1897
        %v1899 = vrot.slane %v1882, 4
        %v1900 = vsel %vm1276, 0.0, %v1899
        %v1901 = vrot.slane %v1886, 4
        %v1902 = vsel %vm1276, 0.0, %v1901
        %v1903 = vrot.slane %v1894, 4
        %v1904 = vsel %vm1276, 0.0, %v1903
        %v1905 = vrot.slane %v1898, 4
        %v1906 = vsel %vm1276, 0.0, %v1905
        %v1907 = vsel %vm1276, %v1901, %v1882
        %v1909 = vunpack.c.l.s4 1983009808
        %v1910 = vunpack.c.0.s8 %v1909
        %v1911 = vperm.slane %v1907, %v1910
        %v1912 = vrot.slane %v1902, 4
        %v1913 = vsel %vm1276, %v1912, %v1900
        %v1915 = vunpack.c.l.s4 1983009808
        %v1916 = vunpack.c.0.s8 %v1915
        %v1917 = vperm.slane %v1913, %v1916
        %v1918 = vsel %vm1276, %v1905, %v1894
        %v1920 = vunpack.c.l.s4 1983009808
        %v1921 = vunpack.c.0.s8 %v1920
        %v1922 = vperm.slane %v1918, %v1921
        %v1923 = vrot.slane %v1906, 4
        %v1924 = vsel %vm1276, %v1923, %v1904
        %v1926 = vunpack.c.l.s4 1983009808
        %v1927 = vunpack.c.0.s8 %v1926
        %v1928 = vperm.slane %v1924, %v1927
        %v1929 = vrot.slane %v1917, 4
        %v1930 = vsel %vm1276, %v1929, %v1911
        %v1931 = vrot.slane %v1911, 4
        %v1932 = vsel %vm1276, %v1917, %v1931
        %v1934 = vunpack.c.l.s4 1934713408
        %v1935 = vunpack.c.0.s8 %v1934
        %v1936 = vperm.slane %v1930, %v1935
        %v1938 = vunpack.c.l.s4 1934713408
        %v1939 = vunpack.c.0.s8 %v1938
        %v1940 = vperm.slane %v1932, %v1939
        %v1941 = vrot.slane %v1928, 4
        %v1942 = vsel %vm1276, %v1941, %v1922
        %v1943 = vrot.slane %v1922, 4
        %v1944 = vsel %vm1276, %v1928, %v1943
        %v1946 = vunpack.c.l.s4 1934713408
        %v1947 = vunpack.c.0.s8 %v1946
        %v1948 = vperm.slane %v1942, %v1947
        %v1950 = vunpack.c.l.s4 1934713408
        %v1951 = vunpack.c.0.s8 %v1950
        %v1952 = vperm.slane %v1944, %v1951
        %v1953 = vrot.slane %v1948, 4
        %v1954 = vsel %vm1276, %v1953, %v1936
        %v1955 = vrot.slane %v1936, 4
        %v1956 = vsel %vm1276, %v1948, %v1955
        %v1957 = vrot.slane %v1952, 4
        %v1958 = vsel %vm1276, %v1957, %v1940
        %v1959 = vrot.slane %v1940, 4
        %v1960 = vsel %vm1276, %v1952, %v1959
        %1962 = vrot.lane.b32.xlu0 %v1956, 8
        %v1963 = vpop.permute.xlu0 %1962
        %1966 = vrot.lane.b32.xlu0 %v1958, 16
        %v1967 = vpop.permute.xlu0 %1966
        %1970 = vrot.lane.b32.xlu0 %v1960, 24
        %v1971 = vpop.permute.xlu0 %1970
        %v1973 = vsel %vm1645, %v1954, %v1963
        %vm1974 = vcmask 130048
        %v1975 = vsel %vm1974, %v1973, %v1967
        %vm1976 = vcmask 195584
        %v1977 = vsel %vm1976, %v1975, %v1971
        %v1978 = vpack.c.bf16 %v1977, %v1977
        %v1979 = vld [vmem:[%s19] sm:$0xf]
        %v1980 = vld [vmem:[%s19 + $0x4] sm:$0xf]
        %v1981 = vld [vmem:[%s19 + $0x8] sm:$0xf]
        %v1982 = vld [vmem:[%s19 + $0xc] sm:$0xf]
        %v1983 = vld [vmem:[%s21] sm:$0x1]
        %v1985 = vperm.slane %v1983, 0
        %v1991 = vunpack.c.l.b16 %v1979
        %v1992 = vunpack.c.l.b16 %v1980
        %v1993 = vunpack.c.l.b16 %v1981
        %v1994 = vunpack.c.l.b16 %v1982
        %v1995 = vpack.c.b16 %v1992, %v1991
        %v1996 = vpack.c.b16 %v1994, %v1993
        %v2000 = vsel %vm1210, %v1978, 0
        %2002 = vmatpush.bf16.msra.mxu0 0
        %2003 = vmatpush.bf16.msra.mxu0 0
        %2004 = vmatpush.bf16.msra.mxu0 0
        %2005 = vmatpush.bf16.msra.mxu0 0
        %2006 = vmatpush.bf16.msra.mxu0 0
        %2007 = vmatpush.bf16.msra.mxu0 0
        %2008 = vmatpush.bf16.msra.mxu0 %v1996
        %2009 = vmatpush.bf16.msra.mxu0 %v1995
        %2010 = vmatmul.bf16.gmra.mxu0 %v2000
        %v2011 = vpop.f32.mrf.mxu0
        %v2012 = vadd.f32 %v1985, %v2011
        %v2013 = vpop.f32.mrf.mxu0
        %2014 = vdwg.mxu0
        %v2015 = vadd.f32 %v1187, %v2012
        %v2016 = vld [vmem:[%s23] sm:$0x1]
        %v2017 = vld [vmem:[%s25] sm:$0x1]
        %v2018 = vsel %vm1210, %v2015, 0.0
        %2019 = vadd.xlane.f32.xlu0 %v2018
        %v2020 = vpop.xlane.xlu0 %2019
        %v2021 = vrcp.pop 32.0
        %v2022 = vmul.f32 32.0, %v2021
        %v2023 = vsub.f32 1.0, %v2022
        %v2024 = vmul.f32 %v2021, %v2023
        %v2025 = vadd.f32 %v2021, %v2024
        %vm2026 = vweird.f32 %v2021
        %v2027 = vsel %vm2026, %v2021, %v2025
        %v2028 = vmul.f32 %v2020, %v2027
        %v2029 = vsub.f32 %v2015, %v2028
        %v2030 = vmul.f32 %v2029, %v2029
        %v2031 = vsel %vm1210, %v2030, 0.0
        %2032 = vadd.xlane.f32.xlu0 %v2031
        %v2033 = vpop.xlane.xlu0 %2032
        %v2034 = vmul.f32 %v2033, %v2027
        %v2035 = vadd.f32 %v2034, 1e-05
        %v2036 = vrsqrt.pop %v2035
        %v2037 = vmul.f32 %v2036, %v2035
        %v2038 = vmul.f32 %v2037, %v2036
        %v2039 = vmul.f32 0.5, %v2038
        %v2040 = vsub.f32 1.5, %v2039
        %v2041 = vmul.f32 %v2036, %v2040
        %vm2042 = vweird.f32 %v2035
        %vm2043 = vweird.f32 %v2036
        %vm2044 = vmor %vm2042, %vm2043
        %v2045 = vsel %vm2044, %v2036, %v2041
        %v2046 = vmul.f32 %v2029, %v2045
        %v2048 = vperm.slane %v2016, 0
        %v2050 = vmul.f32 %v2046, %v2048
        %v2052 = vperm.slane %v2017, 0
        %v2054 = vadd.f32 %v2050, %v2052
        %v2055 = vpack.c.bf16 %v2054, %v2054
        %v2056 = vld [vmem:[%s27] sm:$0xf]
        %v2057 = vld [vmem:[%s27 + $0x4] sm:$0xf]
        %v2058 = vld [vmem:[%s27 + $0x8] sm:$0xf]
        %v2059 = vld [vmem:[%s27 + $0xc] sm:$0xf]
        %v2060 = vld [vmem:[%s29] sm:$0x1]
        %v2062 = vperm.slane %v2060, 0
        %v2068 = vunpack.c.l.b16 %v2056
        %v2069 = vunpack.c.l.b16 %v2057
        %v2070 = vunpack.c.l.b16 %v2058
        %v2071 = vunpack.c.l.b16 %v2059
        %v2072 = vpack.c.b16 %v2069, %v2068
        %v2073 = vpack.c.b16 %v2071, %v2070
        %v2077 = vsel %vm1210, %v2055, 0
        %2079 = vmatpush.bf16.msra.mxu0 0
        %2080 = vmatpush.bf16.msra.mxu0 0
        %2081 = vmatpush.bf16.msra.mxu0 0
        %2082 = vmatpush.bf16.msra.mxu0 0
        %2083 = vmatpush.bf16.msra.mxu0 0
        %2084 = vmatpush.bf16.msra.mxu0 0
        %2085 = vmatpush.bf16.msra.mxu0 %v2073
        %2086 = vmatpush.bf16.msra.mxu0 %v2072
        %2087 = vmatmul.bf16.gmra.mxu0 %v2077
        %v2088 = vpop.f32.mrf.mxu0
        %v2089 = vadd.f32 %v2062, %v2088
        %v2090 = vpop.f32.mrf.mxu0
        %2091 = vdwg.mxu0
        %v2092 = vld [vmem:[%s31] sm:$0xf]
        %v2093 = vld [vmem:[%s31 + $0x4] sm:$0xf]
        %v2094 = vld [vmem:[%s31 + $0x8] sm:$0xf]
        %v2095 = vld [vmem:[%s31 + $0xc] sm:$0xf]
        %v2096 = vld [vmem:[%s33] sm:$0x1]
        %v2098 = vperm.slane %v2096, 0
        %v2104 = vunpack.c.l.b16 %v2092
        %v2105 = vunpack.c.l.b16 %v2093
        %v2106 = vunpack.c.l.b16 %v2094
        %v2107 = vunpack.c.l.b16 %v2095
        %v2108 = vpack.c.b16 %v2105, %v2104
        %v2109 = vpack.c.b16 %v2107, %v2106
        %2112 = vmatpush.bf16.msra.mxu0 0
        %2113 = vmatpush.bf16.msra.mxu0 0
        %2114 = vmatpush.bf16.msra.mxu0 0
        %2115 = vmatpush.bf16.msra.mxu0 0
        %2116 = vmatpush.bf16.msra.mxu0 0
        %2117 = vmatpush.bf16.msra.mxu0 0
        %2118 = vmatpush.bf16.msra.mxu0 %v2109
        %2119 = vmatpush.bf16.msra.mxu0 %v2108
        %2120 = vmatmul.bf16.gmra.mxu0 %v1249
        %v2121 = vpop.f32.mrf.mxu0
        %v2122 = vadd.f32 %v2098, %v2121
        %v2123 = vpop.f32.mrf.mxu0
        %2124 = vdwg.mxu0
        %v2125 = vadd.f32 %v2089, %v2122
        %v2126 = vld [vmem:[%s1181] sm:$0xff]
        %v2127 = vpack.c.bf16 %v2126, %v2126
        %v2128 = vld [vmem:[%s35] sm:$0xf]
        %v2129 = vld [vmem:[%s35 + $0x4] sm:$0xf]
        %v2130 = vld [vmem:[%s35 + $0x8] sm:$0xf]
        %v2131 = vld [vmem:[%s35 + $0xc] sm:$0xf]
        %v2132 = vld [vmem:[%s37] sm:$0x1]
        %v2134 = vperm.slane %v2132, 0
        %v2140 = vunpack.c.l.b16 %v2128
        %v2141 = vunpack.c.l.b16 %v2129
        %v2142 = vunpack.c.l.b16 %v2130
        %v2143 = vunpack.c.l.b16 %v2131
        %v2144 = vpack.c.b16 %v2141, %v2140
        %v2145 = vpack.c.b16 %v2143, %v2142
        %v2149 = vsel %vm1210, %v2127, 0
        %2151 = vmatpush.bf16.msra.mxu0 0
        %2152 = vmatpush.bf16.msra.mxu0 0
        %2153 = vmatpush.bf16.msra.mxu0 0
        %2154 = vmatpush.bf16.msra.mxu0 0
        %2155 = vmatpush.bf16.msra.mxu0 0
        %2156 = vmatpush.bf16.msra.mxu0 0
        %2157 = vmatpush.bf16.msra.mxu0 %v2145
        %2158 = vmatpush.bf16.msra.mxu0 %v2144
        %2159 = vmatmul.bf16.gmra.mxu0 %v2149
        %v2160 = vpop.f32.mrf.mxu0
        %v2161 = vadd.f32 %v2134, %v2160
        %v2162 = vpop.f32.mrf.mxu0
        %2163 = vdwg.mxu0
        %v2164 = vld [vmem:[%s1168] sm:$0xff]
        %v2165 = vld [vmem:[%s1168 + $0x8] sm:$0xff]
        %v2166 = vpack.c.bf16 %v2165, %v2164
        %v2167 = vld [vmem:[%s39] sm:$0xf]
        %v2168 = vld [vmem:[%s39 + $0x4] sm:$0xf]
        %v2169 = vld [vmem:[%s39 + $0x8] sm:$0xf]
        %v2170 = vld [vmem:[%s39 + $0xc] sm:$0xf]
        %v2171 = vld [vmem:[%s41] sm:$0x1]
        %v2173 = vperm.slane %v2171, 0
        %v2179 = vunpack.c.l.b16 %v2167
        %v2180 = vunpack.c.l.b16 %v2168
        %v2181 = vunpack.c.l.b16 %v2169
        %v2182 = vunpack.c.l.b16 %v2170
        %v2183 = vpack.c.b16 %v2180, %v2179
        %v2184 = vpack.c.b16 %v2182, %v2181
        %v2188 = vsel %vm1210, %v2166, 0
        %2190 = vmatpush.bf16.msra.mxu0 0
        %2191 = vmatpush.bf16.msra.mxu0 0
        %2192 = vmatpush.bf16.msra.mxu0 0
        %2193 = vmatpush.bf16.msra.mxu0 0
        %2194 = vmatpush.bf16.msra.mxu0 0
        %2195 = vmatpush.bf16.msra.mxu0 0
        %2196 = vmatpush.bf16.msra.mxu0 %v2184
        %2197 = vmatpush.bf16.msra.mxu0 %v2183
        %2198 = vmatmul.bf16.gmra.mxu0 %v2188
        %v2199 = vpop.f32.mrf.mxu0
        %v2200 = vadd.f32 %v2173, %v2199
        %v2201 = vpop.f32.mrf.mxu0
        %v2202 = vadd.f32 %v2173, %v2201
        %2203 = vdwg.mxu0
        %v2204 = vld [vmem:[%s1173] sm:$0xff]
        %v2205 = vld [vmem:[%s1173 + $0x8] sm:$0xff]
        %v2206 = vpack.c.bf16 %v2205, %v2204
        %v2207 = vld [vmem:[%s43] sm:$0xf]
        %v2208 = vld [vmem:[%s43 + $0x4] sm:$0xf]
        %v2209 = vld [vmem:[%s43 + $0x8] sm:$0xf]
        %v2210 = vld [vmem:[%s43 + $0xc] sm:$0xf]
        %v2211 = vld [vmem:[%s45] sm:$0x1]
        %v2213 = vperm.slane %v2211, 0
        %v2219 = vunpack.c.l.b16 %v2207
        %v2220 = vunpack.c.l.b16 %v2208
        %v2221 = vunpack.c.l.b16 %v2209
        %v2222 = vunpack.c.l.b16 %v2210
        %v2223 = vpack.c.b16 %v2220, %v2219
        %v2224 = vpack.c.b16 %v2222, %v2221
        %v2228 = vsel %vm1210, %v2206, 0
        %2230 = vmatpush.bf16.msra.mxu0 0
        %2231 = vmatpush.bf16.msra.mxu0 0
        %2232 = vmatpush.bf16.msra.mxu0 0
        %2233 = vmatpush.bf16.msra.mxu0 0
        %2234 = vmatpush.bf16.msra.mxu0 0
        %2235 = vmatpush.bf16.msra.mxu0 0
        %2236 = vmatpush.bf16.msra.mxu0 %v2224
        %2237 = vmatpush.bf16.msra.mxu0 %v2223
        %2238 = vmatmul.bf16.gmra.mxu0 %v2228
        %v2239 = vpop.f32.mrf.mxu0
        %v2240 = vadd.f32 %v2213, %v2239
        %v2241 = vpop.f32.mrf.mxu0
        %v2242 = vadd.f32 %v2213, %v2241
        %2243 = vdwg.mxu0
        %v2244 = vadd.f32 %v2200, %v2240
        %v2245 = vadd.f32 %v2202, %v2242
        %2247 = vrot.lane.b32.xlu0 %v2125, 120
        %v2248 = vpop.permute.xlu0 %2247
        %2250 = vrot.lane.b32.xlu0 %v2125, 112
        %v2251 = vpop.permute.xlu0 %2250
        %2253 = vrot.lane.b32.xlu0 %v2125, 104
        %v2254 = vpop.permute.xlu0 %2253
        %v2256 = vrot.slane %v2251, 4
        %v2257 = vsel %vm1276, %v2256, %v2125
        %v2258 = vrot.slane %v2125, 4
        %v2259 = vsel %vm1276, %v2251, %v2258
        %v2261 = vunpack.c.l.s4 1983009808
        %v2262 = vunpack.c.0.s8 %v2261
        %v2263 = vperm.slane %v2257, %v2262
        %v2265 = vunpack.c.l.s4 1983009808
        %v2266 = vunpack.c.0.s8 %v2265
        %v2267 = vperm.slane %v2259, %v2266
        %v2268 = vrot.slane %v2254, 4
        %v2269 = vsel %vm1276, %v2268, %v2248
        %v2270 = vrot.slane %v2248, 4
        %v2271 = vsel %vm1276, %v2254, %v2270
        %v2273 = vunpack.c.l.s4 1983009808
        %v2274 = vunpack.c.0.s8 %v2273
        %v2275 = vperm.slane %v2269, %v2274
        %v2277 = vunpack.c.l.s4 1983009808
        %v2278 = vunpack.c.0.s8 %v2277
        %v2279 = vperm.slane %v2271, %v2278
        %v2280 = vrot.slane %v2275, 4
        %v2281 = vsel %vm1276, %v2280, %v2263
        %v2282 = vrot.slane %v2263, 4
        %v2283 = vsel %vm1276, %v2275, %v2282
        %v2285 = vunpack.c.l.s4 1934713408
        %v2286 = vunpack.c.0.s8 %v2285
        %v2287 = vperm.slane %v2281, %v2286
        %v2289 = vunpack.c.l.s4 1934713408
        %v2290 = vunpack.c.0.s8 %v2289
        %v2291 = vperm.slane %v2283, %v2290
        %v2292 = vrot.slane %v2279, 4
        %v2293 = vsel %vm1276, %v2292, %v2267
        %v2294 = vrot.slane %v2267, 4
        %v2295 = vsel %vm1276, %v2279, %v2294
        %v2297 = vunpack.c.l.s4 1934713408
        %v2298 = vunpack.c.0.s8 %v2297
        %v2299 = vperm.slane %v2293, %v2298
        %v2301 = vunpack.c.l.s4 1934713408
        %v2302 = vunpack.c.0.s8 %v2301
        %v2303 = vperm.slane %v2295, %v2302
        %v2304 = vrot.slane %v2287, 4
        %v2305 = vsel %vm1276, 0.0, %v2304
        %v2306 = vrot.slane %v2291, 4
        %v2307 = vsel %vm1276, 0.0, %v2306
        %v2308 = vrot.slane %v2299, 4
        %v2309 = vsel %vm1276, 0.0, %v2308
        %v2310 = vrot.slane %v2303, 4
        %v2311 = vsel %vm1276, 0.0, %v2310
        %v2312 = vsel %vm1276, %v2306, %v2287
        %v2314 = vunpack.c.l.s4 1983009808
        %v2315 = vunpack.c.0.s8 %v2314
        %v2316 = vperm.slane %v2312, %v2315
        %v2317 = vrot.slane %v2307, 4
        %v2318 = vsel %vm1276, %v2317, %v2305
        %v2320 = vunpack.c.l.s4 1983009808
        %v2321 = vunpack.c.0.s8 %v2320
        %v2322 = vperm.slane %v2318, %v2321
        %v2323 = vsel %vm1276, %v2310, %v2299
        %v2325 = vunpack.c.l.s4 1983009808
        %v2326 = vunpack.c.0.s8 %v2325
        %v2327 = vperm.slane %v2323, %v2326
        %v2328 = vrot.slane %v2311, 4
        %v2329 = vsel %vm1276, %v2328, %v2309
        %v2331 = vunpack.c.l.s4 1983009808
        %v2332 = vunpack.c.0.s8 %v2331
        %v2333 = vperm.slane %v2329, %v2332
        %v2334 = vrot.slane %v2322, 4
        %v2335 = vsel %vm1276, %v2334, %v2316
        %v2336 = vrot.slane %v2316, 4
        %v2337 = vsel %vm1276, %v2322, %v2336
        %v2339 = vunpack.c.l.s4 1934713408
        %v2340 = vunpack.c.0.s8 %v2339
        %v2341 = vperm.slane %v2335, %v2340
        %v2343 = vunpack.c.l.s4 1934713408
        %v2344 = vunpack.c.0.s8 %v2343
        %v2345 = vperm.slane %v2337, %v2344
        %v2346 = vrot.slane %v2333, 4
        %v2347 = vsel %vm1276, %v2346, %v2327
        %v2348 = vrot.slane %v2327, 4
        %v2349 = vsel %vm1276, %v2333, %v2348
        %v2351 = vunpack.c.l.s4 1934713408
        %v2352 = vunpack.c.0.s8 %v2351
        %v2353 = vperm.slane %v2347, %v2352
        %v2355 = vunpack.c.l.s4 1934713408
        %v2356 = vunpack.c.0.s8 %v2355
        %v2357 = vperm.slane %v2349, %v2356
        %v2358 = vrot.slane %v2353, 4
        %v2359 = vsel %vm1276, %v2358, %v2341
        %v2360 = vrot.slane %v2341, 4
        %v2361 = vsel %vm1276, %v2353, %v2360
        %v2362 = vrot.slane %v2357, 4
        %v2363 = vsel %vm1276, %v2362, %v2345
        %v2364 = vrot.slane %v2345, 4
        %v2365 = vsel %vm1276, %v2357, %v2364
        %2367 = vrot.lane.b32.xlu0 %v2161, 120
        %v2368 = vpop.permute.xlu0 %2367
        %2370 = vrot.lane.b32.xlu0 %v2161, 112
        %v2371 = vpop.permute.xlu0 %2370
        %2373 = vrot.lane.b32.xlu0 %v2161, 104
        %v2374 = vpop.permute.xlu0 %2373
        %v2376 = vrot.slane %v2371, 4
        %v2377 = vsel %vm1276, %v2376, %v2161
        %v2378 = vrot.slane %v2161, 4
        %v2379 = vsel %vm1276, %v2371, %v2378
        %v2381 = vunpack.c.l.s4 1983009808
        %v2382 = vunpack.c.0.s8 %v2381
        %v2383 = vperm.slane %v2377, %v2382
        %v2385 = vunpack.c.l.s4 1983009808
        %v2386 = vunpack.c.0.s8 %v2385
        %v2387 = vperm.slane %v2379, %v2386
        %v2388 = vrot.slane %v2374, 4
        %v2389 = vsel %vm1276, %v2388, %v2368
        %v2390 = vrot.slane %v2368, 4
        %v2391 = vsel %vm1276, %v2374, %v2390
        %v2393 = vunpack.c.l.s4 1983009808
        %v2394 = vunpack.c.0.s8 %v2393
        %v2395 = vperm.slane %v2389, %v2394
        %v2397 = vunpack.c.l.s4 1983009808
        %v2398 = vunpack.c.0.s8 %v2397
        %v2399 = vperm.slane %v2391, %v2398
        %v2400 = vrot.slane %v2395, 4
        %v2401 = vsel %vm1276, %v2400, %v2383
        %v2402 = vrot.slane %v2383, 4
        %v2403 = vsel %vm1276, %v2395, %v2402
        %v2405 = vunpack.c.l.s4 1934713408
        %v2406 = vunpack.c.0.s8 %v2405
        %v2407 = vperm.slane %v2401, %v2406
        %v2409 = vunpack.c.l.s4 1934713408
        %v2410 = vunpack.c.0.s8 %v2409
        %v2411 = vperm.slane %v2403, %v2410
        %v2412 = vrot.slane %v2399, 4
        %v2413 = vsel %vm1276, %v2412, %v2387
        %v2414 = vrot.slane %v2387, 4
        %v2415 = vsel %vm1276, %v2399, %v2414
        %v2417 = vunpack.c.l.s4 1934713408
        %v2418 = vunpack.c.0.s8 %v2417
        %v2419 = vperm.slane %v2413, %v2418
        %v2421 = vunpack.c.l.s4 1934713408
        %v2422 = vunpack.c.0.s8 %v2421
        %v2423 = vperm.slane %v2415, %v2422
        %v2424 = vrot.slane %v2407, 4
        %v2425 = vsel %vm1276, 0.0, %v2424
        %v2426 = vrot.slane %v2411, 4
        %v2427 = vsel %vm1276, 0.0, %v2426
        %v2428 = vrot.slane %v2419, 4
        %v2429 = vsel %vm1276, 0.0, %v2428
        %v2430 = vrot.slane %v2423, 4
        %v2431 = vsel %vm1276, 0.0, %v2430
        %v2432 = vsel %vm1276, %v2426, %v2407
        %v2434 = vunpack.c.l.s4 1983009808
        %v2435 = vunpack.c.0.s8 %v2434
        %v2436 = vperm.slane %v2432, %v2435
        %v2437 = vrot.slane %v2427, 4
        %v2438 = vsel %vm1276, %v2437, %v2425
        %v2440 = vunpack.c.l.s4 1983009808
        %v2441 = vunpack.c.0.s8 %v2440
        %v2442 = vperm.slane %v2438, %v2441
        %v2443 = vsel %vm1276, %v2430, %v2419
        %v2445 = vunpack.c.l.s4 1983009808
        %v2446 = vunpack.c.0.s8 %v2445
        %v2447 = vperm.slane %v2443, %v2446
        %v2448 = vrot.slane %v2431, 4
        %v2449 = vsel %vm1276, %v2448, %v2429
        %v2451 = vunpack.c.l.s4 1983009808
        %v2452 = vunpack.c.0.s8 %v2451
        %v2453 = vperm.slane %v2449, %v2452
        %v2454 = vrot.slane %v2442, 4
        %v2455 = vsel %vm1276, %v2454, %v2436
        %v2456 = vrot.slane %v2436, 4
        %v2457 = vsel %vm1276, %v2442, %v2456
        %v2459 = vunpack.c.l.s4 1934713408
        %v2460 = vunpack.c.0.s8 %v2459
        %v2461 = vperm.slane %v2455, %v2460
        %v2463 = vunpack.c.l.s4 1934713408
        %v2464 = vunpack.c.0.s8 %v2463
        %v2465 = vperm.slane %v2457, %v2464
        %v2466 = vrot.slane %v2453, 4
        %v2467 = vsel %vm1276, %v2466, %v2447
        %v2468 = vrot.slane %v2447, 4
        %v2469 = vsel %vm1276, %v2453, %v2468
        %v2471 = vunpack.c.l.s4 1934713408
        %v2472 = vunpack.c.0.s8 %v2471
        %v2473 = vperm.slane %v2467, %v2472
        %v2475 = vunpack.c.l.s4 1934713408
        %v2476 = vunpack.c.0.s8 %v2475
        %v2477 = vperm.slane %v2469, %v2476
        %v2478 = vrot.slane %v2473, 4
        %v2479 = vsel %vm1276, %v2478, %v2461
        %v2480 = vrot.slane %v2461, 4
        %v2481 = vsel %vm1276, %v2473, %v2480
        %v2482 = vrot.slane %v2477, 4
        %v2483 = vsel %vm1276, %v2482, %v2465
        %v2484 = vrot.slane %v2465, 4
        %v2485 = vsel %vm1276, %v2477, %v2484
        %2490 = vrot.lane.b32.xlu0 %v2479, 8
        %v2491 = vpop.permute.xlu0 %2490
        %2492 = vrot.lane.b32.xlu0 %v2481, 8
        %v2493 = vpop.permute.xlu0 %2492
        %2494 = vrot.lane.b32.xlu0 %v2483, 8
        %v2495 = vpop.permute.xlu0 %2494
        %2496 = vrot.lane.b32.xlu0 %v2485, 8
        %v2497 = vpop.permute.xlu0 %2496
        %v2502 = vsel %vm1645, %v2359, %v2491
        %v2503 = vsel %vm1645, %v2361, %v2493
        %v2504 = vsel %vm1645, %v2363, %v2495
        %v2505 = vsel %vm1645, %v2365, %v2497
        %2508 = vrot.lane.b32.xlu0 %v2244, 120
        %v2509 = vpop.permute.xlu0 %2508
        %2510 = vrot.lane.b32.xlu0 %v2245, 120
        %v2511 = vpop.permute.xlu0 %2510
        %2514 = vrot.lane.b32.xlu0 %v2244, 112
        %v2515 = vpop.permute.xlu0 %2514
        %2516 = vrot.lane.b32.xlu0 %v2245, 112
        %v2517 = vpop.permute.xlu0 %2516
        %2520 = vrot.lane.b32.xlu0 %v2244, 104
        %v2521 = vpop.permute.xlu0 %2520
        %2522 = vrot.lane.b32.xlu0 %v2245, 104
        %v2523 = vpop.permute.xlu0 %2522
        %v2526 = vrot.slane %v2515, 4
        %v2527 = vsel %vm1276, %v2526, %v2244
        %v2528 = vrot.slane %v2244, 4
        %v2529 = vsel %vm1276, %v2515, %v2528
        %v2531 = vunpack.c.l.s4 1983009808
        %v2532 = vunpack.c.0.s8 %v2531
        %v2533 = vperm.slane %v2527, %v2532
        %v2535 = vunpack.c.l.s4 1983009808
        %v2536 = vunpack.c.0.s8 %v2535
        %v2537 = vperm.slane %v2529, %v2536
        %v2538 = vrot.slane %v2521, 4
        %v2539 = vsel %vm1276, %v2538, %v2509
        %v2540 = vrot.slane %v2509, 4
        %v2541 = vsel %vm1276, %v2521, %v2540
        %v2543 = vunpack.c.l.s4 1983009808
        %v2544 = vunpack.c.0.s8 %v2543
        %v2545 = vperm.slane %v2539, %v2544
        %v2547 = vunpack.c.l.s4 1983009808
        %v2548 = vunpack.c.0.s8 %v2547
        %v2549 = vperm.slane %v2541, %v2548
        %v2550 = vrot.slane %v2545, 4
        %v2551 = vsel %vm1276, %v2550, %v2533
        %v2552 = vrot.slane %v2533, 4
        %v2553 = vsel %vm1276, %v2545, %v2552
        %v2555 = vunpack.c.l.s4 1934713408
        %v2556 = vunpack.c.0.s8 %v2555
        %v2557 = vperm.slane %v2551, %v2556
        %v2559 = vunpack.c.l.s4 1934713408
        %v2560 = vunpack.c.0.s8 %v2559
        %v2561 = vperm.slane %v2553, %v2560
        %v2562 = vrot.slane %v2549, 4
        %v2563 = vsel %vm1276, %v2562, %v2537
        %v2564 = vrot.slane %v2537, 4
        %v2565 = vsel %vm1276, %v2549, %v2564
        %v2567 = vunpack.c.l.s4 1934713408
        %v2568 = vunpack.c.0.s8 %v2567
        %v2569 = vperm.slane %v2563, %v2568
        %v2571 = vunpack.c.l.s4 1934713408
        %v2572 = vunpack.c.0.s8 %v2571
        %v2573 = vperm.slane %v2565, %v2572
        %v2574 = vrot.slane %v2557, 4
        %v2575 = vsel %vm1276, 0.0, %v2574
        %v2576 = vrot.slane %v2561, 4
        %v2577 = vsel %vm1276, 0.0, %v2576
        %v2578 = vrot.slane %v2569, 4
        %v2579 = vsel %vm1276, 0.0, %v2578
        %v2580 = vrot.slane %v2573, 4
        %v2581 = vsel %vm1276, 0.0, %v2580
        %v2582 = vrot.slane %v2517, 4
        %v2583 = vsel %vm1276, %v2582, %v2245
        %v2584 = vrot.slane %v2245, 4
        %v2585 = vsel %vm1276, %v2517, %v2584
        %v2587 = vunpack.c.l.s4 1983009808
        %v2588 = vunpack.c.0.s8 %v2587
        %v2589 = vperm.slane %v2583, %v2588
        %v2591 = vunpack.c.l.s4 1983009808
        %v2592 = vunpack.c.0.s8 %v2591
        %v2593 = vperm.slane %v2585, %v2592
        %v2594 = vrot.slane %v2523, 4
        %v2595 = vsel %vm1276, %v2594, %v2511
        %v2596 = vrot.slane %v2511, 4
        %v2597 = vsel %vm1276, %v2523, %v2596
        %v2599 = vunpack.c.l.s4 1983009808
        %v2600 = vunpack.c.0.s8 %v2599
        %v2601 = vperm.slane %v2595, %v2600
        %v2603 = vunpack.c.l.s4 1983009808
        %v2604 = vunpack.c.0.s8 %v2603
        %v2605 = vperm.slane %v2597, %v2604
        %v2606 = vrot.slane %v2601, 4
        %v2607 = vsel %vm1276, %v2606, %v2589
        %v2608 = vrot.slane %v2589, 4
        %v2609 = vsel %vm1276, %v2601, %v2608
        %v2611 = vunpack.c.l.s4 1934713408
        %v2612 = vunpack.c.0.s8 %v2611
        %v2613 = vperm.slane %v2607, %v2612
        %v2615 = vunpack.c.l.s4 1934713408
        %v2616 = vunpack.c.0.s8 %v2615
        %v2617 = vperm.slane %v2609, %v2616
        %v2618 = vrot.slane %v2605, 4
        %v2619 = vsel %vm1276, %v2618, %v2593
        %v2620 = vrot.slane %v2593, 4
        %v2621 = vsel %vm1276, %v2605, %v2620
        %v2623 = vunpack.c.l.s4 1934713408
        %v2624 = vunpack.c.0.s8 %v2623
        %v2625 = vperm.slane %v2619, %v2624
        %v2627 = vunpack.c.l.s4 1934713408
        %v2628 = vunpack.c.0.s8 %v2627
        %v2629 = vperm.slane %v2621, %v2628
        %v2630 = vrot.slane %v2613, 4
        %v2631 = vsel %vm1276, 0.0, %v2630
        %v2632 = vrot.slane %v2617, 4
        %v2633 = vsel %vm1276, 0.0, %v2632
        %v2634 = vrot.slane %v2625, 4
        %v2635 = vsel %vm1276, 0.0, %v2634
        %v2636 = vrot.slane %v2629, 4
        %v2637 = vsel %vm1276, 0.0, %v2636
        %v2638 = vsel %vm1276, %v2576, %v2557
        %v2640 = vunpack.c.l.s4 1983009808
        %v2641 = vunpack.c.0.s8 %v2640
        %v2642 = vperm.slane %v2638, %v2641
        %v2643 = vrot.slane %v2577, 4
        %v2644 = vsel %vm1276, %v2643, %v2575
        %v2646 = vunpack.c.l.s4 1983009808
        %v2647 = vunpack.c.0.s8 %v2646
        %v2648 = vperm.slane %v2644, %v2647
        %v2649 = vsel %vm1276, %v2580, %v2569
        %v2651 = vunpack.c.l.s4 1983009808
        %v2652 = vunpack.c.0.s8 %v2651
        %v2653 = vperm.slane %v2649, %v2652
        %v2654 = vrot.slane %v2581, 4
        %v2655 = vsel %vm1276, %v2654, %v2579
        %v2657 = vunpack.c.l.s4 1983009808
        %v2658 = vunpack.c.0.s8 %v2657
        %v2659 = vperm.slane %v2655, %v2658
        %v2660 = vrot.slane %v2648, 4
        %v2661 = vsel %vm1276, %v2660, %v2642
        %v2662 = vrot.slane %v2642, 4
        %v2663 = vsel %vm1276, %v2648, %v2662
        %v2665 = vunpack.c.l.s4 1934713408
        %v2666 = vunpack.c.0.s8 %v2665
        %v2667 = vperm.slane %v2661, %v2666
        %v2669 = vunpack.c.l.s4 1934713408
        %v2670 = vunpack.c.0.s8 %v2669
        %v2671 = vperm.slane %v2663, %v2670
        %v2672 = vrot.slane %v2659, 4
        %v2673 = vsel %vm1276, %v2672, %v2653
        %v2674 = vrot.slane %v2653, 4
        %v2675 = vsel %vm1276, %v2659, %v2674
        %v2677 = vunpack.c.l.s4 1934713408
        %v2678 = vunpack.c.0.s8 %v2677
        %v2679 = vperm.slane %v2673, %v2678
        %v2681 = vunpack.c.l.s4 1934713408
        %v2682 = vunpack.c.0.s8 %v2681
        %v2683 = vperm.slane %v2675, %v2682
        %v2684 = vrot.slane %v2679, 4
        %v2685 = vsel %vm1276, %v2684, %v2667
        %v2686 = vrot.slane %v2667, 4
        %v2687 = vsel %vm1276, %v2679, %v2686
        %v2688 = vrot.slane %v2683, 4
        %v2689 = vsel %vm1276, %v2688, %v2671
        %v2690 = vrot.slane %v2671, 4
        %v2691 = vsel %vm1276, %v2683, %v2690
        %v2692 = vsel %vm1276, %v2632, %v2613
        %v2694 = vunpack.c.l.s4 1983009808
        %v2695 = vunpack.c.0.s8 %v2694
        %v2696 = vperm.slane %v2692, %v2695
        %v2697 = vrot.slane %v2633, 4
        %v2698 = vsel %vm1276, %v2697, %v2631
        %v2700 = vunpack.c.l.s4 1983009808
        %v2701 = vunpack.c.0.s8 %v2700
        %v2702 = vperm.slane %v2698, %v2701
        %v2703 = vsel %vm1276, %v2636, %v2625
        %v2705 = vunpack.c.l.s4 1983009808
        %v2706 = vunpack.c.0.s8 %v2705
        %v2707 = vperm.slane %v2703, %v2706
        %v2708 = vrot.slane %v2637, 4
        %v2709 = vsel %vm1276, %v2708, %v2635
        %v2711 = vunpack.c.l.s4 1983009808
        %v2712 = vunpack.c.0.s8 %v2711
        %v2713 = vperm.slane %v2709, %v2712
        %v2714 = vrot.slane %v2702, 4
        %v2715 = vsel %vm1276, %v2714, %v2696
        %v2716 = vrot.slane %v2696, 4
        %v2717 = vsel %vm1276, %v2702, %v2716
        %v2719 = vunpack.c.l.s4 1934713408
        %v2720 = vunpack.c.0.s8 %v2719
        %v2721 = vperm.slane %v2715, %v2720
        %v2723 = vunpack.c.l.s4 1934713408
        %v2724 = vunpack.c.0.s8 %v2723
        %v2725 = vperm.slane %v2717, %v2724
        %v2726 = vrot.slane %v2713, 4
        %v2727 = vsel %vm1276, %v2726, %v2707
        %v2728 = vrot.slane %v2707, 4
        %v2729 = vsel %vm1276, %v2713, %v2728
        %v2731 = vunpack.c.l.s4 1934713408
        %v2732 = vunpack.c.0.s8 %v2731
        %v2733 = vperm.slane %v2727, %v2732
        %v2735 = vunpack.c.l.s4 1934713408
        %v2736 = vunpack.c.0.s8 %v2735
        %v2737 = vperm.slane %v2729, %v2736
        %v2738 = vrot.slane %v2733, 4
        %v2739 = vsel %vm1276, %v2738, %v2721
        %v2740 = vrot.slane %v2721, 4
        %v2741 = vsel %vm1276, %v2733, %v2740
        %v2742 = vrot.slane %v2737, 4
        %v2743 = vsel %vm1276, %v2742, %v2725
        %v2744 = vrot.slane %v2725, 4
        %v2745 = vsel %vm1276, %v2737, %v2744
        %2748 = vrot.lane.b32.xlu0 %v2240, 120
        %v2749 = vpop.permute.xlu0 %2748
        %2750 = vrot.lane.b32.xlu0 %v2242, 120
        %v2751 = vpop.permute.xlu0 %2750
        %2754 = vrot.lane.b32.xlu0 %v2240, 112
        %v2755 = vpop.permute.xlu0 %2754
        %2756 = vrot.lane.b32.xlu0 %v2242, 112
        %v2757 = vpop.permute.xlu0 %2756
        %2760 = vrot.lane.b32.xlu0 %v2240, 104
        %v2761 = vpop.permute.xlu0 %2760
        %2762 = vrot.lane.b32.xlu0 %v2242, 104
        %v2763 = vpop.permute.xlu0 %2762
        %v2766 = vrot.slane %v2755, 4
        %v2767 = vsel %vm1276, %v2766, %v2240
        %v2768 = vrot.slane %v2240, 4
        %v2769 = vsel %vm1276, %v2755, %v2768
        %v2771 = vunpack.c.l.s4 1983009808
        %v2772 = vunpack.c.0.s8 %v2771
        %v2773 = vperm.slane %v2767, %v2772
        %v2775 = vunpack.c.l.s4 1983009808
        %v2776 = vunpack.c.0.s8 %v2775
        %v2777 = vperm.slane %v2769, %v2776
        %v2778 = vrot.slane %v2761, 4
        %v2779 = vsel %vm1276, %v2778, %v2749
        %v2780 = vrot.slane %v2749, 4
        %v2781 = vsel %vm1276, %v2761, %v2780
        %v2783 = vunpack.c.l.s4 1983009808
        %v2784 = vunpack.c.0.s8 %v2783
        %v2785 = vperm.slane %v2779, %v2784
        %v2787 = vunpack.c.l.s4 1983009808
        %v2788 = vunpack.c.0.s8 %v2787
        %v2789 = vperm.slane %v2781, %v2788
        %v2790 = vrot.slane %v2785, 4
        %v2791 = vsel %vm1276, %v2790, %v2773
        %v2792 = vrot.slane %v2773, 4
        %v2793 = vsel %vm1276, %v2785, %v2792
        %v2795 = vunpack.c.l.s4 1934713408
        %v2796 = vunpack.c.0.s8 %v2795
        %v2797 = vperm.slane %v2791, %v2796
        %v2799 = vunpack.c.l.s4 1934713408
        %v2800 = vunpack.c.0.s8 %v2799
        %v2801 = vperm.slane %v2793, %v2800
        %v2802 = vrot.slane %v2789, 4
        %v2803 = vsel %vm1276, %v2802, %v2777
        %v2804 = vrot.slane %v2777, 4
        %v2805 = vsel %vm1276, %v2789, %v2804
        %v2807 = vunpack.c.l.s4 1934713408
        %v2808 = vunpack.c.0.s8 %v2807
        %v2809 = vperm.slane %v2803, %v2808
        %v2811 = vunpack.c.l.s4 1934713408
        %v2812 = vunpack.c.0.s8 %v2811
        %v2813 = vperm.slane %v2805, %v2812
        %v2814 = vrot.slane %v2797, 4
        %v2815 = vsel %vm1276, 0.0, %v2814
        %v2816 = vrot.slane %v2801, 4
        %v2817 = vsel %vm1276, 0.0, %v2816
        %v2818 = vrot.slane %v2809, 4
        %v2819 = vsel %vm1276, 0.0, %v2818
        %v2820 = vrot.slane %v2813, 4
        %v2821 = vsel %vm1276, 0.0, %v2820
        %v2822 = vrot.slane %v2757, 4
        %v2823 = vsel %vm1276, %v2822, %v2242
        %v2824 = vrot.slane %v2242, 4
        %v2825 = vsel %vm1276, %v2757, %v2824
        %v2827 = vunpack.c.l.s4 1983009808
        %v2828 = vunpack.c.0.s8 %v2827
        %v2829 = vperm.slane %v2823, %v2828
        %v2831 = vunpack.c.l.s4 1983009808
        %v2832 = vunpack.c.0.s8 %v2831
        %v2833 = vperm.slane %v2825, %v2832
        %v2834 = vrot.slane %v2763, 4
        %v2835 = vsel %vm1276, %v2834, %v2751
        %v2836 = vrot.slane %v2751, 4
        %v2837 = vsel %vm1276, %v2763, %v2836
        %v2839 = vunpack.c.l.s4 1983009808
        %v2840 = vunpack.c.0.s8 %v2839
        %v2841 = vperm.slane %v2835, %v2840
        %v2843 = vunpack.c.l.s4 1983009808
        %v2844 = vunpack.c.0.s8 %v2843
        %v2845 = vperm.slane %v2837, %v2844
        %v2846 = vrot.slane %v2841, 4
        %v2847 = vsel %vm1276, %v2846, %v2829
        %v2848 = vrot.slane %v2829, 4
        %v2849 = vsel %vm1276, %v2841, %v2848
        %v2851 = vunpack.c.l.s4 1934713408
        %v2852 = vunpack.c.0.s8 %v2851
        %v2853 = vperm.slane %v2847, %v2852
        %v2855 = vunpack.c.l.s4 1934713408
        %v2856 = vunpack.c.0.s8 %v2855
        %v2857 = vperm.slane %v2849, %v2856
        %v2858 = vrot.slane %v2845, 4
        %v2859 = vsel %vm1276, %v2858, %v2833
        %v2860 = vrot.slane %v2833, 4
        %v2861 = vsel %vm1276, %v2845, %v2860
        %v2863 = vunpack.c.l.s4 1934713408
        %v2864 = vunpack.c.0.s8 %v2863
        %v2865 = vperm.slane %v2859, %v2864
        %v2867 = vunpack.c.l.s4 1934713408
        %v2868 = vunpack.c.0.s8 %v2867
        %v2869 = vperm.slane %v2861, %v2868
        %v2870 = vrot.slane %v2853, 4
        %v2871 = vsel %vm1276, 0.0, %v2870
        %v2872 = vrot.slane %v2857, 4
        %v2873 = vsel %vm1276, 0.0, %v2872
        %v2874 = vrot.slane %v2865, 4
        %v2875 = vsel %vm1276, 0.0, %v2874
        %v2876 = vrot.slane %v2869, 4
        %v2877 = vsel %vm1276, 0.0, %v2876
        %v2878 = vsel %vm1276, %v2816, %v2797
        %v2880 = vunpack.c.l.s4 1983009808
        %v2881 = vunpack.c.0.s8 %v2880
        %v2882 = vperm.slane %v2878, %v2881
        %v2883 = vrot.slane %v2817, 4
        %v2884 = vsel %vm1276, %v2883, %v2815
        %v2886 = vunpack.c.l.s4 1983009808
        %v2887 = vunpack.c.0.s8 %v2886
        %v2888 = vperm.slane %v2884, %v2887
        %v2889 = vsel %vm1276, %v2820, %v2809
        %v2891 = vunpack.c.l.s4 1983009808
        %v2892 = vunpack.c.0.s8 %v2891
        %v2893 = vperm.slane %v2889, %v2892
        %v2894 = vrot.slane %v2821, 4
        %v2895 = vsel %vm1276, %v2894, %v2819
        %v2897 = vunpack.c.l.s4 1983009808
        %v2898 = vunpack.c.0.s8 %v2897
        %v2899 = vperm.slane %v2895, %v2898
        %v2900 = vrot.slane %v2888, 4
        %v2901 = vsel %vm1276, %v2900, %v2882
        %v2902 = vrot.slane %v2882, 4
        %v2903 = vsel %vm1276, %v2888, %v2902
        %v2905 = vunpack.c.l.s4 1934713408
        %v2906 = vunpack.c.0.s8 %v2905
        %v2907 = vperm.slane %v2901, %v2906
        %v2909 = vunpack.c.l.s4 1934713408
        %v2910 = vunpack.c.0.s8 %v2909
        %v2911 = vperm.slane %v2903, %v2910
        %v2912 = vrot.slane %v2899, 4
        %v2913 = vsel %vm1276, %v2912, %v2893
        %v2914 = vrot.slane %v2893, 4
        %v2915 = vsel %vm1276, %v2899, %v2914
        %v2917 = vunpack.c.l.s4 1934713408
        %v2918 = vunpack.c.0.s8 %v2917
        %v2919 = vperm.slane %v2913, %v2918
        %v2921 = vunpack.c.l.s4 1934713408
        %v2922 = vunpack.c.0.s8 %v2921
        %v2923 = vperm.slane %v2915, %v2922
        %v2924 = vrot.slane %v2919, 4
        %v2925 = vsel %vm1276, %v2924, %v2907
        %v2926 = vrot.slane %v2907, 4
        %v2927 = vsel %vm1276, %v2919, %v2926
        %v2928 = vrot.slane %v2923, 4
        %v2929 = vsel %vm1276, %v2928, %v2911
        %v2930 = vrot.slane %v2911, 4
        %v2931 = vsel %vm1276, %v2923, %v2930
        %v2932 = vsel %vm1276, %v2872, %v2853
        %v2934 = vunpack.c.l.s4 1983009808
        %v2935 = vunpack.c.0.s8 %v2934
        %v2936 = vperm.slane %v2932, %v2935
        %v2937 = vrot.slane %v2873, 4
        %v2938 = vsel %vm1276, %v2937, %v2871
        %v2940 = vunpack.c.l.s4 1983009808
        %v2941 = vunpack.c.0.s8 %v2940
        %v2942 = vperm.slane %v2938, %v2941
        %v2943 = vsel %vm1276, %v2876, %v2865
        %v2945 = vunpack.c.l.s4 1983009808
        %v2946 = vunpack.c.0.s8 %v2945
        %v2947 = vperm.slane %v2943, %v2946
        %v2948 = vrot.slane %v2877, 4
        %v2949 = vsel %vm1276, %v2948, %v2875
        %v2951 = vunpack.c.l.s4 1983009808
        %v2952 = vunpack.c.0.s8 %v2951
        %v2953 = vperm.slane %v2949, %v2952
        %v2954 = vrot.slane %v2942, 4
        %v2955 = vsel %vm1276, %v2954, %v2936
        %v2956 = vrot.slane %v2936, 4
        %v2957 = vsel %vm1276, %v2942, %v2956
        %v2959 = vunpack.c.l.s4 1934713408
        %v2960 = vunpack.c.0.s8 %v2959
        %v2961 = vperm.slane %v2955, %v2960
        %v2963 = vunpack.c.l.s4 1934713408
        %v2964 = vunpack.c.0.s8 %v2963
        %v2965 = vperm.slane %v2957, %v2964
        %v2966 = vrot.slane %v2953, 4
        %v2967 = vsel %vm1276, %v2966, %v2947
        %v2968 = vrot.slane %v2947, 4
        %v2969 = vsel %vm1276, %v2953, %v2968
        %v2971 = vunpack.c.l.s4 1934713408
        %v2972 = vunpack.c.0.s8 %v2971
        %v2973 = vperm.slane %v2967, %v2972
        %v2975 = vunpack.c.l.s4 1934713408
        %v2976 = vunpack.c.0.s8 %v2975
        %v2977 = vperm.slane %v2969, %v2976
        %v2978 = vrot.slane %v2973, 4
        %v2979 = vsel %vm1276, %v2978, %v2961
        %v2980 = vrot.slane %v2961, 4
        %v2981 = vsel %vm1276, %v2973, %v2980
        %v2982 = vrot.slane %v2977, 4
        %v2983 = vsel %vm1276, %v2982, %v2965
        %v2984 = vrot.slane %v2965, 4
        %v2985 = vsel %vm1276, %v2977, %v2984
        %2994 = vrot.lane.b32.xlu0 %v2925, 8
        %v2995 = vpop.permute.xlu0 %2994
        %2996 = vrot.lane.b32.xlu0 %v2979, 8
        %v2997 = vpop.permute.xlu0 %2996
        %2998 = vrot.lane.b32.xlu0 %v2927, 8
        %v2999 = vpop.permute.xlu0 %2998
        %3000 = vrot.lane.b32.xlu0 %v2981, 8
        %v3001 = vpop.permute.xlu0 %3000
        %3002 = vrot.lane.b32.xlu0 %v2929, 8
        %v3003 = vpop.permute.xlu0 %3002
        %3004 = vrot.lane.b32.xlu0 %v2983, 8
        %v3005 = vpop.permute.xlu0 %3004
        %3006 = vrot.lane.b32.xlu0 %v2931, 8
        %v3007 = vpop.permute.xlu0 %3006
        %3008 = vrot.lane.b32.xlu0 %v2985, 8
        %v3009 = vpop.permute.xlu0 %3008
        %v3018 = vsel %vm1645, %v2685, %v2995
        %v3019 = vsel %vm1645, %v2739, %v2997
        %v3020 = vsel %vm1645, %v2687, %v2999
        %v3021 = vsel %vm1645, %v2741, %v3001
        %v3022 = vsel %vm1645, %v2689, %v3003
        %v3023 = vsel %vm1645, %v2743, %v3005
        %v3024 = vsel %vm1645, %v2691, %v3007
        %v3025 = vsel %vm1645, %v2745, %v3009
        %3028 = vrot.lane.b32.xlu0 %v2200, 120
        %v3029 = vpop.permute.xlu0 %3028
        %3030 = vrot.lane.b32.xlu0 %v2202, 120
        %v3031 = vpop.permute.xlu0 %3030
        %3032 = vrot.lane.b32.xlu0 %v2200, 112
        %v3033 = vpop.permute.xlu0 %3032
        %3034 = vrot.lane.b32.xlu0 %v2202, 112
        %v3035 = vpop.permute.xlu0 %3034
        %3036 = vrot.lane.b32.xlu0 %v2200, 104
        %v3037 = vpop.permute.xlu0 %3036
        %3038 = vrot.lane.b32.xlu0 %v2202, 104
        %v3039 = vpop.permute.xlu0 %3038
        %3040 = vrot.lane.b32.xlu0 %v2200, 96
        %v3041 = vpop.permute.xlu0 %3040
        %3042 = vrot.lane.b32.xlu0 %v2202, 96
        %v3043 = vpop.permute.xlu0 %3042
        %3044 = vrot.lane.b32.xlu0 %v3029, 96
        %v3045 = vpop.permute.xlu0 %3044
        %3046 = vrot.lane.b32.xlu0 %v3031, 96
        %v3047 = vpop.permute.xlu0 %3046
        %3048 = vrot.lane.b32.xlu0 %v3033, 96
        %v3049 = vpop.permute.xlu0 %3048
        %3050 = vrot.lane.b32.xlu0 %v3035, 96
        %v3051 = vpop.permute.xlu0 %3050
        %3052 = vrot.lane.b32.xlu0 %v3037, 96
        %v3053 = vpop.permute.xlu0 %3052
        %3054 = vrot.lane.b32.xlu0 %v3039, 96
        %v3055 = vpop.permute.xlu0 %3054
        %v3064 = vrot.slane %v3049, 4
        %v3065 = vsel %vm1276, %v3064, %v3041
        %v3066 = vrot.slane %v3041, 4
        %v3067 = vsel %vm1276, %v3049, %v3066
        %v3069 = vunpack.c.l.s4 1983009808
        %v3070 = vunpack.c.0.s8 %v3069
        %v3071 = vperm.slane %v3065, %v3070
        %v3073 = vunpack.c.l.s4 1983009808
        %v3074 = vunpack.c.0.s8 %v3073
        %v3075 = vperm.slane %v3067, %v3074
        %v3076 = vrot.slane %v3053, 4
        %v3077 = vsel %vm1276, %v3076, %v3045
        %v3078 = vrot.slane %v3045, 4
        %v3079 = vsel %vm1276, %v3053, %v3078
        %v3081 = vunpack.c.l.s4 1983009808
        %v3082 = vunpack.c.0.s8 %v3081
        %v3083 = vperm.slane %v3077, %v3082
        %v3085 = vunpack.c.l.s4 1983009808
        %v3086 = vunpack.c.0.s8 %v3085
        %v3087 = vperm.slane %v3079, %v3086
        %v3088 = vrot.slane %v3083, 4
        %v3089 = vsel %vm1276, %v3088, %v3071
        %v3090 = vrot.slane %v3071, 4
        %v3091 = vsel %vm1276, %v3083, %v3090
        %v3093 = vunpack.c.l.s4 1934713408
        %v3094 = vunpack.c.0.s8 %v3093
        %v3095 = vperm.slane %v3089, %v3094
        %v3097 = vunpack.c.l.s4 1934713408
        %v3098 = vunpack.c.0.s8 %v3097
        %v3099 = vperm.slane %v3091, %v3098
        %v3100 = vrot.slane %v3087, 4
        %v3101 = vsel %vm1276, %v3100, %v3075
        %v3102 = vrot.slane %v3075, 4
        %v3103 = vsel %vm1276, %v3087, %v3102
        %v3105 = vunpack.c.l.s4 1934713408
        %v3106 = vunpack.c.0.s8 %v3105
        %v3107 = vperm.slane %v3101, %v3106
        %v3109 = vunpack.c.l.s4 1934713408
        %v3110 = vunpack.c.0.s8 %v3109
        %v3111 = vperm.slane %v3103, %v3110
        %v3112 = vrot.slane %v3095, 4
        %v3113 = vsel %vm1276, 0.0, %v3112
        %v3114 = vrot.slane %v3099, 4
        %v3115 = vsel %vm1276, 0.0, %v3114
        %v3116 = vrot.slane %v3107, 4
        %v3117 = vsel %vm1276, 0.0, %v3116
        %v3118 = vrot.slane %v3111, 4
        %v3119 = vsel %vm1276, 0.0, %v3118
        %v3120 = vrot.slane %v3051, 4
        %v3121 = vsel %vm1276, %v3120, %v3043
        %v3122 = vrot.slane %v3043, 4
        %v3123 = vsel %vm1276, %v3051, %v3122
        %v3125 = vunpack.c.l.s4 1983009808
        %v3126 = vunpack.c.0.s8 %v3125
        %v3127 = vperm.slane %v3121, %v3126
        %v3129 = vunpack.c.l.s4 1983009808
        %v3130 = vunpack.c.0.s8 %v3129
        %v3131 = vperm.slane %v3123, %v3130
        %v3132 = vrot.slane %v3055, 4
        %v3133 = vsel %vm1276, %v3132, %v3047
        %v3134 = vrot.slane %v3047, 4
        %v3135 = vsel %vm1276, %v3055, %v3134
        %v3137 = vunpack.c.l.s4 1983009808
        %v3138 = vunpack.c.0.s8 %v3137
        %v3139 = vperm.slane %v3133, %v3138
        %v3141 = vunpack.c.l.s4 1983009808
        %v3142 = vunpack.c.0.s8 %v3141
        %v3143 = vperm.slane %v3135, %v3142
        %v3144 = vrot.slane %v3139, 4
        %v3145 = vsel %vm1276, %v3144, %v3127
        %v3146 = vrot.slane %v3127, 4
        %v3147 = vsel %vm1276, %v3139, %v3146
        %v3149 = vunpack.c.l.s4 1934713408
        %v3150 = vunpack.c.0.s8 %v3149
        %v3151 = vperm.slane %v3145, %v3150
        %v3153 = vunpack.c.l.s4 1934713408
        %v3154 = vunpack.c.0.s8 %v3153
        %v3155 = vperm.slane %v3147, %v3154
        %v3156 = vrot.slane %v3143, 4
        %v3157 = vsel %vm1276, %v3156, %v3131
        %v3158 = vrot.slane %v3131, 4
        %v3159 = vsel %vm1276, %v3143, %v3158
        %v3161 = vunpack.c.l.s4 1934713408
        %v3162 = vunpack.c.0.s8 %v3161
        %v3163 = vperm.slane %v3157, %v3162
        %v3165 = vunpack.c.l.s4 1934713408
        %v3166 = vunpack.c.0.s8 %v3165
        %v3167 = vperm.slane %v3159, %v3166
        %v3168 = vrot.slane %v3151, 4
        %v3169 = vsel %vm1276, 0.0, %v3168
        %v3170 = vrot.slane %v3155, 4
        %v3171 = vsel %vm1276, 0.0, %v3170
        %v3172 = vrot.slane %v3163, 4
        %v3173 = vsel %vm1276, 0.0, %v3172
        %v3174 = vrot.slane %v3167, 4
        %v3175 = vsel %vm1276, 0.0, %v3174
        %v3176 = vsel %vm1276, %v3114, %v3095
        %v3178 = vunpack.c.l.s4 1983009808
        %v3179 = vunpack.c.0.s8 %v3178
        %v3180 = vperm.slane %v3176, %v3179
        %v3181 = vrot.slane %v3115, 4
        %v3182 = vsel %vm1276, %v3181, %v3113
        %v3184 = vunpack.c.l.s4 1983009808
        %v3185 = vunpack.c.0.s8 %v3184
        %v3186 = vperm.slane %v3182, %v3185
        %v3187 = vsel %vm1276, %v3118, %v3107
        %v3189 = vunpack.c.l.s4 1983009808
        %v3190 = vunpack.c.0.s8 %v3189
        %v3191 = vperm.slane %v3187, %v3190
        %v3192 = vrot.slane %v3119, 4
        %v3193 = vsel %vm1276, %v3192, %v3117
        %v3195 = vunpack.c.l.s4 1983009808
        %v3196 = vunpack.c.0.s8 %v3195
        %v3197 = vperm.slane %v3193, %v3196
        %v3198 = vrot.slane %v3186, 4
        %v3199 = vsel %vm1276, %v3198, %v3180
        %v3200 = vrot.slane %v3180, 4
        %v3201 = vsel %vm1276, %v3186, %v3200
        %v3203 = vunpack.c.l.s4 1934713408
        %v3204 = vunpack.c.0.s8 %v3203
        %v3205 = vperm.slane %v3199, %v3204
        %v3207 = vunpack.c.l.s4 1934713408
        %v3208 = vunpack.c.0.s8 %v3207
        %v3209 = vperm.slane %v3201, %v3208
        %v3210 = vrot.slane %v3197, 4
        %v3211 = vsel %vm1276, %v3210, %v3191
        %v3212 = vrot.slane %v3191, 4
        %v3213 = vsel %vm1276, %v3197, %v3212
        %v3215 = vunpack.c.l.s4 1934713408
        %v3216 = vunpack.c.0.s8 %v3215
        %v3217 = vperm.slane %v3211, %v3216
        %v3219 = vunpack.c.l.s4 1934713408
        %v3220 = vunpack.c.0.s8 %v3219
        %v3221 = vperm.slane %v3213, %v3220
        %v3222 = vrot.slane %v3217, 4
        %v3223 = vsel %vm1276, %v3222, %v3205
        %v3224 = vrot.slane %v3205, 4
        %v3225 = vsel %vm1276, %v3217, %v3224
        %v3226 = vrot.slane %v3221, 4
        %v3227 = vsel %vm1276, %v3226, %v3209
        %v3228 = vrot.slane %v3209, 4
        %v3229 = vsel %vm1276, %v3221, %v3228
        %v3230 = vsel %vm1276, %v3170, %v3151
        %v3232 = vunpack.c.l.s4 1983009808
        %v3233 = vunpack.c.0.s8 %v3232
        %v3234 = vperm.slane %v3230, %v3233
        %v3235 = vrot.slane %v3171, 4
        %v3236 = vsel %vm1276, %v3235, %v3169
        %v3238 = vunpack.c.l.s4 1983009808
        %v3239 = vunpack.c.0.s8 %v3238
        %v3240 = vperm.slane %v3236, %v3239
        %v3241 = vsel %vm1276, %v3174, %v3163
        %v3243 = vunpack.c.l.s4 1983009808
        %v3244 = vunpack.c.0.s8 %v3243
        %v3245 = vperm.slane %v3241, %v3244
        %v3246 = vrot.slane %v3175, 4
        %v3247 = vsel %vm1276, %v3246, %v3173
        %v3249 = vunpack.c.l.s4 1983009808
        %v3250 = vunpack.c.0.s8 %v3249
        %v3251 = vperm.slane %v3247, %v3250
        %v3252 = vrot.slane %v3240, 4
        %v3253 = vsel %vm1276, %v3252, %v3234
        %v3254 = vrot.slane %v3234, 4
        %v3255 = vsel %vm1276, %v3240, %v3254
        %v3257 = vunpack.c.l.s4 1934713408
        %v3258 = vunpack.c.0.s8 %v3257
        %v3259 = vperm.slane %v3253, %v3258
        %v3261 = vunpack.c.l.s4 1934713408
        %v3262 = vunpack.c.0.s8 %v3261
        %v3263 = vperm.slane %v3255, %v3262
        %v3264 = vrot.slane %v3251, 4
        %v3265 = vsel %vm1276, %v3264, %v3245
        %v3266 = vrot.slane %v3245, 4
        %v3267 = vsel %vm1276, %v3251, %v3266
        %v3269 = vunpack.c.l.s4 1934713408
        %v3270 = vunpack.c.0.s8 %v3269
        %v3271 = vperm.slane %v3265, %v3270
        %v3273 = vunpack.c.l.s4 1934713408
        %v3274 = vunpack.c.0.s8 %v3273
        %v3275 = vperm.slane %v3267, %v3274
        %v3276 = vrot.slane %v3271, 4
        %v3277 = vsel %vm1276, %v3276, %v3259
        %v3278 = vrot.slane %v3259, 4
        %v3279 = vsel %vm1276, %v3271, %v3278
        %v3280 = vrot.slane %v3275, 4
        %v3281 = vsel %vm1276, %v3280, %v3263
        %v3282 = vrot.slane %v3263, 4
        %v3283 = vsel %vm1276, %v3275, %v3282
        %v3284 = vpack.c.bf16 %v2502, %v2502
        %v3285 = vpack.c.bf16 %v2503, %v2503
        %v3286 = vpack.c.bf16 %v2504, %v2504
        %v3287 = vpack.c.bf16 %v2505, %v2505
        %v3288 = vpack.c.bf16 %v3018, %v3018
        %v3289 = vpack.c.bf16 %v3019, %v3019
        %v3290 = vpack.c.bf16 %v3020, %v3020
        %v3291 = vpack.c.bf16 %v3021, %v3021
        %v3292 = vpack.c.bf16 %v3022, %v3022
        %v3293 = vpack.c.bf16 %v3023, %v3023
        %v3294 = vpack.c.bf16 %v3024, %v3024
        %v3295 = vpack.c.bf16 %v3025, %v3025
        %v3298 = vunpack.c.l.b16 %v3288
        %v3299 = vunpack.c.l.b16 %v3289
        %v3300 = vpack.c.b16 %v3299, %v3298
        %v3302 = vsel %vm1974, %v3284, 0
        %v3305 = vsel %vm1974, %v3300, 0
        %3307 = vmatpush.bf16.xpose.msra.mxu0 0
        %3308 = vmatpush.bf16.xpose.msra.mxu0 0
        %3309 = vmatpush.bf16.xpose.msra.mxu0 0
        %3310 = vmatpush.bf16.xpose.msra.mxu0 0
        %3311 = vmatpush.bf16.xpose.msra.mxu0 0
        %3312 = vmatpush.bf16.xpose.msra.mxu0 0
        %3313 = vmatpush.bf16.xpose.msra.mxu0 0
        %3314 = vmatpush.bf16.xpose.msra.mxu0 %v3305
        %3315 = vmatmul.bf16.gmra.mxu0 %v3302
        %v3316 = vpop.f32.mrf.mxu0
        %v3317 = vadd.f32 0.0, %v3316
        %v3318 = vpop.f32.mrf.mxu0
        %3319 = vdwg.mxu0
        %v3322 = vunpack.c.l.b16 %v3290
        %v3323 = vunpack.c.l.b16 %v3291
        %v3324 = vpack.c.b16 %v3323, %v3322
        %v3326 = vsel %vm1974, %v3285, 0
        %v3329 = vsel %vm1974, %v3324, 0
        %3331 = vmatpush.bf16.xpose.msra.mxu0 0
        %3332 = vmatpush.bf16.xpose.msra.mxu0 0
        %3333 = vmatpush.bf16.xpose.msra.mxu0 0
        %3334 = vmatpush.bf16.xpose.msra.mxu0 0
        %3335 = vmatpush.bf16.xpose.msra.mxu0 0
        %3336 = vmatpush.bf16.xpose.msra.mxu0 0
        %3337 = vmatpush.bf16.xpose.msra.mxu0 0
        %3338 = vmatpush.bf16.xpose.msra.mxu0 %v3329
        %3339 = vmatmul.bf16.gmra.mxu0 %v3326
        %v3340 = vpop.f32.mrf.mxu0
        %v3341 = vadd.f32 0.0, %v3340
        %v3342 = vpop.f32.mrf.mxu0
        %3343 = vdwg.mxu0
        %v3346 = vunpack.c.l.b16 %v3292
        %v3347 = vunpack.c.l.b16 %v3293
        %v3348 = vpack.c.b16 %v3347, %v3346
        %v3350 = vsel %vm1974, %v3286, 0
        %v3353 = vsel %vm1974, %v3348, 0
        %3355 = vmatpush.bf16.xpose.msra.mxu0 0
        %3356 = vmatpush.bf16.xpose.msra.mxu0 0
        %3357 = vmatpush.bf16.xpose.msra.mxu0 0
        %3358 = vmatpush.bf16.xpose.msra.mxu0 0
        %3359 = vmatpush.bf16.xpose.msra.mxu0 0
        %3360 = vmatpush.bf16.xpose.msra.mxu0 0
        %3361 = vmatpush.bf16.xpose.msra.mxu0 0
        %3362 = vmatpush.bf16.xpose.msra.mxu0 %v3353
        %3363 = vmatmul.bf16.gmra.mxu0 %v3350
        %v3364 = vpop.f32.mrf.mxu0
        %v3365 = vadd.f32 0.0, %v3364
        %v3366 = vpop.f32.mrf.mxu0
        %3367 = vdwg.mxu0
        %v3370 = vunpack.c.l.b16 %v3294
        %v3371 = vunpack.c.l.b16 %v3295
        %v3372 = vpack.c.b16 %v3371, %v3370
        %v3374 = vsel %vm1974, %v3287, 0
        %v3377 = vsel %vm1974, %v3372, 0
        %3379 = vmatpush.bf16.xpose.msra.mxu0 0
        %3380 = vmatpush.bf16.xpose.msra.mxu0 0
        %3381 = vmatpush.bf16.xpose.msra.mxu0 0
        %3382 = vmatpush.bf16.xpose.msra.mxu0 0
        %3383 = vmatpush.bf16.xpose.msra.mxu0 0
        %3384 = vmatpush.bf16.xpose.msra.mxu0 0
        %3385 = vmatpush.bf16.xpose.msra.mxu0 0
        %3386 = vmatpush.bf16.xpose.msra.mxu0 %v3377
        %3387 = vmatmul.bf16.gmra.mxu0 %v3374
        %v3388 = vpop.f32.mrf.mxu0
        %v3389 = vadd.f32 0.0, %v3388
        %v3390 = vpop.f32.mrf.mxu0
        %3391 = vdwg.mxu0
        %v3392 = vsel %vm1974, %v3317, -inf
        %3393 = vmax.xlane.f32.xlu0 %v3392
        %v3394 = vpop.xlane.xlu0 %3393
        %v3395 = vsel %vm1974, %v3341, -inf
        %3396 = vmax.xlane.f32.xlu0 %v3395
        %v3397 = vpop.xlane.xlu0 %3396
        %v3398 = vsel %vm1974, %v3365, -inf
        %3399 = vmax.xlane.f32.xlu0 %v3398
        %v3400 = vpop.xlane.xlu0 %3399
        %v3401 = vsel %vm1974, %v3389, -inf
        %3402 = vmax.xlane.f32.xlu0 %v3401
        %v3403 = vpop.xlane.xlu0 %3402
        %v3404 = vsub.f32 %v3317, %v3394
        %v3405 = vsub.f32 %v3341, %v3397
        %v3406 = vsub.f32 %v3365, %v3400
        %v3407 = vsub.f32 %v3389, %v3403
        %v3408 = vmul.f32 %v3404, 1.442695
        %v3409 = vpow.pop %v3408
        %v3410 = vmul.f32 %v3405, 1.442695
        %v3411 = vpow.pop %v3410
        %v3412 = vmul.f32 %v3406, 1.442695
        %v3413 = vpow.pop %v3412
        %v3414 = vmul.f32 %v3407, 1.442695
        %v3415 = vpow.pop %v3414
        %v3416 = vsel %vm1974, %v3409, 0.0
        %3417 = vadd.xlane.f32.xlu0 %v3416
        %v3418 = vpop.xlane.xlu0 %3417
        %v3419 = vsel %vm1974, %v3411, 0.0
        %3420 = vadd.xlane.f32.xlu0 %v3419
        %v3421 = vpop.xlane.xlu0 %3420
        %v3422 = vsel %vm1974, %v3413, 0.0
        %3423 = vadd.xlane.f32.xlu0 %v3422
        %v3424 = vpop.xlane.xlu0 %3423
        %v3425 = vsel %vm1974, %v3415, 0.0
        %3426 = vadd.xlane.f32.xlu0 %v3425
        %v3427 = vpop.xlane.xlu0 %3426
        %v3428 = vrcp.pop %v3418
        %v3429 = vrcp.pop %v3421
        %v3430 = vrcp.pop %v3424
        %v3431 = vrcp.pop %v3427
        %v3432 = vmul.f32 %v3409, %v3428
        %v3433 = vmul.f32 %v3411, %v3429
        %v3434 = vmul.f32 %v3413, %v3430
        %v3435 = vmul.f32 %v3415, %v3431
        %v3436 = vpack.c.bf16 %v3432, %v3432
        %v3437 = vpack.c.bf16 %v3433, %v3433
        %v3438 = vpack.c.bf16 %v3434, %v3434
        %v3439 = vpack.c.bf16 %v3435, %v3435
        %v3440 = vpack.c.bf16 %v3223, %v3223
        %v3441 = vpack.c.bf16 %v3277, %v3277
        %v3442 = vpack.c.bf16 %v3225, %v3225
        %v3443 = vpack.c.bf16 %v3279, %v3279
        %v3444 = vpack.c.bf16 %v3227, %v3227
        %v3445 = vpack.c.bf16 %v3281, %v3281
        %v3446 = vpack.c.bf16 %v3229, %v3229
        %v3447 = vpack.c.bf16 %v3283, %v3283
        %v3450 = vunpack.c.l.b16 %v3440
        %v3451 = vunpack.c.l.b16 %v3441
        %v3452 = vpack.c.b16 %v3451, %v3450
        %v3455 = vsel %vm1974, %v3436, 0
        %3457 = vmatpush.bf16.msra.mxu0 0
        %3458 = vmatpush.bf16.msra.mxu0 0
        %3459 = vmatpush.bf16.msra.mxu0 0
        %3460 = vmatpush.bf16.msra.mxu0 0
        %3461 = vmatpush.bf16.msra.mxu0 0
        %3462 = vmatpush.bf16.msra.mxu0 0
        %3463 = vmatpush.bf16.msra.mxu0 0
        %3464 = vmatpush.bf16.msra.mxu0 %v3452
        %3465 = vmatmul.bf16.gmra.mxu0 %v3455
        %v3466 = vpop.f32.mrf.mxu0
        %v3467 = vadd.f32 0.0, %v3466
        %v3468 = vpop.f32.mrf.mxu0
        %3469 = vdwg.mxu0
        %v3472 = vunpack.c.l.b16 %v3442
        %v3473 = vunpack.c.l.b16 %v3443
        %v3474 = vpack.c.b16 %v3473, %v3472
        %v3477 = vsel %vm1974, %v3437, 0
        %3479 = vmatpush.bf16.msra.mxu0 0
        %3480 = vmatpush.bf16.msra.mxu0 0
        %3481 = vmatpush.bf16.msra.mxu0 0
        %3482 = vmatpush.bf16.msra.mxu0 0
        %3483 = vmatpush.bf16.msra.mxu0 0
        %3484 = vmatpush.bf16.msra.mxu0 0
        %3485 = vmatpush.bf16.msra.mxu0 0
        %3486 = vmatpush.bf16.msra.mxu0 %v3474
        %3487 = vmatmul.bf16.gmra.mxu0 %v3477
        %v3488 = vpop.f32.mrf.mxu0
        %v3489 = vadd.f32 0.0, %v3488
        %v3490 = vpop.f32.mrf.mxu0
        %3491 = vdwg.mxu0
        %v3494 = vunpack.c.l.b16 %v3444
        %v3495 = vunpack.c.l.b16 %v3445
        %v3496 = vpack.c.b16 %v3495, %v3494
        %v3499 = vsel %vm1974, %v3438, 0
        %3501 = vmatpush.bf16.msra.mxu0 0
        %3502 = vmatpush.bf16.msra.mxu0 0
        %3503 = vmatpush.bf16.msra.mxu0 0
        %3504 = vmatpush.bf16.msra.mxu0 0
        %3505 = vmatpush.bf16.msra.mxu0 0
        %3506 = vmatpush.bf16.msra.mxu0 0
        %3507 = vmatpush.bf16.msra.mxu0 0
        %3508 = vmatpush.bf16.msra.mxu0 %v3496
        %3509 = vmatmul.bf16.gmra.mxu0 %v3499
        %v3510 = vpop.f32.mrf.mxu0
        %v3511 = vadd.f32 0.0, %v3510
        %v3512 = vpop.f32.mrf.mxu0
        %3513 = vdwg.mxu0
        %v3516 = vunpack.c.l.b16 %v3446
        %v3517 = vunpack.c.l.b16 %v3447
        %v3518 = vpack.c.b16 %v3517, %v3516
        %v3521 = vsel %vm1974, %v3439, 0
        %3523 = vmatpush.bf16.msra.mxu0 0
        %3524 = vmatpush.bf16.msra.mxu0 0
        %3525 = vmatpush.bf16.msra.mxu0 0
        %3526 = vmatpush.bf16.msra.mxu0 0
        %3527 = vmatpush.bf16.msra.mxu0 0
        %3528 = vmatpush.bf16.msra.mxu0 0
        %3529 = vmatpush.bf16.msra.mxu0 0
        %3530 = vmatpush.bf16.msra.mxu0 %v3518
        %3531 = vmatmul.bf16.gmra.mxu0 %v3521
        %v3532 = vpop.f32.mrf.mxu0
        %v3533 = vadd.f32 0.0, %v3532
        %v3534 = vpop.f32.mrf.mxu0
        %3535 = vdwg.mxu0
        %v3536 = vrot.slane %v3511, 4
        %v3537 = vsel %vm1276, %v3536, %v3467
        %v3538 = vrot.slane %v3467, 4
        %v3539 = vsel %vm1276, %v3511, %v3538
        %v3541 = vunpack.c.l.s4 1983009808
        %v3542 = vunpack.c.0.s8 %v3541
        %v3543 = vperm.slane %v3537, %v3542
        %v3545 = vunpack.c.l.s4 1983009808
        %v3546 = vunpack.c.0.s8 %v3545
        %v3547 = vperm.slane %v3539, %v3546
        %v3548 = vrot.slane %v3533, 4
        %v3549 = vsel %vm1276, %v3548, %v3489
        %v3550 = vrot.slane %v3489, 4
        %v3551 = vsel %vm1276, %v3533, %v3550
        %v3553 = vunpack.c.l.s4 1983009808
        %v3554 = vunpack.c.0.s8 %v3553
        %v3555 = vperm.slane %v3549, %v3554
        %v3557 = vunpack.c.l.s4 1983009808
        %v3558 = vunpack.c.0.s8 %v3557
        %v3559 = vperm.slane %v3551, %v3558
        %v3560 = vrot.slane %v3555, 4
        %v3561 = vsel %vm1276, %v3560, %v3543
        %v3562 = vrot.slane %v3543, 4
        %v3563 = vsel %vm1276, %v3555, %v3562
        %v3565 = vunpack.c.l.s4 1934713408
        %v3566 = vunpack.c.0.s8 %v3565
        %v3567 = vperm.slane %v3561, %v3566
        %v3569 = vunpack.c.l.s4 1934713408
        %v3570 = vunpack.c.0.s8 %v3569
        %v3571 = vperm.slane %v3563, %v3570
        %v3572 = vrot.slane %v3559, 4
        %v3573 = vsel %vm1276, %v3572, %v3547
        %v3574 = vrot.slane %v3547, 4
        %v3575 = vsel %vm1276, %v3559, %v3574
        %v3577 = vunpack.c.l.s4 1934713408
        %v3578 = vunpack.c.0.s8 %v3577
        %v3579 = vperm.slane %v3573, %v3578
        %v3581 = vunpack.c.l.s4 1934713408
        %v3582 = vunpack.c.0.s8 %v3581
        %v3583 = vperm.slane %v3575, %v3582
        %v3584 = vrot.slane %v3567, 4
        %v3585 = vsel %vm1276, 0.0, %v3584
        %v3586 = vrot.slane %v3571, 4
        %v3587 = vsel %vm1276, 0.0, %v3586
        %v3588 = vrot.slane %v3579, 4
        %v3589 = vsel %vm1276, 0.0, %v3588
        %v3590 = vrot.slane %v3583, 4
        %v3591 = vsel %vm1276, 0.0, %v3590
        %v3592 = vsel %vm1276, %v3586, %v3567
        %v3594 = vunpack.c.l.s4 1983009808
        %v3595 = vunpack.c.0.s8 %v3594
        %v3596 = vperm.slane %v3592, %v3595
        %v3597 = vrot.slane %v3587, 4
        %v3598 = vsel %vm1276, %v3597, %v3585
        %v3600 = vunpack.c.l.s4 1983009808
        %v3601 = vunpack.c.0.s8 %v3600
        %v3602 = vperm.slane %v3598, %v3601
        %v3603 = vsel %vm1276, %v3590, %v3579
        %v3605 = vunpack.c.l.s4 1983009808
        %v3606 = vunpack.c.0.s8 %v3605
        %v3607 = vperm.slane %v3603, %v3606
        %v3608 = vrot.slane %v3591, 4
        %v3609 = vsel %vm1276, %v3608, %v3589
        %v3611 = vunpack.c.l.s4 1983009808
        %v3612 = vunpack.c.0.s8 %v3611
        %v3613 = vperm.slane %v3609, %v3612
        %v3614 = vrot.slane %v3602, 4
        %v3615 = vsel %vm1276, %v3614, %v3596
        %v3616 = vrot.slane %v3596, 4
        %v3617 = vsel %vm1276, %v3602, %v3616
        %v3619 = vunpack.c.l.s4 1934713408
        %v3620 = vunpack.c.0.s8 %v3619
        %v3621 = vperm.slane %v3615, %v3620
        %v3623 = vunpack.c.l.s4 1934713408
        %v3624 = vunpack.c.0.s8 %v3623
        %v3625 = vperm.slane %v3617, %v3624
        %v3626 = vrot.slane %v3613, 4
        %v3627 = vsel %vm1276, %v3626, %v3607
        %v3628 = vrot.slane %v3607, 4
        %v3629 = vsel %vm1276, %v3613, %v3628
        %v3631 = vunpack.c.l.s4 1934713408
        %v3632 = vunpack.c.0.s8 %v3631
        %v3633 = vperm.slane %v3627, %v3632
        %v3635 = vunpack.c.l.s4 1934713408
        %v3636 = vunpack.c.0.s8 %v3635
        %v3637 = vperm.slane %v3629, %v3636
        %v3638 = vrot.slane %v3633, 4
        %v3639 = vsel %vm1276, %v3638, %v3621
        %v3640 = vrot.slane %v3621, 4
        %v3641 = vsel %vm1276, %v3633, %v3640
        %v3642 = vrot.slane %v3637, 4
        %v3643 = vsel %vm1276, %v3642, %v3625
        %v3644 = vrot.slane %v3625, 4
        %v3645 = vsel %vm1276, %v3637, %v3644
        %3647 = vrot.lane.b32.xlu0 %v3641, 8
        %v3648 = vpop.permute.xlu0 %3647
        %3651 = vrot.lane.b32.xlu0 %v3643, 16
        %v3652 = vpop.permute.xlu0 %3651
        %3655 = vrot.lane.b32.xlu0 %v3645, 24
        %v3656 = vpop.permute.xlu0 %3655
        %v3658 = vsel %vm1645, %v3639, %v3648
        %v3659 = vsel %vm1974, %v3658, %v3652
        %v3660 = vsel %vm1976, %v3659, %v3656
        %v3661 = vpack.c.bf16 %v3660, %v3660
        %v3662 = vld [vmem:[%s47] sm:$0xf]
        %v3663 = vld [vmem:[%s47 + $0x4] sm:$0xf]
        %v3664 = vld [vmem:[%s47 + $0x8] sm:$0xf]
        %v3665 = vld [vmem:[%s47 + $0xc] sm:$0xf]
        %v3666 = vld [vmem:[%s49] sm:$0x1]
        %v3668 = vperm.slane %v3666, 0
        %v3674 = vunpack.c.l.b16 %v3662
        %v3675 = vunpack.c.l.b16 %v3663
        %v3676 = vunpack.c.l.b16 %v3664
        %v3677 = vunpack.c.l.b16 %v3665
        %v3678 = vpack.c.b16 %v3675, %v3674
        %v3679 = vpack.c.b16 %v3677, %v3676
        %v3683 = vsel %vm1210, %v3661, 0
        %3685 = vmatpush.bf16.msra.mxu0 0
        %3686 = vmatpush.bf16.msra.mxu0 0
        %3687 = vmatpush.bf16.msra.mxu0 0
        %3688 = vmatpush.bf16.msra.mxu0 0
        %3689 = vmatpush.bf16.msra.mxu0 0
        %3690 = vmatpush.bf16.msra.mxu0 0
        %3691 = vmatpush.bf16.msra.mxu0 %v3679
        %3692 = vmatpush.bf16.msra.mxu0 %v3678
        %3693 = vmatmul.bf16.gmra.mxu0 %v3683
        %v3694 = vpop.f32.mrf.mxu0
        %v3695 = vadd.f32 %v3668, %v3694
        %v3696 = vpop.f32.mrf.mxu0
        %3697 = vdwg.mxu0
        %v3698 = vadd.f32 %v2054, %v3695
        %v3699 = vld [vmem:[#allocation4] sm:$0x1]
        %v3700 = vld [vmem:[#allocation6] sm:$0x1]
        %v3701 = vsel %vm1210, %v3698, 0.0
        %3702 = vadd.xlane.f32.xlu0 %v3701
        %v3703 = vpop.xlane.xlu0 %3702
        %v3704 = vmul.f32 %v3703, %v2027
        %v3705 = vsub.f32 %v3698, %v3704
        %v3706 = vmul.f32 %v3705, %v3705
        %v3707 = vsel %vm1210, %v3706, 0.0
        %3708 = vadd.xlane.f32.xlu0 %v3707
        %v3709 = vpop.xlane.xlu0 %3708
        %v3710 = vmul.f32 %v3709, %v2027
        %v3711 = vadd.f32 %v3710, 1e-05
        %v3712 = vrsqrt.pop %v3711
        %v3713 = vmul.f32 %v3712, %v3711
        %v3714 = vmul.f32 %v3713, %v3712
        %v3715 = vmul.f32 0.5, %v3714
        %v3716 = vsub.f32 1.5, %v3715
        %v3717 = vmul.f32 %v3712, %v3716
        %vm3718 = vweird.f32 %v3711
        %vm3719 = vweird.f32 %v3712
        %vm3720 = vmor %vm3718, %vm3719
        %v3721 = vsel %vm3720, %v3712, %v3717
        %v3722 = vmul.f32 %v3705, %v3721
        %v3724 = vperm.slane %v3699, 0
        %v3726 = vmul.f32 %v3722, %v3724
        %v3728 = vperm.slane %v3700, 0
        %v3730 = vadd.f32 %v3726, %v3728
        %v3731 = vpack.c.bf16 %v3730, %v3730
        %v3732 = vld [vmem:[%s55] sm:$0xf]
        %v3733 = vld [vmem:[%s55 + $0x4] sm:$0xf]
        %v3734 = vld [vmem:[%s55 + $0x8] sm:$0xf]
        %v3735 = vld [vmem:[%s55 + $0xc] sm:$0xf]
        %v3736 = vld [vmem:[#allocation7] sm:$0x1]
        %v3738 = vperm.slane %v3736, 0
        %v3744 = vunpack.c.l.b16 %v3732
        %v3745 = vunpack.c.l.b16 %v3733
        %v3746 = vunpack.c.l.b16 %v3734
        %v3747 = vunpack.c.l.b16 %v3735
        %v3748 = vpack.c.b16 %v3745, %v3744
        %v3749 = vpack.c.b16 %v3747, %v3746
        %v3753 = vsel %vm1210, %v3731, 0
        %3755 = vmatpush.bf16.msra.mxu0 0
        %3756 = vmatpush.bf16.msra.mxu0 0
        %3757 = vmatpush.bf16.msra.mxu0 0
        %3758 = vmatpush.bf16.msra.mxu0 0
        %3759 = vmatpush.bf16.msra.mxu0 0
        %3760 = vmatpush.bf16.msra.mxu0 0
        %3761 = vmatpush.bf16.msra.mxu0 %v3749
        %3762 = vmatpush.bf16.msra.mxu0 %v3748
        %3763 = vmatmul.bf16.gmra.mxu0 %v3753
        %v3764 = vpop.f32.mrf.mxu0
        %v3765 = vadd.f32 %v3738, %v3764
        %v3766 = vpop.f32.mrf.mxu0
        %3767 = vdwg.mxu0
        %v3768 = vmax.f32 %v3765, 0.0
        %v3769 = vpack.c.bf16 %v3768, %v3768
        %v3770 = vld [vmem:[%s59] sm:$0xf]
        %v3771 = vld [vmem:[%s59 + $0x4] sm:$0xf]
        %v3772 = vld [vmem:[%s59 + $0x8] sm:$0xf]
        %v3773 = vld [vmem:[%s59 + $0xc] sm:$0xf]
        %v3774 = vld [vmem:[%s59 + $0x10] sm:$0xf]
        %v3775 = vld [vmem:[%s59 + $0x14] sm:$0xf]
        %v3776 = vld [vmem:[%s59 + $0x18] sm:$0xf]
        %v3777 = vld [vmem:[%s59 + $0x1c] sm:$0xf]
        %v3778 = vld [vmem:[#allocation9] sm:$0x1]
        %v3780 = vperm.slane %v3778, 0
        %v3790 = vunpack.c.l.b16 %v3770
        %v3791 = vunpack.c.l.b16 %v3771
        %v3792 = vunpack.c.l.b16 %v3772
        %v3793 = vunpack.c.l.b16 %v3773
        %v3794 = vunpack.c.l.b16 %v3774
        %v3795 = vunpack.c.l.b16 %v3775
        %v3796 = vunpack.c.l.b16 %v3776
        %v3797 = vunpack.c.l.b16 %v3777
        %v3798 = vpack.c.b16 %v3791, %v3790
        %v3799 = vpack.c.b16 %v3793, %v3792
        %v3800 = vpack.c.b16 %v3795, %v3794
        %v3801 = vpack.c.b16 %v3797, %v3796
        %vm3806 = vcmask 523264
        %v3808 = vsel %vm3806, %v3769, 0
        %3810 = vmatpush.bf16.msra.mxu0 0
        %3811 = vmatpush.bf16.msra.mxu0 0
        %3812 = vmatpush.bf16.msra.mxu0 0
        %3813 = vmatpush.bf16.msra.mxu0 0
        %3814 = vmatpush.bf16.msra.mxu0 %v3801
        %3815 = vmatpush.bf16.msra.mxu0 %v3800
        %3816 = vmatpush.bf16.msra.mxu0 %v3799
        %3817 = vmatpush.bf16.msra.mxu0 %v3798
        %3818 = vmatmul.bf16.gmra.mxu0 %v3808
        %v3819 = vpop.f32.mrf.mxu0
        %v3820 = vadd.f32 %v3780, %v3819
        %v3821 = vpop.f32.mrf.mxu0
        %3822 = vdwg.mxu0
        %v3823 = vadd.f32 %v3730, %v3820
        %v3824 = vld [vmem:[#allocation10] sm:$0x1]
        %v3825 = vld [vmem:[#allocation12] sm:$0x1]
        %v3826 = vsel %vm1210, %v3823, 0.0
        %3827 = vadd.xlane.f32.xlu0 %v3826
        %v3828 = vpop.xlane.xlu0 %3827
        %v3829 = vmul.f32 %v3828, %v2027
        %v3830 = vsub.f32 %v3823, %v3829
        %v3831 = vmul.f32 %v3830, %v3830
        %v3832 = vsel %vm1210, %v3831, 0.0
        %3833 = vadd.xlane.f32.xlu0 %v3832
        %v3834 = vpop.xlane.xlu0 %3833
        %v3835 = vmul.f32 %v3834, %v2027
        %v3836 = vadd.f32 %v3835, 1e-05
        %v3837 = vrsqrt.pop %v3836
        %v3838 = vmul.f32 %v3837, %v3836
        %v3839 = vmul.f32 %v3838, %v3837
        %v3840 = vmul.f32 0.5, %v3839
        %v3841 = vsub.f32 1.5, %v3840
        %v3842 = vmul.f32 %v3837, %v3841
        %vm3843 = vweird.f32 %v3836
        %vm3844 = vweird.f32 %v3837
        %vm3845 = vmor %vm3843, %vm3844
        %v3846 = vsel %vm3845, %v3837, %v3842
        %v3847 = vmul.f32 %v3830, %v3846
        %v3849 = vperm.slane %v3824, 0
        %v3851 = vmul.f32 %v3847, %v3849
        %v3853 = vperm.slane %v3825, 0
        %v3855 = vadd.f32 %v3851, %v3853
        %3856 = vst.msk [vmem:[%s1185] sm:$0xff] %vm1210, %v3855
        %p3857 = scmp.lt.s32.totalorder %s82, 1
        %s3858 = scalar_select %p3857, %s82, 1
        %s3859 = smul.addr %s3858, 8
        %s3860 = scalar_lea.vmem %s67, %s3859
        // Predicated region
        $region181: #{decoder_layer_forward.1} parent=151 // pred_check
          %p3861 = pneg %p818
        $region182: #{decoder_layer_forward.1} parent=151 // pred_check_branch
          %3863 = sbr.rel (%p3861) target = $region184
        $region183: #{decoder_layer_forward.1} parent=151 // pred_region
          _
        $region184: #{decoder_layer_forward.1} parent=151 // pred_fallthru
          _
      $region152: #{decoder_layer_forward.1} parent=5 // pred_fallthru
        _
      %p3864 = scmp.le.s32.totalorder 2, %s77
      // Predicated region
      $region185: #{decoder_layer_forward.1} parent=5 // pred_check
        %p3865 = pneg %p3864
      $region186: #{decoder_layer_forward.1} parent=5 // pred_check_branch
        %3867 = sbr.rel (%p3865) target = $region188
      $region187: #{decoder_layer_forward.1} parent=5 // pred_region
        %s3868 = ssub.s32 %s77, 2
        // Predicated region
        $region189: #{decoder_layer_forward.1} parent=187 // pred_check
          %p3869 = pneg %p824
        $region190: #{decoder_layer_forward.1} parent=187 // pred_check_branch
          %3871 = sbr.rel (%p3869) target = $region192
        $region191: #{decoder_layer_forward.1} parent=187 // pred_region
          %p3872 = scmp.lt.s32.totalorder %s83, 1
          %s3873 = scalar_select %p3872, %s83, 1
          %s3874 = smul.addr %s3873, 8
          %s3875 = scalar_lea.vmem %s67, %s3874
        $region192: #{decoder_layer_forward.1} parent=187 // pred_fallthru
          _
      $region188: #{decoder_layer_forward.1} parent=5 // pred_fallthru
        _
    $region6: #{decoder_layer_forward.1} parent=1 // loop_footer
      %s81 = sadd.s32 1, %s77
    $region7: #{decoder_layer_forward.1} parent=1 // loop_footer_branch
      %76 = sbr.rel target = $region3
    $region8: #{decoder_layer_forward.1} parent=1 // loop_exit
      _
    %3876 = vsyncpa [#allocation3], 1
    %s3877 = scalar_lea.sflag [#allocation3], 1
    %3878 = vsyncpa %s3877, 1
    %3879 = vsyncpa [#allocation5], 1
    %3880 = vsyncpa [#allocation8], 1
    %3881 = vsyncpa [#allocation11], 1

</llo_original>
